<compile_context>
chip_gen: v7x
topology: tpu7x:2x2x1
jax: 0.10.0
libtpu: 0.0.40
codegen_flags: <defaults>
</compile_context>

<pallas_src>
import functools

import jax
import jax.numpy as jnp
from jax.experimental import pallas as pl
from jax.experimental.pallas import tpu as pltpu


def _upsample2x_kernel(x_ref, o_ref, *, pack):
    """x_ref: (Rb, pack*W) block holding `pack` consecutive input rows per
    kernel row. o_ref: (Rb, pack*4*W) block: for each packed input row x, the
    contiguous output super-row [y, y] with y = column-interleaved x."""
    x = x_ref[...]
    rb, kw = x.shape
    w = kw // pack
    segs = []
    for m in range(pack):  # pack is small and static -> unrolled at trace time
        xm = x[:, m * w:(m + 1) * w]
        # Column duplication: pure lane interleave y[:, 2j] = y[:, 2j+1] = xm[:, j]
        ym = jnp.broadcast_to(xm[:, :, None], (rb, w, 2)).reshape(rb, 2 * w)
        segs.append(ym)  # output row 2h
        segs.append(ym)  # output row 2h+1 (contiguous in flattened NCHW output)
    # One lane-dense store of the whole (Rb, 4*pack*W) output block.
    o_ref[...] = jnp.concatenate(segs, axis=-1)


def _vmem_capacity_bytes():
    """Physical VMEM of the current chip; conservative fallback = 64 MiB (v7x)."""
    try:
        cap = getattr(pltpu.get_tpu_info(), "vmem_capacity_bytes", None)
        if cap:
            return int(cap)
    except Exception:
        pass
    return 64 << 20


def _pick_pack_factor(num_rows, width):
    """Pack k input rows per kernel row so the output last dim (4*k*W) is a
    multiple of 128 lanes (unmasked stores, dense output DMA). k | num_rows."""
    if (4 * width) % 128 == 0:
        return 1
    for k in range(2, min(num_rows, 64) + 1):
        if num_rows % k == 0 and (4 * k * width) % 128 == 0:
            return k
    return 1  # fallback: correct, but lane-sparse output stores


def _pick_row_block(num_rows, width, itemsize, budget_bytes, min_grid_steps=8):
    """Rows per block. The pipeline footprint is ~17x the input block
    (2x in + 2x(4x) out double-buffered + interleave temporaries), so size the
    input block at ~budget/18. Keep >= min_grid_steps blocks on large problems
    (v7x megacore split) but never shrink below ~0.5 MiB of input per block."""
    sub = max(8, 32 // itemsize)  # sublane pack: 8 f32 / 16 bf16 / 32 int8
    row_bytes = max(1, width * itemsize)

    rows_by_vmem = max(sub, budget_bytes // (18 * row_bytes))

    # Tiny problem: one full block (full-extent block dims are always legal).
    if num_rows * row_bytes <= (2 << 20) and num_rows <= rows_by_vmem:
        return num_rows

    rows_by_grid = pl.cdiv(num_rows, min_grid_steps)
    rows_floor = max(sub, (512 << 10) // row_bytes)
    rb = min(rows_by_vmem, max(rows_by_grid, rows_floor))
    rb = max(sub, (rb // sub) * sub)
    return min(rb, num_rows)


def upsample_nearest_2x(x, *, row_block=None):
    """nn.Upsample(scale_factor=2, mode='nearest'): (N,C,H,W) -> (N,C,2H,2W)."""
    assert x.ndim == 4, "expected NCHW input"
    n, c, h, w = x.shape
    rows = n * c * h

    pack = _pick_pack_factor(rows, w)
    prows = rows // pack
    pw = pack * w

    # Free reshape for contiguous NCHW (a strided/transposed input would force
    # XLA to copy first -- perf only, not correctness).
    x2 = x.reshape(prows, pw)

    itemsize = jnp.dtype(x.dtype).itemsize
    vmem_cap = _vmem_capacity_bytes()
    budget = min((vmem_cap * 3) // 4, 96 << 20)             # pipeline budget
    vmem_limit = int(min(budget + (16 << 20), (vmem_cap * 9) // 10))

    rb = row_block if row_block is not None else _pick_row_block(
        prows, pw, itemsize, budget)
    rb = min(rb, prows)
    grid = (pl.cdiv(prows, rb),)  # uneven last block handled by Pallas masking

    kernel = functools.partial(_upsample2x_kernel, pack=pack)
    in_bytes = x.size * itemsize

    out2 = pl.pallas_call(
        kernel,
        out_shape=jax.ShapeDtypeStruct((prows, 4 * pw), x.dtype),
        grid=grid,
        in_specs=[pl.BlockSpec((rb, pw), lambda i: (i, 0))],
        out_specs=pl.BlockSpec((rb, 4 * pw), lambda i: (i, 0)),
        compiler_params=pltpu.CompilerParams(
            dimension_semantics=("parallel",),  # v7x megacore shards row-tiles
            vmem_limit_bytes=vmem_limit,
        ),
        cost_estimate=pl.CostEstimate(
            flops=0, transcendentals=0, bytes_accessed=5 * in_bytes),
    )(x2)
    return out2.reshape(n, c, 2 * h, 2 * w)


def _reference(x):
    return jnp.repeat(jnp.repeat(x, 2, axis=2), 2, axis=3)


if __name__ == "__main__":
    key = jax.random.PRNGKey(0)

    # 1) Module-sized f32 check (W=16 -> pack=2 lane-dense path, single block).
    x = jax.random.normal(key, (2, 4, 16, 16), dtype=jnp.float32)
    out = jax.block_until_ready(upsample_nearest_2x(x))
    assert out.shape == (2, 4, 32, 32)
    assert out.dtype == x.dtype
    assert jnp.array_equal(out, _reference(x))

    # 2) Non-pow2 W (40 -> pack=4, 640-lane output) with an explicit small
    #    row_block to exercise a multi-step grid and a masked last block.
    x2 = jax.random.normal(jax.random.PRNGKey(1), (1, 3, 24, 40), dtype=jnp.float32)
    out2 = jax.block_until_ready(upsample_nearest_2x(x2, row_block=16))
    assert out2.shape == (1, 3, 48, 80)
    assert jnp.array_equal(out2, _reference(x2))

    # 3) bf16 dtype path (exact copy semantics must hold for any dtype).
    x3 = jax.random.normal(jax.random.PRNGKey(2), (2, 4, 16, 16)).astype(jnp.bfloat16)
    out3 = jax.block_until_ready(upsample_nearest_2x(x3))
    assert out3.dtype == jnp.bfloat16
    assert jnp.array_equal(out3, _reference(x3))

    print("KERNEL_OK")
</pallas_src>

<mosaic_0001>
module attributes {stable_mosaic.version = 11 : i64} {
  func.func @_upsample2x_kernel(%arg0: i32, %arg1: memref<64x32xf32, #tpu.memory_space<vmem>>, %arg2: memref<64x128xf32, #tpu.memory_space<vmem>>) attributes {dimension_semantics = [#tpu.dimension_semantics<parallel>], iteration_bounds = array<i64: 1>, scalar_prefetch = 0 : i64, scratch_operands = 0 : i64, tpu.core_type = #tpu.core_type<tc>, window_params = [{transform_indices = @transform_0, window_bounds = array<i64: 64, 32>}, {transform_indices = @transform_1, window_bounds = array<i64: 64, 128>}]} {
    %c0 = arith.constant 0 : index
    %c0_0 = arith.constant 0 : index
    %0 = vector.load %arg1[%c0, %c0_0] : memref<64x32xf32, #tpu.memory_space<vmem>>, vector<64x32xf32>
    %1 = vector.extract_strided_slice %0 {offsets = [0, 0], sizes = [64, 16], strides = [1, 1]} : vector<64x32xf32> to vector<64x16xf32>
    %2 = vector.shape_cast %1 : vector<64x16xf32> to vector<64x16x1xf32>
    %3 = vector.shape_cast %2 : vector<64x16x1xf32> to vector<64x16x1xf32>
    %4 = vector.broadcast %3 : vector<64x16x1xf32> to vector<64x16x2xf32>
    %5 = vector.shape_cast %4 : vector<64x16x2xf32> to vector<64x32xf32>
    %6 = vector.extract_strided_slice %0 {offsets = [0, 16], sizes = [64, 16], strides = [1, 1]} : vector<64x32xf32> to vector<64x16xf32>
    %7 = vector.shape_cast %6 : vector<64x16xf32> to vector<64x16x1xf32>
    %8 = vector.shape_cast %7 : vector<64x16x1xf32> to vector<64x16x1xf32>
    %9 = vector.broadcast %8 : vector<64x16x1xf32> to vector<64x16x2xf32>
    %10 = vector.shape_cast %9 : vector<64x16x2xf32> to vector<64x32xf32>
    %11 = tpu.concatenate %5, %5, %10, %10 in 1 : vector<64x32xf32>, vector<64x32xf32>, vector<64x32xf32>, vector<64x32xf32> -> vector<64x128xf32>
    %c0_1 = arith.constant 0 : index
    %c0_2 = arith.constant 0 : index
    %12 = vector.load %arg2[%c0_1, %c0_2] : memref<64x128xf32, #tpu.memory_space<vmem>>, vector<64x128xf32>
    tpu.vector_store %arg2[%c0_1, %c0_2], %11 {strides = array<i32>} : memref<64x128xf32, #tpu.memory_space<vmem>>, vector<64x128xf32>,
    return
  }
  func.func @transform_0(%arg0: i32) -> (i32, i32) {
    %c0_i32 = arith.constant 0 : i32
    %c0_i32_0 = arith.constant 0 : i32
    return %arg0, %c0_i32 : i32, i32
  }
  func.func @transform_1(%arg0: i32) -> (i32, i32) {
    %c0_i32 = arith.constant 0 : i32
    %c0_i32_0 = arith.constant 0 : i32
    return %arg0, %c0_i32 : i32, i32
  }
}

</mosaic_0001>

<llo_original>
// kernel: tpu_custom_call.1
$region0: #{tpu_custom_call.1}
  #allocation0 [shape = 'u32[]', space=smem, size = 0x4, offset = 0x4, fixed_abs, tag = 'smem constant byte address 0x4 - core index']
  #allocation1 [shape = 'u32[144,128]{1,0:T(1,128)}', space=vmem, size = 0x12000, scoped, tag = 'internal scratch']
  %s0 = inlined_call_operand.vmem [shape: f32[64,32], index: 0, kind: input, shape index: {}]
  %s1 = inlined_call_operand.hbm [shape: f32[64,128], index: 1, kind: output, shape index: {}]
  %s2 = sld [smem:[#allocation0]]
  $region14: #{tpu_custom_call.1} parent=0
    _
  %s4 = ssub.s32 1, %s2
  %s5 = scalar_select 0, %s4, %s2
  $region1: #{tpu_custom_call.1} parent=0
    #allocation2 [shape = 'u8[32768]{0}', space=vmem, size = 0x8000, scoped, tag = 'output window, operand 0, single buffered']
    #allocation3 [shape = 's32[1]{0}', space=sflag, size = 0x4, scoped, tag = 'scoped memory for tpu_custom_call.1']
    %6 = vsyncpa [#allocation3], 0
    // Predicated region
    $region2: #{tpu_custom_call.1} parent=1 // pred_check
      _
    $region3: #{tpu_custom_call.1} parent=1 // pred_check_branch
      %8 = sbr.rel (0) target = $region5
    $region4: #{tpu_custom_call.1} parent=1 // pred_region
      _
    $region5: #{tpu_custom_call.1} parent=1 // pred_fallthru
      _
    %v9 = vld [vmem:[%s0] sm:$0xff]
    %v10 = vld [vmem:[%s0 + $0x8] sm:$0xff]
    %v11 = vld [vmem:[%s0 + $0x10] sm:$0xff]
    %v12 = vld [vmem:[%s0 + $0x18] sm:$0xff]
    %v13 = vld [vmem:[%s0 + $0x20] sm:$0xff]
    %v14 = vld [vmem:[%s0 + $0x28] sm:$0xff]
    %v15 = vld [vmem:[%s0 + $0x30] sm:$0xff]
    %v16 = vld [vmem:[%s0 + $0x38] sm:$0xff]
    %v17 = vlaneseq
    %v18 = vshrl.u32 %v17, 7
    %v19 = vsub.s32 0, %v18
    %v20 = vrot.slane %v9, %v19
    %22 = vbcast.lane.b32.xlu0 %v20, 256
    %v23 = vpop.permute.xlu0 %22
    %s25 = sor.u32 256, 8
    %26 = vbcast.lane.b32.xlu0 %v20, %s25
    %v27 = vpop.permute.xlu0 %26
    %v28 = vlaneseq
    %v29 = vshrl.u32 %v28, 7
    %v30 = vsub.s32 1, %v29
    %v31 = vrot.slane %v9, %v30
    %33 = vbcast.lane.b32.xlu0 %v31, 256
    %v34 = vpop.permute.xlu0 %33
    %s36 = sor.u32 256, 8
    %37 = vbcast.lane.b32.xlu0 %v31, %s36
    %v38 = vpop.permute.xlu0 %37
    %v39 = vlaneseq
    %v40 = vshrl.u32 %v39, 7
    %v41 = vsub.s32 2, %v40
    %v42 = vrot.slane %v9, %v41
    %44 = vbcast.lane.b32.xlu0 %v42, 256
    %v45 = vpop.permute.xlu0 %44
    %s47 = sor.u32 256, 8
    %48 = vbcast.lane.b32.xlu0 %v42, %s47
    %v49 = vpop.permute.xlu0 %48
    %v50 = vlaneseq
    %v51 = vshrl.u32 %v50, 7
    %v52 = vsub.s32 3, %v51
    %v53 = vrot.slane %v9, %v52
    %55 = vbcast.lane.b32.xlu0 %v53, 256
    %v56 = vpop.permute.xlu0 %55
    %s58 = sor.u32 256, 8
    %59 = vbcast.lane.b32.xlu0 %v53, %s58
    %v60 = vpop.permute.xlu0 %59
    %v61 = vlaneseq
    %v62 = vshrl.u32 %v61, 7
    %v63 = vsub.s32 4, %v62
    %v64 = vrot.slane %v9, %v63
    %66 = vbcast.lane.b32.xlu0 %v64, 256
    %v67 = vpop.permute.xlu0 %66
    %s69 = sor.u32 256, 8
    %70 = vbcast.lane.b32.xlu0 %v64, %s69
    %v71 = vpop.permute.xlu0 %70
    %v72 = vlaneseq
    %v73 = vshrl.u32 %v72, 7
    %v74 = vsub.s32 5, %v73
    %v75 = vrot.slane %v9, %v74
    %77 = vbcast.lane.b32.xlu0 %v75, 256
    %v78 = vpop.permute.xlu0 %77
    %s80 = sor.u32 256, 8
    %81 = vbcast.lane.b32.xlu0 %v75, %s80
    %v82 = vpop.permute.xlu0 %81
    %v83 = vlaneseq
    %v84 = vshrl.u32 %v83, 7
    %v85 = vsub.s32 6, %v84
    %v86 = vrot.slane %v9, %v85
    %88 = vbcast.lane.b32.xlu0 %v86, 256
    %v89 = vpop.permute.xlu0 %88
    %s91 = sor.u32 256, 8
    %92 = vbcast.lane.b32.xlu0 %v86, %s91
    %v93 = vpop.permute.xlu0 %92
    %v94 = vlaneseq
    %v95 = vshrl.u32 %v94, 7
    %v96 = vsub.s32 7, %v95
    %v97 = vrot.slane %v9, %v96
    %99 = vbcast.lane.b32.xlu0 %v97, 256
    %v100 = vpop.permute.xlu0 %99
    %s102 = sor.u32 256, 8
    %103 = vbcast.lane.b32.xlu0 %v97, %s102
    %v104 = vpop.permute.xlu0 %103
    %v105 = vlaneseq
    %v106 = vshrl.u32 %v105, 7
    %v107 = vsub.s32 0, %v106
    %v108 = vrot.slane %v10, %v107
    %110 = vbcast.lane.b32.xlu0 %v108, 256
    %v111 = vpop.permute.xlu0 %110
    %s113 = sor.u32 256, 8
    %114 = vbcast.lane.b32.xlu0 %v108, %s113
    %v115 = vpop.permute.xlu0 %114
    %v116 = vlaneseq
    %v117 = vshrl.u32 %v116, 7
    %v118 = vsub.s32 1, %v117
    %v119 = vrot.slane %v10, %v118
    %121 = vbcast.lane.b32.xlu0 %v119, 256
    %v122 = vpop.permute.xlu0 %121
    %s124 = sor.u32 256, 8
    %125 = vbcast.lane.b32.xlu0 %v119, %s124
    %v126 = vpop.permute.xlu0 %125
    %v127 = vlaneseq
    %v128 = vshrl.u32 %v127, 7
    %v129 = vsub.s32 2, %v128
    %v130 = vrot.slane %v10, %v129
    %132 = vbcast.lane.b32.xlu0 %v130, 256
    %v133 = vpop.permute.xlu0 %132
    %s135 = sor.u32 256, 8
    %136 = vbcast.lane.b32.xlu0 %v130, %s135
    %v137 = vpop.permute.xlu0 %136
    %v138 = vlaneseq
    %v139 = vshrl.u32 %v138, 7
    %v140 = vsub.s32 3, %v139
    %v141 = vrot.slane %v10, %v140
    %143 = vbcast.lane.b32.xlu0 %v141, 256
    %v144 = vpop.permute.xlu0 %143
    %s146 = sor.u32 256, 8
    %147 = vbcast.lane.b32.xlu0 %v141, %s146
    %v148 = vpop.permute.xlu0 %147
    %v149 = vlaneseq
    %v150 = vshrl.u32 %v149, 7
    %v151 = vsub.s32 4, %v150
    %v152 = vrot.slane %v10, %v151
    %154 = vbcast.lane.b32.xlu0 %v152, 256
    %v155 = vpop.permute.xlu0 %154
    %s157 = sor.u32 256, 8
    %158 = vbcast.lane.b32.xlu0 %v152, %s157
    %v159 = vpop.permute.xlu0 %158
    %v160 = vlaneseq
    %v161 = vshrl.u32 %v160, 7
    %v162 = vsub.s32 5, %v161
    %v163 = vrot.slane %v10, %v162
    %165 = vbcast.lane.b32.xlu0 %v163, 256
    %v166 = vpop.permute.xlu0 %165
    %s168 = sor.u32 256, 8
    %169 = vbcast.lane.b32.xlu0 %v163, %s168
    %v170 = vpop.permute.xlu0 %169
    %v171 = vlaneseq
    %v172 = vshrl.u32 %v171, 7
    %v173 = vsub.s32 6, %v172
    %v174 = vrot.slane %v10, %v173
    %176 = vbcast.lane.b32.xlu0 %v174, 256
    %v177 = vpop.permute.xlu0 %176
    %s179 = sor.u32 256, 8
    %180 = vbcast.lane.b32.xlu0 %v174, %s179
    %v181 = vpop.permute.xlu0 %180
    %v182 = vlaneseq
    %v183 = vshrl.u32 %v182, 7
    %v184 = vsub.s32 7, %v183
    %v185 = vrot.slane %v10, %v184
    %187 = vbcast.lane.b32.xlu0 %v185, 256
    %v188 = vpop.permute.xlu0 %187
    %s190 = sor.u32 256, 8
    %191 = vbcast.lane.b32.xlu0 %v185, %s190
    %v192 = vpop.permute.xlu0 %191
    %v193 = vlaneseq
    %v194 = vshrl.u32 %v193, 7
    %v195 = vsub.s32 0, %v194
    %v196 = vrot.slane %v11, %v195
    %198 = vbcast.lane.b32.xlu0 %v196, 256
    %v199 = vpop.permute.xlu0 %198
    %s201 = sor.u32 256, 8
    %202 = vbcast.lane.b32.xlu0 %v196, %s201
    %v203 = vpop.permute.xlu0 %202
    %v204 = vlaneseq
    %v205 = vshrl.u32 %v204, 7
    %v206 = vsub.s32 1, %v205
    %v207 = vrot.slane %v11, %v206
    %209 = vbcast.lane.b32.xlu0 %v207, 256
    %v210 = vpop.permute.xlu0 %209
    %s212 = sor.u32 256, 8
    %213 = vbcast.lane.b32.xlu0 %v207, %s212
    %v214 = vpop.permute.xlu0 %213
    %v215 = vlaneseq
    %v216 = vshrl.u32 %v215, 7
    %v217 = vsub.s32 2, %v216
    %v218 = vrot.slane %v11, %v217
    %220 = vbcast.lane.b32.xlu0 %v218, 256
    %v221 = vpop.permute.xlu0 %220
    %s223 = sor.u32 256, 8
    %224 = vbcast.lane.b32.xlu0 %v218, %s223
    %v225 = vpop.permute.xlu0 %224
    %v226 = vlaneseq
    %v227 = vshrl.u32 %v226, 7
    %v228 = vsub.s32 3, %v227
    %v229 = vrot.slane %v11, %v228
    %231 = vbcast.lane.b32.xlu0 %v229, 256
    %v232 = vpop.permute.xlu0 %231
    %s234 = sor.u32 256, 8
    %235 = vbcast.lane.b32.xlu0 %v229, %s234
    %v236 = vpop.permute.xlu0 %235
    %v237 = vlaneseq
    %v238 = vshrl.u32 %v237, 7
    %v239 = vsub.s32 4, %v238
    %v240 = vrot.slane %v11, %v239
    %242 = vbcast.lane.b32.xlu0 %v240, 256
    %v243 = vpop.permute.xlu0 %242
    %s245 = sor.u32 256, 8
    %246 = vbcast.lane.b32.xlu0 %v240, %s245
    %v247 = vpop.permute.xlu0 %246
    %v248 = vlaneseq
    %v249 = vshrl.u32 %v248, 7
    %v250 = vsub.s32 5, %v249
    %v251 = vrot.slane %v11, %v250
    %253 = vbcast.lane.b32.xlu0 %v251, 256
    %v254 = vpop.permute.xlu0 %253
    %s256 = sor.u32 256, 8
    %257 = vbcast.lane.b32.xlu0 %v251, %s256
    %v258 = vpop.permute.xlu0 %257
    %v259 = vlaneseq
    %v260 = vshrl.u32 %v259, 7
    %v261 = vsub.s32 6, %v260
    %v262 = vrot.slane %v11, %v261
    %264 = vbcast.lane.b32.xlu0 %v262, 256
    %v265 = vpop.permute.xlu0 %264
    %s267 = sor.u32 256, 8
    %268 = vbcast.lane.b32.xlu0 %v262, %s267
    %v269 = vpop.permute.xlu0 %268
    %v270 = vlaneseq
    %v271 = vshrl.u32 %v270, 7
    %v272 = vsub.s32 7, %v271
    %v273 = vrot.slane %v11, %v272
    %275 = vbcast.lane.b32.xlu0 %v273, 256
    %v276 = vpop.permute.xlu0 %275
    %s278 = sor.u32 256, 8
    %279 = vbcast.lane.b32.xlu0 %v273, %s278
    %v280 = vpop.permute.xlu0 %279
    %v281 = vlaneseq
    %v282 = vshrl.u32 %v281, 7
    %v283 = vsub.s32 0, %v282
    %v284 = vrot.slane %v12, %v283
    %286 = vbcast.lane.b32.xlu0 %v284, 256
    %v287 = vpop.permute.xlu0 %286
    %s289 = sor.u32 256, 8
    %290 = vbcast.lane.b32.xlu0 %v284, %s289
    %v291 = vpop.permute.xlu0 %290
    %v292 = vlaneseq
    %v293 = vshrl.u32 %v292, 7
    %v294 = vsub.s32 1, %v293
    %v295 = vrot.slane %v12, %v294
    %297 = vbcast.lane.b32.xlu0 %v295, 256
    %v298 = vpop.permute.xlu0 %297
    %s300 = sor.u32 256, 8
    %301 = vbcast.lane.b32.xlu0 %v295, %s300
    %v302 = vpop.permute.xlu0 %301
    %v303 = vlaneseq
    %v304 = vshrl.u32 %v303, 7
    %v305 = vsub.s32 2, %v304
    %v306 = vrot.slane %v12, %v305
    %308 = vbcast.lane.b32.xlu0 %v306, 256
    %v309 = vpop.permute.xlu0 %308
    %s311 = sor.u32 256, 8
    %312 = vbcast.lane.b32.xlu0 %v306, %s311
    %v313 = vpop.permute.xlu0 %312
    %v314 = vlaneseq
    %v315 = vshrl.u32 %v314, 7
    %v316 = vsub.s32 3, %v315
    %v317 = vrot.slane %v12, %v316
    %319 = vbcast.lane.b32.xlu0 %v317, 256
    %v320 = vpop.permute.xlu0 %319
    %s322 = sor.u32 256, 8
    %323 = vbcast.lane.b32.xlu0 %v317, %s322
    %v324 = vpop.permute.xlu0 %323
    %v325 = vlaneseq
    %v326 = vshrl.u32 %v325, 7
    %v327 = vsub.s32 4, %v326
    %v328 = vrot.slane %v12, %v327
    %330 = vbcast.lane.b32.xlu0 %v328, 256
    %v331 = vpop.permute.xlu0 %330
    %s333 = sor.u32 256, 8
    %334 = vbcast.lane.b32.xlu0 %v328, %s333
    %v335 = vpop.permute.xlu0 %334
    %v336 = vlaneseq
    %v337 = vshrl.u32 %v336, 7
    %v338 = vsub.s32 5, %v337
    %v339 = vrot.slane %v12, %v338
    %341 = vbcast.lane.b32.xlu0 %v339, 256
    %v342 = vpop.permute.xlu0 %341
    %s344 = sor.u32 256, 8
    %345 = vbcast.lane.b32.xlu0 %v339, %s344
    %v346 = vpop.permute.xlu0 %345
    %v347 = vlaneseq
    %v348 = vshrl.u32 %v347, 7
    %v349 = vsub.s32 6, %v348
    %v350 = vrot.slane %v12, %v349
    %352 = vbcast.lane.b32.xlu0 %v350, 256
    %v353 = vpop.permute.xlu0 %352
    %s355 = sor.u32 256, 8
    %356 = vbcast.lane.b32.xlu0 %v350, %s355
    %v357 = vpop.permute.xlu0 %356
    %v358 = vlaneseq
    %v359 = vshrl.u32 %v358, 7
    %v360 = vsub.s32 7, %v359
    %v361 = vrot.slane %v12, %v360
    %363 = vbcast.lane.b32.xlu0 %v361, 256
    %v364 = vpop.permute.xlu0 %363
    %s366 = sor.u32 256, 8
    %367 = vbcast.lane.b32.xlu0 %v361, %s366
    %v368 = vpop.permute.xlu0 %367
    %v369 = vlaneseq
    %v370 = vshrl.u32 %v369, 7
    %v371 = vsub.s32 0, %v370
    %v372 = vrot.slane %v13, %v371
    %374 = vbcast.lane.b32.xlu0 %v372, 256
    %v375 = vpop.permute.xlu0 %374
    %s377 = sor.u32 256, 8
    %378 = vbcast.lane.b32.xlu0 %v372, %s377
    %v379 = vpop.permute.xlu0 %378
    %v380 = vlaneseq
    %v381 = vshrl.u32 %v380, 7
    %v382 = vsub.s32 1, %v381
    %v383 = vrot.slane %v13, %v382
    %385 = vbcast.lane.b32.xlu0 %v383, 256
    %v386 = vpop.permute.xlu0 %385
    %s388 = sor.u32 256, 8
    %389 = vbcast.lane.b32.xlu0 %v383, %s388
    %v390 = vpop.permute.xlu0 %389
    %v391 = vlaneseq
    %v392 = vshrl.u32 %v391, 7
    %v393 = vsub.s32 2, %v392
    %v394 = vrot.slane %v13, %v393
    %396 = vbcast.lane.b32.xlu0 %v394, 256
    %v397 = vpop.permute.xlu0 %396
    %s399 = sor.u32 256, 8
    %400 = vbcast.lane.b32.xlu0 %v394, %s399
    %v401 = vpop.permute.xlu0 %400
    %v402 = vlaneseq
    %v403 = vshrl.u32 %v402, 7
    %v404 = vsub.s32 3, %v403
    %v405 = vrot.slane %v13, %v404
    %407 = vbcast.lane.b32.xlu0 %v405, 256
    %v408 = vpop.permute.xlu0 %407
    %s410 = sor.u32 256, 8
    %411 = vbcast.lane.b32.xlu0 %v405, %s410
    %v412 = vpop.permute.xlu0 %411
    %v413 = vlaneseq
    %v414 = vshrl.u32 %v413, 7
    %v415 = vsub.s32 4, %v414
    %v416 = vrot.slane %v13, %v415
    %418 = vbcast.lane.b32.xlu0 %v416, 256
    %v419 = vpop.permute.xlu0 %418
    %s421 = sor.u32 256, 8
    %422 = vbcast.lane.b32.xlu0 %v416, %s421
    %v423 = vpop.permute.xlu0 %422
    %v424 = vlaneseq
    %v425 = vshrl.u32 %v424, 7
    %v426 = vsub.s32 5, %v425
    %v427 = vrot.slane %v13, %v426
    %429 = vbcast.lane.b32.xlu0 %v427, 256
    %v430 = vpop.permute.xlu0 %429
    %s432 = sor.u32 256, 8
    %433 = vbcast.lane.b32.xlu0 %v427, %s432
    %v434 = vpop.permute.xlu0 %433
    %v435 = vlaneseq
    %v436 = vshrl.u32 %v435, 7
    %v437 = vsub.s32 6, %v436
    %v438 = vrot.slane %v13, %v437
    %440 = vbcast.lane.b32.xlu0 %v438, 256
    %v441 = vpop.permute.xlu0 %440
    %s443 = sor.u32 256, 8
    %444 = vbcast.lane.b32.xlu0 %v438, %s443
    %v445 = vpop.permute.xlu0 %444
    %v446 = vlaneseq
    %v447 = vshrl.u32 %v446, 7
    %v448 = vsub.s32 7, %v447
    %v449 = vrot.slane %v13, %v448
    %451 = vbcast.lane.b32.xlu0 %v449, 256
    %v452 = vpop.permute.xlu0 %451
    %s454 = sor.u32 256, 8
    %455 = vbcast.lane.b32.xlu0 %v449, %s454
    %v456 = vpop.permute.xlu0 %455
    %v457 = vlaneseq
    %v458 = vshrl.u32 %v457, 7
    %v459 = vsub.s32 0, %v458
    %v460 = vrot.slane %v14, %v459
    %462 = vbcast.lane.b32.xlu0 %v460, 256
    %v463 = vpop.permute.xlu0 %462
    %s465 = sor.u32 256, 8
    %466 = vbcast.lane.b32.xlu0 %v460, %s465
    %v467 = vpop.permute.xlu0 %466
    %v468 = vlaneseq
    %v469 = vshrl.u32 %v468, 7
    %v470 = vsub.s32 1, %v469
    %v471 = vrot.slane %v14, %v470
    %473 = vbcast.lane.b32.xlu0 %v471, 256
    %v474 = vpop.permute.xlu0 %473
    %s476 = sor.u32 256, 8
    %477 = vbcast.lane.b32.xlu0 %v471, %s476
    %v478 = vpop.permute.xlu0 %477
    %v479 = vlaneseq
    %v480 = vshrl.u32 %v479, 7
    %v481 = vsub.s32 2, %v480
    %v482 = vrot.slane %v14, %v481
    %484 = vbcast.lane.b32.xlu0 %v482, 256
    %v485 = vpop.permute.xlu0 %484
    %s487 = sor.u32 256, 8
    %488 = vbcast.lane.b32.xlu0 %v482, %s487
    %v489 = vpop.permute.xlu0 %488
    %v490 = vlaneseq
    %v491 = vshrl.u32 %v490, 7
    %v492 = vsub.s32 3, %v491
    %v493 = vrot.slane %v14, %v492
    %495 = vbcast.lane.b32.xlu0 %v493, 256
    %v496 = vpop.permute.xlu0 %495
    %s498 = sor.u32 256, 8
    %499 = vbcast.lane.b32.xlu0 %v493, %s498
    %v500 = vpop.permute.xlu0 %499
    %v501 = vlaneseq
    %v502 = vshrl.u32 %v501, 7
    %v503 = vsub.s32 4, %v502
    %v504 = vrot.slane %v14, %v503
    %506 = vbcast.lane.b32.xlu0 %v504, 256
    %v507 = vpop.permute.xlu0 %506
    %s509 = sor.u32 256, 8
    %510 = vbcast.lane.b32.xlu0 %v504, %s509
    %v511 = vpop.permute.xlu0 %510
    %v512 = vlaneseq
    %v513 = vshrl.u32 %v512, 7
    %v514 = vsub.s32 5, %v513
    %v515 = vrot.slane %v14, %v514
    %517 = vbcast.lane.b32.xlu0 %v515, 256
    %v518 = vpop.permute.xlu0 %517
    %s520 = sor.u32 256, 8
    %521 = vbcast.lane.b32.xlu0 %v515, %s520
    %v522 = vpop.permute.xlu0 %521
    %v523 = vlaneseq
    %v524 = vshrl.u32 %v523, 7
    %v525 = vsub.s32 6, %v524
    %v526 = vrot.slane %v14, %v525
    %528 = vbcast.lane.b32.xlu0 %v526, 256
    %v529 = vpop.permute.xlu0 %528
    %s531 = sor.u32 256, 8
    %532 = vbcast.lane.b32.xlu0 %v526, %s531
    %v533 = vpop.permute.xlu0 %532
    %v534 = vlaneseq
    %v535 = vshrl.u32 %v534, 7
    %v536 = vsub.s32 7, %v535
    %v537 = vrot.slane %v14, %v536
    %539 = vbcast.lane.b32.xlu0 %v537, 256
    %v540 = vpop.permute.xlu0 %539
    %s542 = sor.u32 256, 8
    %543 = vbcast.lane.b32.xlu0 %v537, %s542
    %v544 = vpop.permute.xlu0 %543
    %v545 = vlaneseq
    %v546 = vshrl.u32 %v545, 7
    %v547 = vsub.s32 0, %v546
    %v548 = vrot.slane %v15, %v547
    %550 = vbcast.lane.b32.xlu0 %v548, 256
    %v551 = vpop.permute.xlu0 %550
    %s553 = sor.u32 256, 8
    %554 = vbcast.lane.b32.xlu0 %v548, %s553
    %v555 = vpop.permute.xlu0 %554
    %v556 = vlaneseq
    %v557 = vshrl.u32 %v556, 7
    %v558 = vsub.s32 1, %v557
    %v559 = vrot.slane %v15, %v558
    %561 = vbcast.lane.b32.xlu0 %v559, 256
    %v562 = vpop.permute.xlu0 %561
    %s564 = sor.u32 256, 8
    %565 = vbcast.lane.b32.xlu0 %v559, %s564
    %v566 = vpop.permute.xlu0 %565
    %v567 = vlaneseq
    %v568 = vshrl.u32 %v567, 7
    %v569 = vsub.s32 2, %v568
    %v570 = vrot.slane %v15, %v569
    %572 = vbcast.lane.b32.xlu0 %v570, 256
    %v573 = vpop.permute.xlu0 %572
    %s575 = sor.u32 256, 8
    %576 = vbcast.lane.b32.xlu0 %v570, %s575
    %v577 = vpop.permute.xlu0 %576
    %v578 = vlaneseq
    %v579 = vshrl.u32 %v578, 7
    %v580 = vsub.s32 3, %v579
    %v581 = vrot.slane %v15, %v580
    %583 = vbcast.lane.b32.xlu0 %v581, 256
    %v584 = vpop.permute.xlu0 %583
    %s586 = sor.u32 256, 8
    %587 = vbcast.lane.b32.xlu0 %v581, %s586
    %v588 = vpop.permute.xlu0 %587
    %v589 = vlaneseq
    %v590 = vshrl.u32 %v589, 7
    %v591 = vsub.s32 4, %v590
    %v592 = vrot.slane %v15, %v591
    %594 = vbcast.lane.b32.xlu0 %v592, 256
    %v595 = vpop.permute.xlu0 %594
    %s597 = sor.u32 256, 8
    %598 = vbcast.lane.b32.xlu0 %v592, %s597
    %v599 = vpop.permute.xlu0 %598
    %v600 = vlaneseq
    %v601 = vshrl.u32 %v600, 7
    %v602 = vsub.s32 5, %v601
    %v603 = vrot.slane %v15, %v602
    %605 = vbcast.lane.b32.xlu0 %v603, 256
    %v606 = vpop.permute.xlu0 %605
    %s608 = sor.u32 256, 8
    %609 = vbcast.lane.b32.xlu0 %v603, %s608
    %v610 = vpop.permute.xlu0 %609
    %v611 = vlaneseq
    %v612 = vshrl.u32 %v611, 7
    %v613 = vsub.s32 6, %v612
    %v614 = vrot.slane %v15, %v613
    %616 = vbcast.lane.b32.xlu0 %v614, 256
    %v617 = vpop.permute.xlu0 %616
    %s619 = sor.u32 256, 8
    %620 = vbcast.lane.b32.xlu0 %v614, %s619
    %v621 = vpop.permute.xlu0 %620
    %v622 = vlaneseq
    %v623 = vshrl.u32 %v622, 7
    %v624 = vsub.s32 7, %v623
    %v625 = vrot.slane %v15, %v624
    %627 = vbcast.lane.b32.xlu0 %v625, 256
    %v628 = vpop.permute.xlu0 %627
    %s630 = sor.u32 256, 8
    %631 = vbcast.lane.b32.xlu0 %v625, %s630
    %v632 = vpop.permute.xlu0 %631
    %v633 = vlaneseq
    %v634 = vshrl.u32 %v633, 7
    %v635 = vsub.s32 0, %v634
    %v636 = vrot.slane %v16, %v635
    %638 = vbcast.lane.b32.xlu0 %v636, 256
    %v639 = vpop.permute.xlu0 %638
    %s641 = sor.u32 256, 8
    %642 = vbcast.lane.b32.xlu0 %v636, %s641
    %v643 = vpop.permute.xlu0 %642
    %v644 = vlaneseq
    %v645 = vshrl.u32 %v644, 7
    %v646 = vsub.s32 1, %v645
    %v647 = vrot.slane %v16, %v646
    %649 = vbcast.lane.b32.xlu0 %v647, 256
    %v650 = vpop.permute.xlu0 %649
    %s652 = sor.u32 256, 8
    %653 = vbcast.lane.b32.xlu0 %v647, %s652
    %v654 = vpop.permute.xlu0 %653
    %v655 = vlaneseq
    %v656 = vshrl.u32 %v655, 7
    %v657 = vsub.s32 2, %v656
    %v658 = vrot.slane %v16, %v657
    %660 = vbcast.lane.b32.xlu0 %v658, 256
    %v661 = vpop.permute.xlu0 %660
    %s663 = sor.u32 256, 8
    %664 = vbcast.lane.b32.xlu0 %v658, %s663
    %v665 = vpop.permute.xlu0 %664
    %v666 = vlaneseq
    %v667 = vshrl.u32 %v666, 7
    %v668 = vsub.s32 3, %v667
    %v669 = vrot.slane %v16, %v668
    %671 = vbcast.lane.b32.xlu0 %v669, 256
    %v672 = vpop.permute.xlu0 %671
    %s674 = sor.u32 256, 8
    %675 = vbcast.lane.b32.xlu0 %v669, %s674
    %v676 = vpop.permute.xlu0 %675
    %v677 = vlaneseq
    %v678 = vshrl.u32 %v677, 7
    %v679 = vsub.s32 4, %v678
    %v680 = vrot.slane %v16, %v679
    %682 = vbcast.lane.b32.xlu0 %v680, 256
    %v683 = vpop.permute.xlu0 %682
    %s685 = sor.u32 256, 8
    %686 = vbcast.lane.b32.xlu0 %v680, %s685
    %v687 = vpop.permute.xlu0 %686
    %v688 = vlaneseq
    %v689 = vshrl.u32 %v688, 7
    %v690 = vsub.s32 5, %v689
    %v691 = vrot.slane %v16, %v690
    %693 = vbcast.lane.b32.xlu0 %v691, 256
    %v694 = vpop.permute.xlu0 %693
    %s696 = sor.u32 256, 8
    %697 = vbcast.lane.b32.xlu0 %v691, %s696
    %v698 = vpop.permute.xlu0 %697
    %v699 = vlaneseq
    %v700 = vshrl.u32 %v699, 7
    %v701 = vsub.s32 6, %v700
    %v702 = vrot.slane %v16, %v701
    %704 = vbcast.lane.b32.xlu0 %v702, 256
    %v705 = vpop.permute.xlu0 %704
    %s707 = sor.u32 256, 8
    %708 = vbcast.lane.b32.xlu0 %v702, %s707
    %v709 = vpop.permute.xlu0 %708
    %v710 = vlaneseq
    %v711 = vshrl.u32 %v710, 7
    %v712 = vsub.s32 7, %v711
    %v713 = vrot.slane %v16, %v712
    %715 = vbcast.lane.b32.xlu0 %v713, 256
    %v716 = vpop.permute.xlu0 %715
    %s718 = sor.u32 256, 8
    %719 = vbcast.lane.b32.xlu0 %v713, %s718
    %v720 = vpop.permute.xlu0 %719
    %v721 = vcombine.low %v23, %v45
    %v722 = vcombine.high %v23, %v45
    %v724 = vunpack.c.l.s4 1983009808
    %v725 = vunpack.c.0.s8 %v724
    %v726 = vlaneseq
    %v727 = vshrl.u32 %v726, 7
    %v728 = vsub.s32 %v725, %v727
    %v729 = vrot.slane %v721, %v728
    %v731 = vunpack.c.l.s4 1983009808
    %v732 = vunpack.c.0.s8 %v731
    %v733 = vlaneseq
    %v734 = vshrl.u32 %v733, 7
    %v735 = vsub.s32 %v732, %v734
    %v736 = vrot.slane %v722, %v735
    %v737 = vcombine.low %v34, %v56
    %v738 = vcombine.high %v34, %v56
    %v740 = vunpack.c.l.s4 1983009808
    %v741 = vunpack.c.0.s8 %v740
    %v742 = vlaneseq
    %v743 = vshrl.u32 %v742, 7
    %v744 = vsub.s32 %v741, %v743
    %v745 = vrot.slane %v737, %v744
    %v747 = vunpack.c.l.s4 1983009808
    %v748 = vunpack.c.0.s8 %v747
    %v749 = vlaneseq
    %v750 = vshrl.u32 %v749, 7
    %v751 = vsub.s32 %v748, %v750
    %v752 = vrot.slane %v738, %v751
    %v753 = vcombine.low %v67, %v89
    %v754 = vcombine.high %v67, %v89
    %v756 = vunpack.c.l.s4 1983009808
    %v757 = vunpack.c.0.s8 %v756
    %v758 = vlaneseq
    %v759 = vshrl.u32 %v758, 7
    %v760 = vsub.s32 %v757, %v759
    %v761 = vrot.slane %v753, %v760
    %v763 = vunpack.c.l.s4 1983009808
    %v764 = vunpack.c.0.s8 %v763
    %v765 = vlaneseq
    %v766 = vshrl.u32 %v765, 7
    %v767 = vsub.s32 %v764, %v766
    %v768 = vrot.slane %v754, %v767
    %v769 = vcombine.low %v78, %v100
    %v770 = vcombine.high %v78, %v100
    %v772 = vunpack.c.l.s4 1983009808
    %v773 = vunpack.c.0.s8 %v772
    %v774 = vlaneseq
    %v775 = vshrl.u32 %v774, 7
    %v776 = vsub.s32 %v773, %v775
    %v777 = vrot.slane %v769, %v776
    %v779 = vunpack.c.l.s4 1983009808
    %v780 = vunpack.c.0.s8 %v779
    %v781 = vlaneseq
    %v782 = vshrl.u32 %v781, 7
    %v783 = vsub.s32 %v780, %v782
    %v784 = vrot.slane %v770, %v783
    %v785 = vcombine.low %v729, %v745
    %v786 = vcombine.high %v729, %v745
    %v788 = vunpack.c.l.s4 1934713408
    %v789 = vunpack.c.0.s8 %v788
    %v790 = vlaneseq
    %v791 = vshrl.u32 %v790, 7
    %v792 = vsub.s32 %v789, %v791
    %v793 = vrot.slane %v785, %v792
    %v795 = vunpack.c.l.s4 1934713408
    %v796 = vunpack.c.0.s8 %v795
    %v797 = vlaneseq
    %v798 = vshrl.u32 %v797, 7
    %v799 = vsub.s32 %v796, %v798
    %v800 = vrot.slane %v786, %v799
    %v801 = vcombine.low %v736, %v752
    %v802 = vcombine.high %v736, %v752
    %v804 = vunpack.c.l.s4 1934713408
    %v805 = vunpack.c.0.s8 %v804
    %v806 = vlaneseq
    %v807 = vshrl.u32 %v806, 7
    %v808 = vsub.s32 %v805, %v807
    %v809 = vrot.slane %v801, %v808
    %v811 = vunpack.c.l.s4 1934713408
    %v812 = vunpack.c.0.s8 %v811
    %v813 = vlaneseq
    %v814 = vshrl.u32 %v813, 7
    %v815 = vsub.s32 %v812, %v814
    %v816 = vrot.slane %v802, %v815
    %v817 = vcombine.low %v761, %v777
    %v818 = vcombine.high %v761, %v777
    %v820 = vunpack.c.l.s4 1934713408
    %v821 = vunpack.c.0.s8 %v820
    %v822 = vlaneseq
    %v823 = vshrl.u32 %v822, 7
    %v824 = vsub.s32 %v821, %v823
    %v825 = vrot.slane %v817, %v824
    %v827 = vunpack.c.l.s4 1934713408
    %v828 = vunpack.c.0.s8 %v827
    %v829 = vlaneseq
    %v830 = vshrl.u32 %v829, 7
    %v831 = vsub.s32 %v828, %v830
    %v832 = vrot.slane %v818, %v831
    %v833 = vcombine.low %v768, %v784
    %v834 = vcombine.high %v768, %v784
    %v836 = vunpack.c.l.s4 1934713408
    %v837 = vunpack.c.0.s8 %v836
    %v838 = vlaneseq
    %v839 = vshrl.u32 %v838, 7
    %v840 = vsub.s32 %v837, %v839
    %v841 = vrot.slane %v833, %v840
    %v843 = vunpack.c.l.s4 1934713408
    %v844 = vunpack.c.0.s8 %v843
    %v845 = vlaneseq
    %v846 = vshrl.u32 %v845, 7
    %v847 = vsub.s32 %v844, %v846
    %v848 = vrot.slane %v834, %v847
    %v849 = vcombine.low %v793, %v825
    %v850 = vcombine.high %v793, %v825
    %v851 = vcombine.low %v800, %v832
    %v852 = vcombine.high %v800, %v832
    %v853 = vcombine.low %v809, %v841
    %v854 = vcombine.high %v809, %v841
    %v855 = vcombine.low %v816, %v848
    %v856 = vcombine.high %v816, %v848
    %v857 = vcombine.low %v111, %v133
    %v858 = vcombine.high %v111, %v133
    %v860 = vunpack.c.l.s4 1983009808
    %v861 = vunpack.c.0.s8 %v860
    %v862 = vlaneseq
    %v863 = vshrl.u32 %v862, 7
    %v864 = vsub.s32 %v861, %v863
    %v865 = vrot.slane %v857, %v864
    %v867 = vunpack.c.l.s4 1983009808
    %v868 = vunpack.c.0.s8 %v867
    %v869 = vlaneseq
    %v870 = vshrl.u32 %v869, 7
    %v871 = vsub.s32 %v868, %v870
    %v872 = vrot.slane %v858, %v871
    %v873 = vcombine.low %v122, %v144
    %v874 = vcombine.high %v122, %v144
    %v876 = vunpack.c.l.s4 1983009808
    %v877 = vunpack.c.0.s8 %v876
    %v878 = vlaneseq
    %v879 = vshrl.u32 %v878, 7
    %v880 = vsub.s32 %v877, %v879
    %v881 = vrot.slane %v873, %v880
    %v883 = vunpack.c.l.s4 1983009808
    %v884 = vunpack.c.0.s8 %v883
    %v885 = vlaneseq
    %v886 = vshrl.u32 %v885, 7
    %v887 = vsub.s32 %v884, %v886
    %v888 = vrot.slane %v874, %v887
    %v889 = vcombine.low %v155, %v177
    %v890 = vcombine.high %v155, %v177
    %v892 = vunpack.c.l.s4 1983009808
    %v893 = vunpack.c.0.s8 %v892
    %v894 = vlaneseq
    %v895 = vshrl.u32 %v894, 7
    %v896 = vsub.s32 %v893, %v895
    %v897 = vrot.slane %v889, %v896
    %v899 = vunpack.c.l.s4 1983009808
    %v900 = vunpack.c.0.s8 %v899
    %v901 = vlaneseq
    %v902 = vshrl.u32 %v901, 7
    %v903 = vsub.s32 %v900, %v902
    %v904 = vrot.slane %v890, %v903
    %v905 = vcombine.low %v166, %v188
    %v906 = vcombine.high %v166, %v188
    %v908 = vunpack.c.l.s4 1983009808
    %v909 = vunpack.c.0.s8 %v908
    %v910 = vlaneseq
    %v911 = vshrl.u32 %v910, 7
    %v912 = vsub.s32 %v909, %v911
    %v913 = vrot.slane %v905, %v912
    %v915 = vunpack.c.l.s4 1983009808
    %v916 = vunpack.c.0.s8 %v915
    %v917 = vlaneseq
    %v918 = vshrl.u32 %v917, 7
    %v919 = vsub.s32 %v916, %v918
    %v920 = vrot.slane %v906, %v919
    %v921 = vcombine.low %v865, %v881
    %v922 = vcombine.high %v865, %v881
    %v924 = vunpack.c.l.s4 1934713408
    %v925 = vunpack.c.0.s8 %v924
    %v926 = vlaneseq
    %v927 = vshrl.u32 %v926, 7
    %v928 = vsub.s32 %v925, %v927
    %v929 = vrot.slane %v921, %v928
    %v931 = vunpack.c.l.s4 1934713408
    %v932 = vunpack.c.0.s8 %v931
    %v933 = vlaneseq
    %v934 = vshrl.u32 %v933, 7
    %v935 = vsub.s32 %v932, %v934
    %v936 = vrot.slane %v922, %v935
    %v937 = vcombine.low %v872, %v888
    %v938 = vcombine.high %v872, %v888
    %v940 = vunpack.c.l.s4 1934713408
    %v941 = vunpack.c.0.s8 %v940
    %v942 = vlaneseq
    %v943 = vshrl.u32 %v942, 7
    %v944 = vsub.s32 %v941, %v943
    %v945 = vrot.slane %v937, %v944
    %v947 = vunpack.c.l.s4 1934713408
    %v948 = vunpack.c.0.s8 %v947
    %v949 = vlaneseq
    %v950 = vshrl.u32 %v949, 7
    %v951 = vsub.s32 %v948, %v950
    %v952 = vrot.slane %v938, %v951
    %v953 = vcombine.low %v897, %v913
    %v954 = vcombine.high %v897, %v913
    %v956 = vunpack.c.l.s4 1934713408
    %v957 = vunpack.c.0.s8 %v956
    %v958 = vlaneseq
    %v959 = vshrl.u32 %v958, 7
    %v960 = vsub.s32 %v957, %v959
    %v961 = vrot.slane %v953, %v960
    %v963 = vunpack.c.l.s4 1934713408
    %v964 = vunpack.c.0.s8 %v963
    %v965 = vlaneseq
    %v966 = vshrl.u32 %v965, 7
    %v967 = vsub.s32 %v964, %v966
    %v968 = vrot.slane %v954, %v967
    %v969 = vcombine.low %v904, %v920
    %v970 = vcombine.high %v904, %v920
    %v972 = vunpack.c.l.s4 1934713408
    %v973 = vunpack.c.0.s8 %v972
    %v974 = vlaneseq
    %v975 = vshrl.u32 %v974, 7
    %v976 = vsub.s32 %v973, %v975
    %v977 = vrot.slane %v969, %v976
    %v979 = vunpack.c.l.s4 1934713408
    %v980 = vunpack.c.0.s8 %v979
    %v981 = vlaneseq
    %v982 = vshrl.u32 %v981, 7
    %v983 = vsub.s32 %v980, %v982
    %v984 = vrot.slane %v970, %v983
    %v985 = vcombine.low %v929, %v961
    %v986 = vcombine.high %v929, %v961
    %v987 = vcombine.low %v936, %v968
    %v988 = vcombine.high %v936, %v968
    %v989 = vcombine.low %v945, %v977
    %v990 = vcombine.high %v945, %v977
    %v991 = vcombine.low %v952, %v984
    %v992 = vcombine.high %v952, %v984
    %v993 = vcombine.low %v199, %v221
    %v994 = vcombine.high %v199, %v221
    %v996 = vunpack.c.l.s4 1983009808
    %v997 = vunpack.c.0.s8 %v996
    %v998 = vlaneseq
    %v999 = vshrl.u32 %v998, 7
    %v1000 = vsub.s32 %v997, %v999
    %v1001 = vrot.slane %v993, %v1000
    %v1003 = vunpack.c.l.s4 1983009808
    %v1004 = vunpack.c.0.s8 %v1003
    %v1005 = vlaneseq
    %v1006 = vshrl.u32 %v1005, 7
    %v1007 = vsub.s32 %v1004, %v1006
    %v1008 = vrot.slane %v994, %v1007
    %v1009 = vcombine.low %v210, %v232
    %v1010 = vcombine.high %v210, %v232
    %v1012 = vunpack.c.l.s4 1983009808
    %v1013 = vunpack.c.0.s8 %v1012
    %v1014 = vlaneseq
    %v1015 = vshrl.u32 %v1014, 7
    %v1016 = vsub.s32 %v1013, %v1015
    %v1017 = vrot.slane %v1009, %v1016
    %v1019 = vunpack.c.l.s4 1983009808
    %v1020 = vunpack.c.0.s8 %v1019
    %v1021 = vlaneseq
    %v1022 = vshrl.u32 %v1021, 7
    %v1023 = vsub.s32 %v1020, %v1022
    %v1024 = vrot.slane %v1010, %v1023
    %v1025 = vcombine.low %v243, %v265
    %v1026 = vcombine.high %v243, %v265
    %v1028 = vunpack.c.l.s4 1983009808
    %v1029 = vunpack.c.0.s8 %v1028
    %v1030 = vlaneseq
    %v1031 = vshrl.u32 %v1030, 7
    %v1032 = vsub.s32 %v1029, %v1031
    %v1033 = vrot.slane %v1025, %v1032
    %v1035 = vunpack.c.l.s4 1983009808
    %v1036 = vunpack.c.0.s8 %v1035
    %v1037 = vlaneseq
    %v1038 = vshrl.u32 %v1037, 7
    %v1039 = vsub.s32 %v1036, %v1038
    %v1040 = vrot.slane %v1026, %v1039
    %v1041 = vcombine.low %v254, %v276
    %v1042 = vcombine.high %v254, %v276
    %v1044 = vunpack.c.l.s4 1983009808
    %v1045 = vunpack.c.0.s8 %v1044
    %v1046 = vlaneseq
    %v1047 = vshrl.u32 %v1046, 7
    %v1048 = vsub.s32 %v1045, %v1047
    %v1049 = vrot.slane %v1041, %v1048
    %v1051 = vunpack.c.l.s4 1983009808
    %v1052 = vunpack.c.0.s8 %v1051
    %v1053 = vlaneseq
    %v1054 = vshrl.u32 %v1053, 7
    %v1055 = vsub.s32 %v1052, %v1054
    %v1056 = vrot.slane %v1042, %v1055
    %v1057 = vcombine.low %v1001, %v1017
    %v1058 = vcombine.high %v1001, %v1017
    %v1060 = vunpack.c.l.s4 1934713408
    %v1061 = vunpack.c.0.s8 %v1060
    %v1062 = vlaneseq
    %v1063 = vshrl.u32 %v1062, 7
    %v1064 = vsub.s32 %v1061, %v1063
    %v1065 = vrot.slane %v1057, %v1064
    %v1067 = vunpack.c.l.s4 1934713408
    %v1068 = vunpack.c.0.s8 %v1067
    %v1069 = vlaneseq
    %v1070 = vshrl.u32 %v1069, 7
    %v1071 = vsub.s32 %v1068, %v1070
    %v1072 = vrot.slane %v1058, %v1071
    %v1073 = vcombine.low %v1008, %v1024
    %v1074 = vcombine.high %v1008, %v1024
    %v1076 = vunpack.c.l.s4 1934713408
    %v1077 = vunpack.c.0.s8 %v1076
    %v1078 = vlaneseq
    %v1079 = vshrl.u32 %v1078, 7
    %v1080 = vsub.s32 %v1077, %v1079
    %v1081 = vrot.slane %v1073, %v1080
    %v1083 = vunpack.c.l.s4 1934713408
    %v1084 = vunpack.c.0.s8 %v1083
    %v1085 = vlaneseq
    %v1086 = vshrl.u32 %v1085, 7
    %v1087 = vsub.s32 %v1084, %v1086
    %v1088 = vrot.slane %v1074, %v1087
    %v1089 = vcombine.low %v1033, %v1049
    %v1090 = vcombine.high %v1033, %v1049
    %v1092 = vunpack.c.l.s4 1934713408
    %v1093 = vunpack.c.0.s8 %v1092
    %v1094 = vlaneseq
    %v1095 = vshrl.u32 %v1094, 7
    %v1096 = vsub.s32 %v1093, %v1095
    %v1097 = vrot.slane %v1089, %v1096
    %v1099 = vunpack.c.l.s4 1934713408
    %v1100 = vunpack.c.0.s8 %v1099
    %v1101 = vlaneseq
    %v1102 = vshrl.u32 %v1101, 7
    %v1103 = vsub.s32 %v1100, %v1102
    %v1104 = vrot.slane %v1090, %v1103
    %v1105 = vcombine.low %v1040, %v1056
    %v1106 = vcombine.high %v1040, %v1056
    %v1108 = vunpack.c.l.s4 1934713408
    %v1109 = vunpack.c.0.s8 %v1108
    %v1110 = vlaneseq
    %v1111 = vshrl.u32 %v1110, 7
    %v1112 = vsub.s32 %v1109, %v1111
    %v1113 = vrot.slane %v1105, %v1112
    %v1115 = vunpack.c.l.s4 1934713408
    %v1116 = vunpack.c.0.s8 %v1115
    %v1117 = vlaneseq
    %v1118 = vshrl.u32 %v1117, 7
    %v1119 = vsub.s32 %v1116, %v1118
    %v1120 = vrot.slane %v1106, %v1119
    %v1121 = vcombine.low %v1065, %v1097
    %v1122 = vcombine.high %v1065, %v1097
    %v1123 = vcombine.low %v1072, %v1104
    %v1124 = vcombine.high %v1072, %v1104
    %v1125 = vcombine.low %v1081, %v1113
    %v1126 = vcombine.high %v1081, %v1113
    %v1127 = vcombine.low %v1088, %v1120
    %v1128 = vcombine.high %v1088, %v1120
    %v1129 = vcombine.low %v287, %v309
    %v1130 = vcombine.high %v287, %v309
    %v1132 = vunpack.c.l.s4 1983009808
    %v1133 = vunpack.c.0.s8 %v1132
    %v1134 = vlaneseq
    %v1135 = vshrl.u32 %v1134, 7
    %v1136 = vsub.s32 %v1133, %v1135
    %v1137 = vrot.slane %v1129, %v1136
    %v1139 = vunpack.c.l.s4 1983009808
    %v1140 = vunpack.c.0.s8 %v1139
    %v1141 = vlaneseq
    %v1142 = vshrl.u32 %v1141, 7
    %v1143 = vsub.s32 %v1140, %v1142
    %v1144 = vrot.slane %v1130, %v1143
    %v1145 = vcombine.low %v298, %v320
    %v1146 = vcombine.high %v298, %v320
    %v1148 = vunpack.c.l.s4 1983009808
    %v1149 = vunpack.c.0.s8 %v1148
    %v1150 = vlaneseq
    %v1151 = vshrl.u32 %v1150, 7
    %v1152 = vsub.s32 %v1149, %v1151
    %v1153 = vrot.slane %v1145, %v1152
    %v1155 = vunpack.c.l.s4 1983009808
    %v1156 = vunpack.c.0.s8 %v1155
    %v1157 = vlaneseq
    %v1158 = vshrl.u32 %v1157, 7
    %v1159 = vsub.s32 %v1156, %v1158
    %v1160 = vrot.slane %v1146, %v1159
    %v1161 = vcombine.low %v331, %v353
    %v1162 = vcombine.high %v331, %v353
    %v1164 = vunpack.c.l.s4 1983009808
    %v1165 = vunpack.c.0.s8 %v1164
    %v1166 = vlaneseq
    %v1167 = vshrl.u32 %v1166, 7
    %v1168 = vsub.s32 %v1165, %v1167
    %v1169 = vrot.slane %v1161, %v1168
    %v1171 = vunpack.c.l.s4 1983009808
    %v1172 = vunpack.c.0.s8 %v1171
    %v1173 = vlaneseq
    %v1174 = vshrl.u32 %v1173, 7
    %v1175 = vsub.s32 %v1172, %v1174
    %v1176 = vrot.slane %v1162, %v1175
    %v1177 = vcombine.low %v342, %v364
    %v1178 = vcombine.high %v342, %v364
    %v1180 = vunpack.c.l.s4 1983009808
    %v1181 = vunpack.c.0.s8 %v1180
    %v1182 = vlaneseq
    %v1183 = vshrl.u32 %v1182, 7
    %v1184 = vsub.s32 %v1181, %v1183
    %v1185 = vrot.slane %v1177, %v1184
    %v1187 = vunpack.c.l.s4 1983009808
    %v1188 = vunpack.c.0.s8 %v1187
    %v1189 = vlaneseq
    %v1190 = vshrl.u32 %v1189, 7
    %v1191 = vsub.s32 %v1188, %v1190
    %v1192 = vrot.slane %v1178, %v1191
    %v1193 = vcombine.low %v1137, %v1153
    %v1194 = vcombine.high %v1137, %v1153
    %v1196 = vunpack.c.l.s4 1934713408
    %v1197 = vunpack.c.0.s8 %v1196
    %v1198 = vlaneseq
    %v1199 = vshrl.u32 %v1198, 7
    %v1200 = vsub.s32 %v1197, %v1199
    %v1201 = vrot.slane %v1193, %v1200
    %v1203 = vunpack.c.l.s4 1934713408
    %v1204 = vunpack.c.0.s8 %v1203
    %v1205 = vlaneseq
    %v1206 = vshrl.u32 %v1205, 7
    %v1207 = vsub.s32 %v1204, %v1206
    %v1208 = vrot.slane %v1194, %v1207
    %v1209 = vcombine.low %v1144, %v1160
    %v1210 = vcombine.high %v1144, %v1160
    %v1212 = vunpack.c.l.s4 1934713408
    %v1213 = vunpack.c.0.s8 %v1212
    %v1214 = vlaneseq
    %v1215 = vshrl.u32 %v1214, 7
    %v1216 = vsub.s32 %v1213, %v1215
    %v1217 = vrot.slane %v1209, %v1216
    %v1219 = vunpack.c.l.s4 1934713408
    %v1220 = vunpack.c.0.s8 %v1219
    %v1221 = vlaneseq
    %v1222 = vshrl.u32 %v1221, 7
    %v1223 = vsub.s32 %v1220, %v1222
    %v1224 = vrot.slane %v1210, %v1223
    %v1225 = vcombine.low %v1169, %v1185
    %v1226 = vcombine.high %v1169, %v1185
    %v1228 = vunpack.c.l.s4 1934713408
    %v1229 = vunpack.c.0.s8 %v1228
    %v1230 = vlaneseq
    %v1231 = vshrl.u32 %v1230, 7
    %v1232 = vsub.s32 %v1229, %v1231
    %v1233 = vrot.slane %v1225, %v1232
    %v1235 = vunpack.c.l.s4 1934713408
    %v1236 = vunpack.c.0.s8 %v1235
    %v1237 = vlaneseq
    %v1238 = vshrl.u32 %v1237, 7
    %v1239 = vsub.s32 %v1236, %v1238
    %v1240 = vrot.slane %v1226, %v1239
    %v1241 = vcombine.low %v1176, %v1192
    %v1242 = vcombine.high %v1176, %v1192
    %v1244 = vunpack.c.l.s4 1934713408
    %v1245 = vunpack.c.0.s8 %v1244
    %v1246 = vlaneseq
    %v1247 = vshrl.u32 %v1246, 7
    %v1248 = vsub.s32 %v1245, %v1247
    %v1249 = vrot.slane %v1241, %v1248
    %v1251 = vunpack.c.l.s4 1934713408
    %v1252 = vunpack.c.0.s8 %v1251
    %v1253 = vlaneseq
    %v1254 = vshrl.u32 %v1253, 7
    %v1255 = vsub.s32 %v1252, %v1254
    %v1256 = vrot.slane %v1242, %v1255
    %v1257 = vcombine.low %v1201, %v1233
    %v1258 = vcombine.high %v1201, %v1233
    %v1259 = vcombine.low %v1208, %v1240
    %v1260 = vcombine.high %v1208, %v1240
    %v1261 = vcombine.low %v1217, %v1249
    %v1262 = vcombine.high %v1217, %v1249
    %v1263 = vcombine.low %v1224, %v1256
    %v1264 = vcombine.high %v1224, %v1256
    %v1265 = vcombine.low %v375, %v397
    %v1266 = vcombine.high %v375, %v397
    %v1268 = vunpack.c.l.s4 1983009808
    %v1269 = vunpack.c.0.s8 %v1268
    %v1270 = vlaneseq
    %v1271 = vshrl.u32 %v1270, 7
    %v1272 = vsub.s32 %v1269, %v1271
    %v1273 = vrot.slane %v1265, %v1272
    %v1275 = vunpack.c.l.s4 1983009808
    %v1276 = vunpack.c.0.s8 %v1275
    %v1277 = vlaneseq
    %v1278 = vshrl.u32 %v1277, 7
    %v1279 = vsub.s32 %v1276, %v1278
    %v1280 = vrot.slane %v1266, %v1279
    %v1281 = vcombine.low %v386, %v408
    %v1282 = vcombine.high %v386, %v408
    %v1284 = vunpack.c.l.s4 1983009808
    %v1285 = vunpack.c.0.s8 %v1284
    %v1286 = vlaneseq
    %v1287 = vshrl.u32 %v1286, 7
    %v1288 = vsub.s32 %v1285, %v1287
    %v1289 = vrot.slane %v1281, %v1288
    %v1291 = vunpack.c.l.s4 1983009808
    %v1292 = vunpack.c.0.s8 %v1291
    %v1293 = vlaneseq
    %v1294 = vshrl.u32 %v1293, 7
    %v1295 = vsub.s32 %v1292, %v1294
    %v1296 = vrot.slane %v1282, %v1295
    %v1297 = vcombine.low %v419, %v441
    %v1298 = vcombine.high %v419, %v441
    %v1300 = vunpack.c.l.s4 1983009808
    %v1301 = vunpack.c.0.s8 %v1300
    %v1302 = vlaneseq
    %v1303 = vshrl.u32 %v1302, 7
    %v1304 = vsub.s32 %v1301, %v1303
    %v1305 = vrot.slane %v1297, %v1304
    %v1307 = vunpack.c.l.s4 1983009808
    %v1308 = vunpack.c.0.s8 %v1307
    %v1309 = vlaneseq
    %v1310 = vshrl.u32 %v1309, 7
    %v1311 = vsub.s32 %v1308, %v1310
    %v1312 = vrot.slane %v1298, %v1311
    %v1313 = vcombine.low %v430, %v452
    %v1314 = vcombine.high %v430, %v452
    %v1316 = vunpack.c.l.s4 1983009808
    %v1317 = vunpack.c.0.s8 %v1316
    %v1318 = vlaneseq
    %v1319 = vshrl.u32 %v1318, 7
    %v1320 = vsub.s32 %v1317, %v1319
    %v1321 = vrot.slane %v1313, %v1320
    %v1323 = vunpack.c.l.s4 1983009808
    %v1324 = vunpack.c.0.s8 %v1323
    %v1325 = vlaneseq
    %v1326 = vshrl.u32 %v1325, 7
    %v1327 = vsub.s32 %v1324, %v1326
    %v1328 = vrot.slane %v1314, %v1327
    %v1329 = vcombine.low %v1273, %v1289
    %v1330 = vcombine.high %v1273, %v1289
    %v1332 = vunpack.c.l.s4 1934713408
    %v1333 = vunpack.c.0.s8 %v1332
    %v1334 = vlaneseq
    %v1335 = vshrl.u32 %v1334, 7
    %v1336 = vsub.s32 %v1333, %v1335
    %v1337 = vrot.slane %v1329, %v1336
    %v1339 = vunpack.c.l.s4 1934713408
    %v1340 = vunpack.c.0.s8 %v1339
    %v1341 = vlaneseq
    %v1342 = vshrl.u32 %v1341, 7
    %v1343 = vsub.s32 %v1340, %v1342
    %v1344 = vrot.slane %v1330, %v1343
    %v1345 = vcombine.low %v1280, %v1296
    %v1346 = vcombine.high %v1280, %v1296
    %v1348 = vunpack.c.l.s4 1934713408
    %v1349 = vunpack.c.0.s8 %v1348
    %v1350 = vlaneseq
    %v1351 = vshrl.u32 %v1350, 7
    %v1352 = vsub.s32 %v1349, %v1351
    %v1353 = vrot.slane %v1345, %v1352
    %v1355 = vunpack.c.l.s4 1934713408
    %v1356 = vunpack.c.0.s8 %v1355
    %v1357 = vlaneseq
    %v1358 = vshrl.u32 %v1357, 7
    %v1359 = vsub.s32 %v1356, %v1358
    %v1360 = vrot.slane %v1346, %v1359
    %v1361 = vcombine.low %v1305, %v1321
    %v1362 = vcombine.high %v1305, %v1321
    %v1364 = vunpack.c.l.s4 1934713408
    %v1365 = vunpack.c.0.s8 %v1364
    %v1366 = vlaneseq
    %v1367 = vshrl.u32 %v1366, 7
    %v1368 = vsub.s32 %v1365, %v1367
    %v1369 = vrot.slane %v1361, %v1368
    %v1371 = vunpack.c.l.s4 1934713408
    %v1372 = vunpack.c.0.s8 %v1371
    %v1373 = vlaneseq
    %v1374 = vshrl.u32 %v1373, 7
    %v1375 = vsub.s32 %v1372, %v1374
    %v1376 = vrot.slane %v1362, %v1375
    %v1377 = vcombine.low %v1312, %v1328
    %v1378 = vcombine.high %v1312, %v1328
    %v1380 = vunpack.c.l.s4 1934713408
    %v1381 = vunpack.c.0.s8 %v1380
    %v1382 = vlaneseq
    %v1383 = vshrl.u32 %v1382, 7
    %v1384 = vsub.s32 %v1381, %v1383
    %v1385 = vrot.slane %v1377, %v1384
    %v1387 = vunpack.c.l.s4 1934713408
    %v1388 = vunpack.c.0.s8 %v1387
    %v1389 = vlaneseq
    %v1390 = vshrl.u32 %v1389, 7
    %v1391 = vsub.s32 %v1388, %v1390
    %v1392 = vrot.slane %v1378, %v1391
    %v1393 = vcombine.low %v1337, %v1369
    %v1394 = vcombine.high %v1337, %v1369
    %v1395 = vcombine.low %v1344, %v1376
    %v1396 = vcombine.high %v1344, %v1376
    %v1397 = vcombine.low %v1353, %v1385
    %v1398 = vcombine.high %v1353, %v1385
    %v1399 = vcombine.low %v1360, %v1392
    %v1400 = vcombine.high %v1360, %v1392
    %v1401 = vcombine.low %v463, %v485
    %v1402 = vcombine.high %v463, %v485
    %v1404 = vunpack.c.l.s4 1983009808
    %v1405 = vunpack.c.0.s8 %v1404
    %v1406 = vlaneseq
    %v1407 = vshrl.u32 %v1406, 7
    %v1408 = vsub.s32 %v1405, %v1407
    %v1409 = vrot.slane %v1401, %v1408
    %v1411 = vunpack.c.l.s4 1983009808
    %v1412 = vunpack.c.0.s8 %v1411
    %v1413 = vlaneseq
    %v1414 = vshrl.u32 %v1413, 7
    %v1415 = vsub.s32 %v1412, %v1414
    %v1416 = vrot.slane %v1402, %v1415
    %v1417 = vcombine.low %v474, %v496
    %v1418 = vcombine.high %v474, %v496
    %v1420 = vunpack.c.l.s4 1983009808
    %v1421 = vunpack.c.0.s8 %v1420
    %v1422 = vlaneseq
    %v1423 = vshrl.u32 %v1422, 7
    %v1424 = vsub.s32 %v1421, %v1423
    %v1425 = vrot.slane %v1417, %v1424
    %v1427 = vunpack.c.l.s4 1983009808
    %v1428 = vunpack.c.0.s8 %v1427
    %v1429 = vlaneseq
    %v1430 = vshrl.u32 %v1429, 7
    %v1431 = vsub.s32 %v1428, %v1430
    %v1432 = vrot.slane %v1418, %v1431
    %v1433 = vcombine.low %v507, %v529
    %v1434 = vcombine.high %v507, %v529
    %v1436 = vunpack.c.l.s4 1983009808
    %v1437 = vunpack.c.0.s8 %v1436
    %v1438 = vlaneseq
    %v1439 = vshrl.u32 %v1438, 7
    %v1440 = vsub.s32 %v1437, %v1439
    %v1441 = vrot.slane %v1433, %v1440
    %v1443 = vunpack.c.l.s4 1983009808
    %v1444 = vunpack.c.0.s8 %v1443
    %v1445 = vlaneseq
    %v1446 = vshrl.u32 %v1445, 7
    %v1447 = vsub.s32 %v1444, %v1446
    %v1448 = vrot.slane %v1434, %v1447
    %v1449 = vcombine.low %v518, %v540
    %v1450 = vcombine.high %v518, %v540
    %v1452 = vunpack.c.l.s4 1983009808
    %v1453 = vunpack.c.0.s8 %v1452
    %v1454 = vlaneseq
    %v1455 = vshrl.u32 %v1454, 7
    %v1456 = vsub.s32 %v1453, %v1455
    %v1457 = vrot.slane %v1449, %v1456
    %v1459 = vunpack.c.l.s4 1983009808
    %v1460 = vunpack.c.0.s8 %v1459
    %v1461 = vlaneseq
    %v1462 = vshrl.u32 %v1461, 7
    %v1463 = vsub.s32 %v1460, %v1462
    %v1464 = vrot.slane %v1450, %v1463
    %v1465 = vcombine.low %v1409, %v1425
    %v1466 = vcombine.high %v1409, %v1425
    %v1468 = vunpack.c.l.s4 1934713408
    %v1469 = vunpack.c.0.s8 %v1468
    %v1470 = vlaneseq
    %v1471 = vshrl.u32 %v1470, 7
    %v1472 = vsub.s32 %v1469, %v1471
    %v1473 = vrot.slane %v1465, %v1472
    %v1475 = vunpack.c.l.s4 1934713408
    %v1476 = vunpack.c.0.s8 %v1475
    %v1477 = vlaneseq
    %v1478 = vshrl.u32 %v1477, 7
    %v1479 = vsub.s32 %v1476, %v1478
    %v1480 = vrot.slane %v1466, %v1479
    %v1481 = vcombine.low %v1416, %v1432
    %v1482 = vcombine.high %v1416, %v1432
    %v1484 = vunpack.c.l.s4 1934713408
    %v1485 = vunpack.c.0.s8 %v1484
    %v1486 = vlaneseq
    %v1487 = vshrl.u32 %v1486, 7
    %v1488 = vsub.s32 %v1485, %v1487
    %v1489 = vrot.slane %v1481, %v1488
    %v1491 = vunpack.c.l.s4 1934713408
    %v1492 = vunpack.c.0.s8 %v1491
    %v1493 = vlaneseq
    %v1494 = vshrl.u32 %v1493, 7
    %v1495 = vsub.s32 %v1492, %v1494
    %v1496 = vrot.slane %v1482, %v1495
    %v1497 = vcombine.low %v1441, %v1457
    %v1498 = vcombine.high %v1441, %v1457
    %v1500 = vunpack.c.l.s4 1934713408
    %v1501 = vunpack.c.0.s8 %v1500
    %v1502 = vlaneseq
    %v1503 = vshrl.u32 %v1502, 7
    %v1504 = vsub.s32 %v1501, %v1503
    %v1505 = vrot.slane %v1497, %v1504
    %v1507 = vunpack.c.l.s4 1934713408
    %v1508 = vunpack.c.0.s8 %v1507
    %v1509 = vlaneseq
    %v1510 = vshrl.u32 %v1509, 7
    %v1511 = vsub.s32 %v1508, %v1510
    %v1512 = vrot.slane %v1498, %v1511
    %v1513 = vcombine.low %v1448, %v1464
    %v1514 = vcombine.high %v1448, %v1464
    %v1516 = vunpack.c.l.s4 1934713408
    %v1517 = vunpack.c.0.s8 %v1516
    %v1518 = vlaneseq
    %v1519 = vshrl.u32 %v1518, 7
    %v1520 = vsub.s32 %v1517, %v1519
    %v1521 = vrot.slane %v1513, %v1520
    %v1523 = vunpack.c.l.s4 1934713408
    %v1524 = vunpack.c.0.s8 %v1523
    %v1525 = vlaneseq
    %v1526 = vshrl.u32 %v1525, 7
    %v1527 = vsub.s32 %v1524, %v1526
    %v1528 = vrot.slane %v1514, %v1527
    %v1529 = vcombine.low %v1473, %v1505
    %v1530 = vcombine.high %v1473, %v1505
    %v1531 = vcombine.low %v1480, %v1512
    %v1532 = vcombine.high %v1480, %v1512
    %v1533 = vcombine.low %v1489, %v1521
    %v1534 = vcombine.high %v1489, %v1521
    %v1535 = vcombine.low %v1496, %v1528
    %v1536 = vcombine.high %v1496, %v1528
    %v1537 = vcombine.low %v551, %v573
    %v1538 = vcombine.high %v551, %v573
    %v1540 = vunpack.c.l.s4 1983009808
    %v1541 = vunpack.c.0.s8 %v1540
    %v1542 = vlaneseq
    %v1543 = vshrl.u32 %v1542, 7
    %v1544 = vsub.s32 %v1541, %v1543
    %v1545 = vrot.slane %v1537, %v1544
    %v1547 = vunpack.c.l.s4 1983009808
    %v1548 = vunpack.c.0.s8 %v1547
    %v1549 = vlaneseq
    %v1550 = vshrl.u32 %v1549, 7
    %v1551 = vsub.s32 %v1548, %v1550
    %v1552 = vrot.slane %v1538, %v1551
    %v1553 = vcombine.low %v562, %v584
    %v1554 = vcombine.high %v562, %v584
    %v1556 = vunpack.c.l.s4 1983009808
    %v1557 = vunpack.c.0.s8 %v1556
    %v1558 = vlaneseq
    %v1559 = vshrl.u32 %v1558, 7
    %v1560 = vsub.s32 %v1557, %v1559
    %v1561 = vrot.slane %v1553, %v1560
    %v1563 = vunpack.c.l.s4 1983009808
    %v1564 = vunpack.c.0.s8 %v1563
    %v1565 = vlaneseq
    %v1566 = vshrl.u32 %v1565, 7
    %v1567 = vsub.s32 %v1564, %v1566
    %v1568 = vrot.slane %v1554, %v1567
    %v1569 = vcombine.low %v595, %v617
    %v1570 = vcombine.high %v595, %v617
    %v1572 = vunpack.c.l.s4 1983009808
    %v1573 = vunpack.c.0.s8 %v1572
    %v1574 = vlaneseq
    %v1575 = vshrl.u32 %v1574, 7
    %v1576 = vsub.s32 %v1573, %v1575
    %v1577 = vrot.slane %v1569, %v1576
    %v1579 = vunpack.c.l.s4 1983009808
    %v1580 = vunpack.c.0.s8 %v1579
    %v1581 = vlaneseq
    %v1582 = vshrl.u32 %v1581, 7
    %v1583 = vsub.s32 %v1580, %v1582
    %v1584 = vrot.slane %v1570, %v1583
    %v1585 = vcombine.low %v606, %v628
    %v1586 = vcombine.high %v606, %v628
    %v1588 = vunpack.c.l.s4 1983009808
    %v1589 = vunpack.c.0.s8 %v1588
    %v1590 = vlaneseq
    %v1591 = vshrl.u32 %v1590, 7
    %v1592 = vsub.s32 %v1589, %v1591
    %v1593 = vrot.slane %v1585, %v1592
    %v1595 = vunpack.c.l.s4 1983009808
    %v1596 = vunpack.c.0.s8 %v1595
    %v1597 = vlaneseq
    %v1598 = vshrl.u32 %v1597, 7
    %v1599 = vsub.s32 %v1596, %v1598
    %v1600 = vrot.slane %v1586, %v1599
    %v1601 = vcombine.low %v1545, %v1561
    %v1602 = vcombine.high %v1545, %v1561
    %v1604 = vunpack.c.l.s4 1934713408
    %v1605 = vunpack.c.0.s8 %v1604
    %v1606 = vlaneseq
    %v1607 = vshrl.u32 %v1606, 7
    %v1608 = vsub.s32 %v1605, %v1607
    %v1609 = vrot.slane %v1601, %v1608
    %v1611 = vunpack.c.l.s4 1934713408
    %v1612 = vunpack.c.0.s8 %v1611
    %v1613 = vlaneseq
    %v1614 = vshrl.u32 %v1613, 7
    %v1615 = vsub.s32 %v1612, %v1614
    %v1616 = vrot.slane %v1602, %v1615
    %v1617 = vcombine.low %v1552, %v1568
    %v1618 = vcombine.high %v1552, %v1568
    %v1620 = vunpack.c.l.s4 1934713408
    %v1621 = vunpack.c.0.s8 %v1620
    %v1622 = vlaneseq
    %v1623 = vshrl.u32 %v1622, 7
    %v1624 = vsub.s32 %v1621, %v1623
    %v1625 = vrot.slane %v1617, %v1624
    %v1627 = vunpack.c.l.s4 1934713408
    %v1628 = vunpack.c.0.s8 %v1627
    %v1629 = vlaneseq
    %v1630 = vshrl.u32 %v1629, 7
    %v1631 = vsub.s32 %v1628, %v1630
    %v1632 = vrot.slane %v1618, %v1631
    %v1633 = vcombine.low %v1577, %v1593
    %v1634 = vcombine.high %v1577, %v1593
    %v1636 = vunpack.c.l.s4 1934713408
    %v1637 = vunpack.c.0.s8 %v1636
    %v1638 = vlaneseq
    %v1639 = vshrl.u32 %v1638, 7
    %v1640 = vsub.s32 %v1637, %v1639
    %v1641 = vrot.slane %v1633, %v1640
    %v1643 = vunpack.c.l.s4 1934713408
    %v1644 = vunpack.c.0.s8 %v1643
    %v1645 = vlaneseq
    %v1646 = vshrl.u32 %v1645, 7
    %v1647 = vsub.s32 %v1644, %v1646
    %v1648 = vrot.slane %v1634, %v1647
    %v1649 = vcombine.low %v1584, %v1600
    %v1650 = vcombine.high %v1584, %v1600
    %v1652 = vunpack.c.l.s4 1934713408
    %v1653 = vunpack.c.0.s8 %v1652
    %v1654 = vlaneseq
    %v1655 = vshrl.u32 %v1654, 7
    %v1656 = vsub.s32 %v1653, %v1655
    %v1657 = vrot.slane %v1649, %v1656
    %v1659 = vunpack.c.l.s4 1934713408
    %v1660 = vunpack.c.0.s8 %v1659
    %v1661 = vlaneseq
    %v1662 = vshrl.u32 %v1661, 7
    %v1663 = vsub.s32 %v1660, %v1662
    %v1664 = vrot.slane %v1650, %v1663
    %v1665 = vcombine.low %v1609, %v1641
    %v1666 = vcombine.high %v1609, %v1641
    %v1667 = vcombine.low %v1616, %v1648
    %v1668 = vcombine.high %v1616, %v1648
    %v1669 = vcombine.low %v1625, %v1657
    %v1670 = vcombine.high %v1625, %v1657
    %v1671 = vcombine.low %v1632, %v1664
    %v1672 = vcombine.high %v1632, %v1664
    %v1673 = vcombine.low %v639, %v661
    %v1674 = vcombine.high %v639, %v661
    %v1676 = vunpack.c.l.s4 1983009808
    %v1677 = vunpack.c.0.s8 %v1676
    %v1678 = vlaneseq
    %v1679 = vshrl.u32 %v1678, 7
    %v1680 = vsub.s32 %v1677, %v1679
    %v1681 = vrot.slane %v1673, %v1680
    %v1683 = vunpack.c.l.s4 1983009808
    %v1684 = vunpack.c.0.s8 %v1683
    %v1685 = vlaneseq
    %v1686 = vshrl.u32 %v1685, 7
    %v1687 = vsub.s32 %v1684, %v1686
    %v1688 = vrot.slane %v1674, %v1687
    %v1689 = vcombine.low %v650, %v672
    %v1690 = vcombine.high %v650, %v672
    %v1692 = vunpack.c.l.s4 1983009808
    %v1693 = vunpack.c.0.s8 %v1692
    %v1694 = vlaneseq
    %v1695 = vshrl.u32 %v1694, 7
    %v1696 = vsub.s32 %v1693, %v1695
    %v1697 = vrot.slane %v1689, %v1696
    %v1699 = vunpack.c.l.s4 1983009808
    %v1700 = vunpack.c.0.s8 %v1699
    %v1701 = vlaneseq
    %v1702 = vshrl.u32 %v1701, 7
    %v1703 = vsub.s32 %v1700, %v1702
    %v1704 = vrot.slane %v1690, %v1703
    %v1705 = vcombine.low %v683, %v705
    %v1706 = vcombine.high %v683, %v705
    %v1708 = vunpack.c.l.s4 1983009808
    %v1709 = vunpack.c.0.s8 %v1708
    %v1710 = vlaneseq
    %v1711 = vshrl.u32 %v1710, 7
    %v1712 = vsub.s32 %v1709, %v1711
    %v1713 = vrot.slane %v1705, %v1712
    %v1715 = vunpack.c.l.s4 1983009808
    %v1716 = vunpack.c.0.s8 %v1715
    %v1717 = vlaneseq
    %v1718 = vshrl.u32 %v1717, 7
    %v1719 = vsub.s32 %v1716, %v1718
    %v1720 = vrot.slane %v1706, %v1719
    %v1721 = vcombine.low %v694, %v716
    %v1722 = vcombine.high %v694, %v716
    %v1724 = vunpack.c.l.s4 1983009808
    %v1725 = vunpack.c.0.s8 %v1724
    %v1726 = vlaneseq
    %v1727 = vshrl.u32 %v1726, 7
    %v1728 = vsub.s32 %v1725, %v1727
    %v1729 = vrot.slane %v1721, %v1728
    %v1731 = vunpack.c.l.s4 1983009808
    %v1732 = vunpack.c.0.s8 %v1731
    %v1733 = vlaneseq
    %v1734 = vshrl.u32 %v1733, 7
    %v1735 = vsub.s32 %v1732, %v1734
    %v1736 = vrot.slane %v1722, %v1735
    %v1737 = vcombine.low %v1681, %v1697
    %v1738 = vcombine.high %v1681, %v1697
    %v1740 = vunpack.c.l.s4 1934713408
    %v1741 = vunpack.c.0.s8 %v1740
    %v1742 = vlaneseq
    %v1743 = vshrl.u32 %v1742, 7
    %v1744 = vsub.s32 %v1741, %v1743
    %v1745 = vrot.slane %v1737, %v1744
    %v1747 = vunpack.c.l.s4 1934713408
    %v1748 = vunpack.c.0.s8 %v1747
    %v1749 = vlaneseq
    %v1750 = vshrl.u32 %v1749, 7
    %v1751 = vsub.s32 %v1748, %v1750
    %v1752 = vrot.slane %v1738, %v1751
    %v1753 = vcombine.low %v1688, %v1704
    %v1754 = vcombine.high %v1688, %v1704
    %v1756 = vunpack.c.l.s4 1934713408
    %v1757 = vunpack.c.0.s8 %v1756
    %v1758 = vlaneseq
    %v1759 = vshrl.u32 %v1758, 7
    %v1760 = vsub.s32 %v1757, %v1759
    %v1761 = vrot.slane %v1753, %v1760
    %v1763 = vunpack.c.l.s4 1934713408
    %v1764 = vunpack.c.0.s8 %v1763
    %v1765 = vlaneseq
    %v1766 = vshrl.u32 %v1765, 7
    %v1767 = vsub.s32 %v1764, %v1766
    %v1768 = vrot.slane %v1754, %v1767
    %v1769 = vcombine.low %v1713, %v1729
    %v1770 = vcombine.high %v1713, %v1729
    %v1772 = vunpack.c.l.s4 1934713408
    %v1773 = vunpack.c.0.s8 %v1772
    %v1774 = vlaneseq
    %v1775 = vshrl.u32 %v1774, 7
    %v1776 = vsub.s32 %v1773, %v1775
    %v1777 = vrot.slane %v1769, %v1776
    %v1779 = vunpack.c.l.s4 1934713408
    %v1780 = vunpack.c.0.s8 %v1779
    %v1781 = vlaneseq
    %v1782 = vshrl.u32 %v1781, 7
    %v1783 = vsub.s32 %v1780, %v1782
    %v1784 = vrot.slane %v1770, %v1783
    %v1785 = vcombine.low %v1720, %v1736
    %v1786 = vcombine.high %v1720, %v1736
    %v1788 = vunpack.c.l.s4 1934713408
    %v1789 = vunpack.c.0.s8 %v1788
    %v1790 = vlaneseq
    %v1791 = vshrl.u32 %v1790, 7
    %v1792 = vsub.s32 %v1789, %v1791
    %v1793 = vrot.slane %v1785, %v1792
    %v1795 = vunpack.c.l.s4 1934713408
    %v1796 = vunpack.c.0.s8 %v1795
    %v1797 = vlaneseq
    %v1798 = vshrl.u32 %v1797, 7
    %v1799 = vsub.s32 %v1796, %v1798
    %v1800 = vrot.slane %v1786, %v1799
    %v1801 = vcombine.low %v1745, %v1777
    %v1802 = vcombine.high %v1745, %v1777
    %v1803 = vcombine.low %v1752, %v1784
    %v1804 = vcombine.high %v1752, %v1784
    %v1805 = vcombine.low %v1761, %v1793
    %v1806 = vcombine.high %v1761, %v1793
    %v1807 = vcombine.low %v1768, %v1800
    %v1808 = vcombine.high %v1768, %v1800
    %v1809 = vcombine.low %v27, %v49
    %v1810 = vcombine.high %v27, %v49
    %v1812 = vunpack.c.l.s4 1983009808
    %v1813 = vunpack.c.0.s8 %v1812
    %v1814 = vlaneseq
    %v1815 = vshrl.u32 %v1814, 7
    %v1816 = vsub.s32 %v1813, %v1815
    %v1817 = vrot.slane %v1809, %v1816
    %v1819 = vunpack.c.l.s4 1983009808
    %v1820 = vunpack.c.0.s8 %v1819
    %v1821 = vlaneseq
    %v1822 = vshrl.u32 %v1821, 7
    %v1823 = vsub.s32 %v1820, %v1822
    %v1824 = vrot.slane %v1810, %v1823
    %v1825 = vcombine.low %v38, %v60
    %v1826 = vcombine.high %v38, %v60
    %v1828 = vunpack.c.l.s4 1983009808
    %v1829 = vunpack.c.0.s8 %v1828
    %v1830 = vlaneseq
    %v1831 = vshrl.u32 %v1830, 7
    %v1832 = vsub.s32 %v1829, %v1831
    %v1833 = vrot.slane %v1825, %v1832
    %v1835 = vunpack.c.l.s4 1983009808
    %v1836 = vunpack.c.0.s8 %v1835
    %v1837 = vlaneseq
    %v1838 = vshrl.u32 %v1837, 7
    %v1839 = vsub.s32 %v1836, %v1838
    %v1840 = vrot.slane %v1826, %v1839
    %v1841 = vcombine.low %v71, %v93
    %v1842 = vcombine.high %v71, %v93
    %v1844 = vunpack.c.l.s4 1983009808
    %v1845 = vunpack.c.0.s8 %v1844
    %v1846 = vlaneseq
    %v1847 = vshrl.u32 %v1846, 7
    %v1848 = vsub.s32 %v1845, %v1847
    %v1849 = vrot.slane %v1841, %v1848
    %v1851 = vunpack.c.l.s4 1983009808
    %v1852 = vunpack.c.0.s8 %v1851
    %v1853 = vlaneseq
    %v1854 = vshrl.u32 %v1853, 7
    %v1855 = vsub.s32 %v1852, %v1854
    %v1856 = vrot.slane %v1842, %v1855
    %v1857 = vcombine.low %v82, %v104
    %v1858 = vcombine.high %v82, %v104
    %v1860 = vunpack.c.l.s4 1983009808
    %v1861 = vunpack.c.0.s8 %v1860
    %v1862 = vlaneseq
    %v1863 = vshrl.u32 %v1862, 7
    %v1864 = vsub.s32 %v1861, %v1863
    %v1865 = vrot.slane %v1857, %v1864
    %v1867 = vunpack.c.l.s4 1983009808
    %v1868 = vunpack.c.0.s8 %v1867
    %v1869 = vlaneseq
    %v1870 = vshrl.u32 %v1869, 7
    %v1871 = vsub.s32 %v1868, %v1870
    %v1872 = vrot.slane %v1858, %v1871
    %v1873 = vcombine.low %v1817, %v1833
    %v1874 = vcombine.high %v1817, %v1833
    %v1876 = vunpack.c.l.s4 1934713408
    %v1877 = vunpack.c.0.s8 %v1876
    %v1878 = vlaneseq
    %v1879 = vshrl.u32 %v1878, 7
    %v1880 = vsub.s32 %v1877, %v1879
    %v1881 = vrot.slane %v1873, %v1880
    %v1883 = vunpack.c.l.s4 1934713408
    %v1884 = vunpack.c.0.s8 %v1883
    %v1885 = vlaneseq
    %v1886 = vshrl.u32 %v1885, 7
    %v1887 = vsub.s32 %v1884, %v1886
    %v1888 = vrot.slane %v1874, %v1887
    %v1889 = vcombine.low %v1824, %v1840
    %v1890 = vcombine.high %v1824, %v1840
    %v1892 = vunpack.c.l.s4 1934713408
    %v1893 = vunpack.c.0.s8 %v1892
    %v1894 = vlaneseq
    %v1895 = vshrl.u32 %v1894, 7
    %v1896 = vsub.s32 %v1893, %v1895
    %v1897 = vrot.slane %v1889, %v1896
    %v1899 = vunpack.c.l.s4 1934713408
    %v1900 = vunpack.c.0.s8 %v1899
    %v1901 = vlaneseq
    %v1902 = vshrl.u32 %v1901, 7
    %v1903 = vsub.s32 %v1900, %v1902
    %v1904 = vrot.slane %v1890, %v1903
    %v1905 = vcombine.low %v1849, %v1865
    %v1906 = vcombine.high %v1849, %v1865
    %v1908 = vunpack.c.l.s4 1934713408
    %v1909 = vunpack.c.0.s8 %v1908
    %v1910 = vlaneseq
    %v1911 = vshrl.u32 %v1910, 7
    %v1912 = vsub.s32 %v1909, %v1911
    %v1913 = vrot.slane %v1905, %v1912
    %v1915 = vunpack.c.l.s4 1934713408
    %v1916 = vunpack.c.0.s8 %v1915
    %v1917 = vlaneseq
    %v1918 = vshrl.u32 %v1917, 7
    %v1919 = vsub.s32 %v1916, %v1918
    %v1920 = vrot.slane %v1906, %v1919
    %v1921 = vcombine.low %v1856, %v1872
    %v1922 = vcombine.high %v1856, %v1872
    %v1924 = vunpack.c.l.s4 1934713408
    %v1925 = vunpack.c.0.s8 %v1924
    %v1926 = vlaneseq
    %v1927 = vshrl.u32 %v1926, 7
    %v1928 = vsub.s32 %v1925, %v1927
    %v1929 = vrot.slane %v1921, %v1928
    %v1931 = vunpack.c.l.s4 1934713408
    %v1932 = vunpack.c.0.s8 %v1931
    %v1933 = vlaneseq
    %v1934 = vshrl.u32 %v1933, 7
    %v1935 = vsub.s32 %v1932, %v1934
    %v1936 = vrot.slane %v1922, %v1935
    %v1937 = vcombine.low %v1881, %v1913
    %v1938 = vcombine.high %v1881, %v1913
    %v1939 = vcombine.low %v1888, %v1920
    %v1940 = vcombine.high %v1888, %v1920
    %v1941 = vcombine.low %v1897, %v1929
    %v1942 = vcombine.high %v1897, %v1929
    %v1943 = vcombine.low %v1904, %v1936
    %v1944 = vcombine.high %v1904, %v1936
    %v1945 = vcombine.low %v115, %v137
    %v1946 = vcombine.high %v115, %v137
    %v1948 = vunpack.c.l.s4 1983009808
    %v1949 = vunpack.c.0.s8 %v1948
    %v1950 = vlaneseq
    %v1951 = vshrl.u32 %v1950, 7
    %v1952 = vsub.s32 %v1949, %v1951
    %v1953 = vrot.slane %v1945, %v1952
    %v1955 = vunpack.c.l.s4 1983009808
    %v1956 = vunpack.c.0.s8 %v1955
    %v1957 = vlaneseq
    %v1958 = vshrl.u32 %v1957, 7
    %v1959 = vsub.s32 %v1956, %v1958
    %v1960 = vrot.slane %v1946, %v1959
    %v1961 = vcombine.low %v126, %v148
    %v1962 = vcombine.high %v126, %v148
    %v1964 = vunpack.c.l.s4 1983009808
    %v1965 = vunpack.c.0.s8 %v1964
    %v1966 = vlaneseq
    %v1967 = vshrl.u32 %v1966, 7
    %v1968 = vsub.s32 %v1965, %v1967
    %v1969 = vrot.slane %v1961, %v1968
    %v1971 = vunpack.c.l.s4 1983009808
    %v1972 = vunpack.c.0.s8 %v1971
    %v1973 = vlaneseq
    %v1974 = vshrl.u32 %v1973, 7
    %v1975 = vsub.s32 %v1972, %v1974
    %v1976 = vrot.slane %v1962, %v1975
    %v1977 = vcombine.low %v159, %v181
    %v1978 = vcombine.high %v159, %v181
    %v1980 = vunpack.c.l.s4 1983009808
    %v1981 = vunpack.c.0.s8 %v1980
    %v1982 = vlaneseq
    %v1983 = vshrl.u32 %v1982, 7
    %v1984 = vsub.s32 %v1981, %v1983
    %v1985 = vrot.slane %v1977, %v1984
    %v1987 = vunpack.c.l.s4 1983009808
    %v1988 = vunpack.c.0.s8 %v1987
    %v1989 = vlaneseq
    %v1990 = vshrl.u32 %v1989, 7
    %v1991 = vsub.s32 %v1988, %v1990
    %v1992 = vrot.slane %v1978, %v1991
    %v1993 = vcombine.low %v170, %v192
    %v1994 = vcombine.high %v170, %v192
    %v1996 = vunpack.c.l.s4 1983009808
    %v1997 = vunpack.c.0.s8 %v1996
    %v1998 = vlaneseq
    %v1999 = vshrl.u32 %v1998, 7
    %v2000 = vsub.s32 %v1997, %v1999
    %v2001 = vrot.slane %v1993, %v2000
    %v2003 = vunpack.c.l.s4 1983009808
    %v2004 = vunpack.c.0.s8 %v2003
    %v2005 = vlaneseq
    %v2006 = vshrl.u32 %v2005, 7
    %v2007 = vsub.s32 %v2004, %v2006
    %v2008 = vrot.slane %v1994, %v2007
    %v2009 = vcombine.low %v1953, %v1969
    %v2010 = vcombine.high %v1953, %v1969
    %v2012 = vunpack.c.l.s4 1934713408
    %v2013 = vunpack.c.0.s8 %v2012
    %v2014 = vlaneseq
    %v2015 = vshrl.u32 %v2014, 7
    %v2016 = vsub.s32 %v2013, %v2015
    %v2017 = vrot.slane %v2009, %v2016
    %v2019 = vunpack.c.l.s4 1934713408
    %v2020 = vunpack.c.0.s8 %v2019
    %v2021 = vlaneseq
    %v2022 = vshrl.u32 %v2021, 7
    %v2023 = vsub.s32 %v2020, %v2022
    %v2024 = vrot.slane %v2010, %v2023
    %v2025 = vcombine.low %v1960, %v1976
    %v2026 = vcombine.high %v1960, %v1976
    %v2028 = vunpack.c.l.s4 1934713408
    %v2029 = vunpack.c.0.s8 %v2028
    %v2030 = vlaneseq
    %v2031 = vshrl.u32 %v2030, 7
    %v2032 = vsub.s32 %v2029, %v2031
    %v2033 = vrot.slane %v2025, %v2032
    %v2035 = vunpack.c.l.s4 1934713408
    %v2036 = vunpack.c.0.s8 %v2035
    %v2037 = vlaneseq
    %v2038 = vshrl.u32 %v2037, 7
    %v2039 = vsub.s32 %v2036, %v2038
    %v2040 = vrot.slane %v2026, %v2039
    %v2041 = vcombine.low %v1985, %v2001
    %v2042 = vcombine.high %v1985, %v2001
    %v2044 = vunpack.c.l.s4 1934713408
    %v2045 = vunpack.c.0.s8 %v2044
    %v2046 = vlaneseq
    %v2047 = vshrl.u32 %v2046, 7
    %v2048 = vsub.s32 %v2045, %v2047
    %v2049 = vrot.slane %v2041, %v2048
    %v2051 = vunpack.c.l.s4 1934713408
    %v2052 = vunpack.c.0.s8 %v2051
    %v2053 = vlaneseq
    %v2054 = vshrl.u32 %v2053, 7
    %v2055 = vsub.s32 %v2052, %v2054
    %v2056 = vrot.slane %v2042, %v2055
    %v2057 = vcombine.low %v1992, %v2008
    %v2058 = vcombine.high %v1992, %v2008
    %v2060 = vunpack.c.l.s4 1934713408
    %v2061 = vunpack.c.0.s8 %v2060
    %v2062 = vlaneseq
    %v2063 = vshrl.u32 %v2062, 7
    %v2064 = vsub.s32 %v2061, %v2063
    %v2065 = vrot.slane %v2057, %v2064
    %v2067 = vunpack.c.l.s4 1934713408
    %v2068 = vunpack.c.0.s8 %v2067
    %v2069 = vlaneseq
    %v2070 = vshrl.u32 %v2069, 7
    %v2071 = vsub.s32 %v2068, %v2070
    %v2072 = vrot.slane %v2058, %v2071
    %v2073 = vcombine.low %v2017, %v2049
    %v2074 = vcombine.high %v2017, %v2049
    %v2075 = vcombine.low %v2024, %v2056
    %v2076 = vcombine.high %v2024, %v2056
    %v2077 = vcombine.low %v2033, %v2065
    %v2078 = vcombine.high %v2033, %v2065
    %v2079 = vcombine.low %v2040, %v2072
    %v2080 = vcombine.high %v2040, %v2072
    %v2081 = vcombine.low %v203, %v225
    %v2082 = vcombine.high %v203, %v225
    %v2084 = vunpack.c.l.s4 1983009808
    %v2085 = vunpack.c.0.s8 %v2084
    %v2086 = vlaneseq
    %v2087 = vshrl.u32 %v2086, 7
    %v2088 = vsub.s32 %v2085, %v2087
    %v2089 = vrot.slane %v2081, %v2088
    %v2091 = vunpack.c.l.s4 1983009808
    %v2092 = vunpack.c.0.s8 %v2091
    %v2093 = vlaneseq
    %v2094 = vshrl.u32 %v2093, 7
    %v2095 = vsub.s32 %v2092, %v2094
    %v2096 = vrot.slane %v2082, %v2095
    %v2097 = vcombine.low %v214, %v236
    %v2098 = vcombine.high %v214, %v236
    %v2100 = vunpack.c.l.s4 1983009808
    %v2101 = vunpack.c.0.s8 %v2100
    %v2102 = vlaneseq
    %v2103 = vshrl.u32 %v2102, 7
    %v2104 = vsub.s32 %v2101, %v2103
    %v2105 = vrot.slane %v2097, %v2104
    %v2107 = vunpack.c.l.s4 1983009808
    %v2108 = vunpack.c.0.s8 %v2107
    %v2109 = vlaneseq
    %v2110 = vshrl.u32 %v2109, 7
    %v2111 = vsub.s32 %v2108, %v2110
    %v2112 = vrot.slane %v2098, %v2111
    %v2113 = vcombine.low %v247, %v269
    %v2114 = vcombine.high %v247, %v269
    %v2116 = vunpack.c.l.s4 1983009808
    %v2117 = vunpack.c.0.s8 %v2116
    %v2118 = vlaneseq
    %v2119 = vshrl.u32 %v2118, 7
    %v2120 = vsub.s32 %v2117, %v2119
    %v2121 = vrot.slane %v2113, %v2120
    %v2123 = vunpack.c.l.s4 1983009808
    %v2124 = vunpack.c.0.s8 %v2123
    %v2125 = vlaneseq
    %v2126 = vshrl.u32 %v2125, 7
    %v2127 = vsub.s32 %v2124, %v2126
    %v2128 = vrot.slane %v2114, %v2127
    %v2129 = vcombine.low %v258, %v280
    %v2130 = vcombine.high %v258, %v280
    %v2132 = vunpack.c.l.s4 1983009808
    %v2133 = vunpack.c.0.s8 %v2132
    %v2134 = vlaneseq
    %v2135 = vshrl.u32 %v2134, 7
    %v2136 = vsub.s32 %v2133, %v2135
    %v2137 = vrot.slane %v2129, %v2136
    %v2139 = vunpack.c.l.s4 1983009808
    %v2140 = vunpack.c.0.s8 %v2139
    %v2141 = vlaneseq
    %v2142 = vshrl.u32 %v2141, 7
    %v2143 = vsub.s32 %v2140, %v2142
    %v2144 = vrot.slane %v2130, %v2143
    %v2145 = vcombine.low %v2089, %v2105
    %v2146 = vcombine.high %v2089, %v2105
    %v2148 = vunpack.c.l.s4 1934713408
    %v2149 = vunpack.c.0.s8 %v2148
    %v2150 = vlaneseq
    %v2151 = vshrl.u32 %v2150, 7
    %v2152 = vsub.s32 %v2149, %v2151
    %v2153 = vrot.slane %v2145, %v2152
    %v2155 = vunpack.c.l.s4 1934713408
    %v2156 = vunpack.c.0.s8 %v2155
    %v2157 = vlaneseq
    %v2158 = vshrl.u32 %v2157, 7
    %v2159 = vsub.s32 %v2156, %v2158
    %v2160 = vrot.slane %v2146, %v2159
    %v2161 = vcombine.low %v2096, %v2112
    %v2162 = vcombine.high %v2096, %v2112
    %v2164 = vunpack.c.l.s4 1934713408
    %v2165 = vunpack.c.0.s8 %v2164
    %v2166 = vlaneseq
    %v2167 = vshrl.u32 %v2166, 7
    %v2168 = vsub.s32 %v2165, %v2167
    %v2169 = vrot.slane %v2161, %v2168
    %v2171 = vunpack.c.l.s4 1934713408
    %v2172 = vunpack.c.0.s8 %v2171
    %v2173 = vlaneseq
    %v2174 = vshrl.u32 %v2173, 7
    %v2175 = vsub.s32 %v2172, %v2174
    %v2176 = vrot.slane %v2162, %v2175
    %v2177 = vcombine.low %v2121, %v2137
    %v2178 = vcombine.high %v2121, %v2137
    %v2180 = vunpack.c.l.s4 1934713408
    %v2181 = vunpack.c.0.s8 %v2180
    %v2182 = vlaneseq
    %v2183 = vshrl.u32 %v2182, 7
    %v2184 = vsub.s32 %v2181, %v2183
    %v2185 = vrot.slane %v2177, %v2184
    %v2187 = vunpack.c.l.s4 1934713408
    %v2188 = vunpack.c.0.s8 %v2187
    %v2189 = vlaneseq
    %v2190 = vshrl.u32 %v2189, 7
    %v2191 = vsub.s32 %v2188, %v2190
    %v2192 = vrot.slane %v2178, %v2191
    %v2193 = vcombine.low %v2128, %v2144
    %v2194 = vcombine.high %v2128, %v2144
    %v2196 = vunpack.c.l.s4 1934713408
    %v2197 = vunpack.c.0.s8 %v2196
    %v2198 = vlaneseq
    %v2199 = vshrl.u32 %v2198, 7
    %v2200 = vsub.s32 %v2197, %v2199
    %v2201 = vrot.slane %v2193, %v2200
    %v2203 = vunpack.c.l.s4 1934713408
    %v2204 = vunpack.c.0.s8 %v2203
    %v2205 = vlaneseq
    %v2206 = vshrl.u32 %v2205, 7
    %v2207 = vsub.s32 %v2204, %v2206
    %v2208 = vrot.slane %v2194, %v2207
    %v2209 = vcombine.low %v2153, %v2185
    %v2210 = vcombine.high %v2153, %v2185
    %v2211 = vcombine.low %v2160, %v2192
    %v2212 = vcombine.high %v2160, %v2192
    %v2213 = vcombine.low %v2169, %v2201
    %v2214 = vcombine.high %v2169, %v2201
    %v2215 = vcombine.low %v2176, %v2208
    %v2216 = vcombine.high %v2176, %v2208
    %v2217 = vcombine.low %v291, %v313
    %v2218 = vcombine.high %v291, %v313
    %v2220 = vunpack.c.l.s4 1983009808
    %v2221 = vunpack.c.0.s8 %v2220
    %v2222 = vlaneseq
    %v2223 = vshrl.u32 %v2222, 7
    %v2224 = vsub.s32 %v2221, %v2223
    %v2225 = vrot.slane %v2217, %v2224
    %v2227 = vunpack.c.l.s4 1983009808
    %v2228 = vunpack.c.0.s8 %v2227
    %v2229 = vlaneseq
    %v2230 = vshrl.u32 %v2229, 7
    %v2231 = vsub.s32 %v2228, %v2230
    %v2232 = vrot.slane %v2218, %v2231
    %v2233 = vcombine.low %v302, %v324
    %v2234 = vcombine.high %v302, %v324
    %v2236 = vunpack.c.l.s4 1983009808
    %v2237 = vunpack.c.0.s8 %v2236
    %v2238 = vlaneseq
    %v2239 = vshrl.u32 %v2238, 7
    %v2240 = vsub.s32 %v2237, %v2239
    %v2241 = vrot.slane %v2233, %v2240
    %v2243 = vunpack.c.l.s4 1983009808
    %v2244 = vunpack.c.0.s8 %v2243
    %v2245 = vlaneseq
    %v2246 = vshrl.u32 %v2245, 7
    %v2247 = vsub.s32 %v2244, %v2246
    %v2248 = vrot.slane %v2234, %v2247
    %v2249 = vcombine.low %v335, %v357
    %v2250 = vcombine.high %v335, %v357
    %v2252 = vunpack.c.l.s4 1983009808
    %v2253 = vunpack.c.0.s8 %v2252
    %v2254 = vlaneseq
    %v2255 = vshrl.u32 %v2254, 7
    %v2256 = vsub.s32 %v2253, %v2255
    %v2257 = vrot.slane %v2249, %v2256
    %v2259 = vunpack.c.l.s4 1983009808
    %v2260 = vunpack.c.0.s8 %v2259
    %v2261 = vlaneseq
    %v2262 = vshrl.u32 %v2261, 7
    %v2263 = vsub.s32 %v2260, %v2262
    %v2264 = vrot.slane %v2250, %v2263
    %v2265 = vcombine.low %v346, %v368
    %v2266 = vcombine.high %v346, %v368
    %v2268 = vunpack.c.l.s4 1983009808
    %v2269 = vunpack.c.0.s8 %v2268
    %v2270 = vlaneseq
    %v2271 = vshrl.u32 %v2270, 7
    %v2272 = vsub.s32 %v2269, %v2271
    %v2273 = vrot.slane %v2265, %v2272
    %v2275 = vunpack.c.l.s4 1983009808
    %v2276 = vunpack.c.0.s8 %v2275
    %v2277 = vlaneseq
    %v2278 = vshrl.u32 %v2277, 7
    %v2279 = vsub.s32 %v2276, %v2278
    %v2280 = vrot.slane %v2266, %v2279
    %v2281 = vcombine.low %v2225, %v2241
    %v2282 = vcombine.high %v2225, %v2241
    %v2284 = vunpack.c.l.s4 1934713408
    %v2285 = vunpack.c.0.s8 %v2284
    %v2286 = vlaneseq
    %v2287 = vshrl.u32 %v2286, 7
    %v2288 = vsub.s32 %v2285, %v2287
    %v2289 = vrot.slane %v2281, %v2288
    %v2291 = vunpack.c.l.s4 1934713408
    %v2292 = vunpack.c.0.s8 %v2291
    %v2293 = vlaneseq
    %v2294 = vshrl.u32 %v2293, 7
    %v2295 = vsub.s32 %v2292, %v2294
    %v2296 = vrot.slane %v2282, %v2295
    %v2297 = vcombine.low %v2232, %v2248
    %v2298 = vcombine.high %v2232, %v2248
    %v2300 = vunpack.c.l.s4 1934713408
    %v2301 = vunpack.c.0.s8 %v2300
    %v2302 = vlaneseq
    %v2303 = vshrl.u32 %v2302, 7
    %v2304 = vsub.s32 %v2301, %v2303
    %v2305 = vrot.slane %v2297, %v2304
    %v2307 = vunpack.c.l.s4 1934713408
    %v2308 = vunpack.c.0.s8 %v2307
    %v2309 = vlaneseq
    %v2310 = vshrl.u32 %v2309, 7
    %v2311 = vsub.s32 %v2308, %v2310
    %v2312 = vrot.slane %v2298, %v2311
    %v2313 = vcombine.low %v2257, %v2273
    %v2314 = vcombine.high %v2257, %v2273
    %v2316 = vunpack.c.l.s4 1934713408
    %v2317 = vunpack.c.0.s8 %v2316
    %v2318 = vlaneseq
    %v2319 = vshrl.u32 %v2318, 7
    %v2320 = vsub.s32 %v2317, %v2319
    %v2321 = vrot.slane %v2313, %v2320
    %v2323 = vunpack.c.l.s4 1934713408
    %v2324 = vunpack.c.0.s8 %v2323
    %v2325 = vlaneseq
    %v2326 = vshrl.u32 %v2325, 7
    %v2327 = vsub.s32 %v2324, %v2326
    %v2328 = vrot.slane %v2314, %v2327
    %v2329 = vcombine.low %v2264, %v2280
    %v2330 = vcombine.high %v2264, %v2280
    %v2332 = vunpack.c.l.s4 1934713408
    %v2333 = vunpack.c.0.s8 %v2332
    %v2334 = vlaneseq
    %v2335 = vshrl.u32 %v2334, 7
    %v2336 = vsub.s32 %v2333, %v2335
    %v2337 = vrot.slane %v2329, %v2336
    %v2339 = vunpack.c.l.s4 1934713408
    %v2340 = vunpack.c.0.s8 %v2339
    %v2341 = vlaneseq
    %v2342 = vshrl.u32 %v2341, 7
    %v2343 = vsub.s32 %v2340, %v2342
    %v2344 = vrot.slane %v2330, %v2343
    %v2345 = vcombine.low %v2289, %v2321
    %v2346 = vcombine.high %v2289, %v2321
    %v2347 = vcombine.low %v2296, %v2328
    %v2348 = vcombine.high %v2296, %v2328
    %v2349 = vcombine.low %v2305, %v2337
    %v2350 = vcombine.high %v2305, %v2337
    %v2351 = vcombine.low %v2312, %v2344
    %v2352 = vcombine.high %v2312, %v2344
    %v2353 = vcombine.low %v379, %v401
    %v2354 = vcombine.high %v379, %v401
    %v2356 = vunpack.c.l.s4 1983009808
    %v2357 = vunpack.c.0.s8 %v2356
    %v2358 = vlaneseq
    %v2359 = vshrl.u32 %v2358, 7
    %v2360 = vsub.s32 %v2357, %v2359
    %v2361 = vrot.slane %v2353, %v2360
    %v2363 = vunpack.c.l.s4 1983009808
    %v2364 = vunpack.c.0.s8 %v2363
    %v2365 = vlaneseq
    %v2366 = vshrl.u32 %v2365, 7
    %v2367 = vsub.s32 %v2364, %v2366
    %v2368 = vrot.slane %v2354, %v2367
    %v2369 = vcombine.low %v390, %v412
    %v2370 = vcombine.high %v390, %v412
    %v2372 = vunpack.c.l.s4 1983009808
    %v2373 = vunpack.c.0.s8 %v2372
    %v2374 = vlaneseq
    %v2375 = vshrl.u32 %v2374, 7
    %v2376 = vsub.s32 %v2373, %v2375
    %v2377 = vrot.slane %v2369, %v2376
    %v2379 = vunpack.c.l.s4 1983009808
    %v2380 = vunpack.c.0.s8 %v2379
    %v2381 = vlaneseq
    %v2382 = vshrl.u32 %v2381, 7
    %v2383 = vsub.s32 %v2380, %v2382
    %v2384 = vrot.slane %v2370, %v2383
    %v2385 = vcombine.low %v423, %v445
    %v2386 = vcombine.high %v423, %v445
    %v2388 = vunpack.c.l.s4 1983009808
    %v2389 = vunpack.c.0.s8 %v2388
    %v2390 = vlaneseq
    %v2391 = vshrl.u32 %v2390, 7
    %v2392 = vsub.s32 %v2389, %v2391
    %v2393 = vrot.slane %v2385, %v2392
    %v2395 = vunpack.c.l.s4 1983009808
    %v2396 = vunpack.c.0.s8 %v2395
    %v2397 = vlaneseq
    %v2398 = vshrl.u32 %v2397, 7
    %v2399 = vsub.s32 %v2396, %v2398
    %v2400 = vrot.slane %v2386, %v2399
    %v2401 = vcombine.low %v434, %v456
    %v2402 = vcombine.high %v434, %v456
    %v2404 = vunpack.c.l.s4 1983009808
    %v2405 = vunpack.c.0.s8 %v2404
    %v2406 = vlaneseq
    %v2407 = vshrl.u32 %v2406, 7
    %v2408 = vsub.s32 %v2405, %v2407
    %v2409 = vrot.slane %v2401, %v2408
    %v2411 = vunpack.c.l.s4 1983009808
    %v2412 = vunpack.c.0.s8 %v2411
    %v2413 = vlaneseq
    %v2414 = vshrl.u32 %v2413, 7
    %v2415 = vsub.s32 %v2412, %v2414
    %v2416 = vrot.slane %v2402, %v2415
    %v2417 = vcombine.low %v2361, %v2377
    %v2418 = vcombine.high %v2361, %v2377
    %v2420 = vunpack.c.l.s4 1934713408
    %v2421 = vunpack.c.0.s8 %v2420
    %v2422 = vlaneseq
    %v2423 = vshrl.u32 %v2422, 7
    %v2424 = vsub.s32 %v2421, %v2423
    %v2425 = vrot.slane %v2417, %v2424
    %v2427 = vunpack.c.l.s4 1934713408
    %v2428 = vunpack.c.0.s8 %v2427
    %v2429 = vlaneseq
    %v2430 = vshrl.u32 %v2429, 7
    %v2431 = vsub.s32 %v2428, %v2430
    %v2432 = vrot.slane %v2418, %v2431
    %v2433 = vcombine.low %v2368, %v2384
    %v2434 = vcombine.high %v2368, %v2384
    %v2436 = vunpack.c.l.s4 1934713408
    %v2437 = vunpack.c.0.s8 %v2436
    %v2438 = vlaneseq
    %v2439 = vshrl.u32 %v2438, 7
    %v2440 = vsub.s32 %v2437, %v2439
    %v2441 = vrot.slane %v2433, %v2440
    %v2443 = vunpack.c.l.s4 1934713408
    %v2444 = vunpack.c.0.s8 %v2443
    %v2445 = vlaneseq
    %v2446 = vshrl.u32 %v2445, 7
    %v2447 = vsub.s32 %v2444, %v2446
    %v2448 = vrot.slane %v2434, %v2447
    %v2449 = vcombine.low %v2393, %v2409
    %v2450 = vcombine.high %v2393, %v2409
    %v2452 = vunpack.c.l.s4 1934713408
    %v2453 = vunpack.c.0.s8 %v2452
    %v2454 = vlaneseq
    %v2455 = vshrl.u32 %v2454, 7
    %v2456 = vsub.s32 %v2453, %v2455
    %v2457 = vrot.slane %v2449, %v2456
    %v2459 = vunpack.c.l.s4 1934713408
    %v2460 = vunpack.c.0.s8 %v2459
    %v2461 = vlaneseq
    %v2462 = vshrl.u32 %v2461, 7
    %v2463 = vsub.s32 %v2460, %v2462
    %v2464 = vrot.slane %v2450, %v2463
    %v2465 = vcombine.low %v2400, %v2416
    %v2466 = vcombine.high %v2400, %v2416
    %v2468 = vunpack.c.l.s4 1934713408
    %v2469 = vunpack.c.0.s8 %v2468
    %v2470 = vlaneseq
    %v2471 = vshrl.u32 %v2470, 7
    %v2472 = vsub.s32 %v2469, %v2471
    %v2473 = vrot.slane %v2465, %v2472
    %v2475 = vunpack.c.l.s4 1934713408
    %v2476 = vunpack.c.0.s8 %v2475
    %v2477 = vlaneseq
    %v2478 = vshrl.u32 %v2477, 7
    %v2479 = vsub.s32 %v2476, %v2478
    %v2480 = vrot.slane %v2466, %v2479
    %v2481 = vcombine.low %v2425, %v2457
    %v2482 = vcombine.high %v2425, %v2457
    %v2483 = vcombine.low %v2432, %v2464
    %v2484 = vcombine.high %v2432, %v2464
    %v2485 = vcombine.low %v2441, %v2473
    %v2486 = vcombine.high %v2441, %v2473
    %v2487 = vcombine.low %v2448, %v2480
    %v2488 = vcombine.high %v2448, %v2480
    %v2489 = vcombine.low %v467, %v489
    %v2490 = vcombine.high %v467, %v489
    %v2492 = vunpack.c.l.s4 1983009808
    %v2493 = vunpack.c.0.s8 %v2492
    %v2494 = vlaneseq
    %v2495 = vshrl.u32 %v2494, 7
    %v2496 = vsub.s32 %v2493, %v2495
    %v2497 = vrot.slane %v2489, %v2496
    %v2499 = vunpack.c.l.s4 1983009808
    %v2500 = vunpack.c.0.s8 %v2499
    %v2501 = vlaneseq
    %v2502 = vshrl.u32 %v2501, 7
    %v2503 = vsub.s32 %v2500, %v2502
    %v2504 = vrot.slane %v2490, %v2503
    %v2505 = vcombine.low %v478, %v500
    %v2506 = vcombine.high %v478, %v500
    %v2508 = vunpack.c.l.s4 1983009808
    %v2509 = vunpack.c.0.s8 %v2508
    %v2510 = vlaneseq
    %v2511 = vshrl.u32 %v2510, 7
    %v2512 = vsub.s32 %v2509, %v2511
    %v2513 = vrot.slane %v2505, %v2512
    %v2515 = vunpack.c.l.s4 1983009808
    %v2516 = vunpack.c.0.s8 %v2515
    %v2517 = vlaneseq
    %v2518 = vshrl.u32 %v2517, 7
    %v2519 = vsub.s32 %v2516, %v2518
    %v2520 = vrot.slane %v2506, %v2519
    %v2521 = vcombine.low %v511, %v533
    %v2522 = vcombine.high %v511, %v533
    %v2524 = vunpack.c.l.s4 1983009808
    %v2525 = vunpack.c.0.s8 %v2524
    %v2526 = vlaneseq
    %v2527 = vshrl.u32 %v2526, 7
    %v2528 = vsub.s32 %v2525, %v2527
    %v2529 = vrot.slane %v2521, %v2528
    %v2531 = vunpack.c.l.s4 1983009808
    %v2532 = vunpack.c.0.s8 %v2531
    %v2533 = vlaneseq
    %v2534 = vshrl.u32 %v2533, 7
    %v2535 = vsub.s32 %v2532, %v2534
    %v2536 = vrot.slane %v2522, %v2535
    %v2537 = vcombine.low %v522, %v544
    %v2538 = vcombine.high %v522, %v544
    %v2540 = vunpack.c.l.s4 1983009808
    %v2541 = vunpack.c.0.s8 %v2540
    %v2542 = vlaneseq
    %v2543 = vshrl.u32 %v2542, 7
    %v2544 = vsub.s32 %v2541, %v2543
    %v2545 = vrot.slane %v2537, %v2544
    %v2547 = vunpack.c.l.s4 1983009808
    %v2548 = vunpack.c.0.s8 %v2547
    %v2549 = vlaneseq
    %v2550 = vshrl.u32 %v2549, 7
    %v2551 = vsub.s32 %v2548, %v2550
    %v2552 = vrot.slane %v2538, %v2551
    %v2553 = vcombine.low %v2497, %v2513
    %v2554 = vcombine.high %v2497, %v2513
    %v2556 = vunpack.c.l.s4 1934713408
    %v2557 = vunpack.c.0.s8 %v2556
    %v2558 = vlaneseq
    %v2559 = vshrl.u32 %v2558, 7
    %v2560 = vsub.s32 %v2557, %v2559
    %v2561 = vrot.slane %v2553, %v2560
    %v2563 = vunpack.c.l.s4 1934713408
    %v2564 = vunpack.c.0.s8 %v2563
    %v2565 = vlaneseq
    %v2566 = vshrl.u32 %v2565, 7
    %v2567 = vsub.s32 %v2564, %v2566
    %v2568 = vrot.slane %v2554, %v2567
    %v2569 = vcombine.low %v2504, %v2520
    %v2570 = vcombine.high %v2504, %v2520
    %v2572 = vunpack.c.l.s4 1934713408
    %v2573 = vunpack.c.0.s8 %v2572
    %v2574 = vlaneseq
    %v2575 = vshrl.u32 %v2574, 7
    %v2576 = vsub.s32 %v2573, %v2575
    %v2577 = vrot.slane %v2569, %v2576
    %v2579 = vunpack.c.l.s4 1934713408
    %v2580 = vunpack.c.0.s8 %v2579
    %v2581 = vlaneseq
    %v2582 = vshrl.u32 %v2581, 7
    %v2583 = vsub.s32 %v2580, %v2582
    %v2584 = vrot.slane %v2570, %v2583
    %v2585 = vcombine.low %v2529, %v2545
    %v2586 = vcombine.high %v2529, %v2545
    %v2588 = vunpack.c.l.s4 1934713408
    %v2589 = vunpack.c.0.s8 %v2588
    %v2590 = vlaneseq
    %v2591 = vshrl.u32 %v2590, 7
    %v2592 = vsub.s32 %v2589, %v2591
    %v2593 = vrot.slane %v2585, %v2592
    %v2595 = vunpack.c.l.s4 1934713408
    %v2596 = vunpack.c.0.s8 %v2595
    %v2597 = vlaneseq
    %v2598 = vshrl.u32 %v2597, 7
    %v2599 = vsub.s32 %v2596, %v2598
    %v2600 = vrot.slane %v2586, %v2599
    %v2601 = vcombine.low %v2536, %v2552
    %v2602 = vcombine.high %v2536, %v2552
    %v2604 = vunpack.c.l.s4 1934713408
    %v2605 = vunpack.c.0.s8 %v2604
    %v2606 = vlaneseq
    %v2607 = vshrl.u32 %v2606, 7
    %v2608 = vsub.s32 %v2605, %v2607
    %v2609 = vrot.slane %v2601, %v2608
    %v2611 = vunpack.c.l.s4 1934713408
    %v2612 = vunpack.c.0.s8 %v2611
    %v2613 = vlaneseq
    %v2614 = vshrl.u32 %v2613, 7
    %v2615 = vsub.s32 %v2612, %v2614
    %v2616 = vrot.slane %v2602, %v2615
    %v2617 = vcombine.low %v2561, %v2593
    %v2618 = vcombine.high %v2561, %v2593
    %v2619 = vcombine.low %v2568, %v2600
    %v2620 = vcombine.high %v2568, %v2600
    %v2621 = vcombine.low %v2577, %v2609
    %v2622 = vcombine.high %v2577, %v2609
    %v2623 = vcombine.low %v2584, %v2616
    %v2624 = vcombine.high %v2584, %v2616
    %v2625 = vcombine.low %v555, %v577
    %v2626 = vcombine.high %v555, %v577
    %v2628 = vunpack.c.l.s4 1983009808
    %v2629 = vunpack.c.0.s8 %v2628
    %v2630 = vlaneseq
    %v2631 = vshrl.u32 %v2630, 7
    %v2632 = vsub.s32 %v2629, %v2631
    %v2633 = vrot.slane %v2625, %v2632
    %v2635 = vunpack.c.l.s4 1983009808
    %v2636 = vunpack.c.0.s8 %v2635
    %v2637 = vlaneseq
    %v2638 = vshrl.u32 %v2637, 7
    %v2639 = vsub.s32 %v2636, %v2638
    %v2640 = vrot.slane %v2626, %v2639
    %v2641 = vcombine.low %v566, %v588
    %v2642 = vcombine.high %v566, %v588
    %v2644 = vunpack.c.l.s4 1983009808
    %v2645 = vunpack.c.0.s8 %v2644
    %v2646 = vlaneseq
    %v2647 = vshrl.u32 %v2646, 7
    %v2648 = vsub.s32 %v2645, %v2647
    %v2649 = vrot.slane %v2641, %v2648
    %v2651 = vunpack.c.l.s4 1983009808
    %v2652 = vunpack.c.0.s8 %v2651
    %v2653 = vlaneseq
    %v2654 = vshrl.u32 %v2653, 7
    %v2655 = vsub.s32 %v2652, %v2654
    %v2656 = vrot.slane %v2642, %v2655
    %v2657 = vcombine.low %v599, %v621
    %v2658 = vcombine.high %v599, %v621
    %v2660 = vunpack.c.l.s4 1983009808
    %v2661 = vunpack.c.0.s8 %v2660
    %v2662 = vlaneseq
    %v2663 = vshrl.u32 %v2662, 7
    %v2664 = vsub.s32 %v2661, %v2663
    %v2665 = vrot.slane %v2657, %v2664
    %v2667 = vunpack.c.l.s4 1983009808
    %v2668 = vunpack.c.0.s8 %v2667
    %v2669 = vlaneseq
    %v2670 = vshrl.u32 %v2669, 7
    %v2671 = vsub.s32 %v2668, %v2670
    %v2672 = vrot.slane %v2658, %v2671
    %v2673 = vcombine.low %v610, %v632
    %v2674 = vcombine.high %v610, %v632
    %v2676 = vunpack.c.l.s4 1983009808
    %v2677 = vunpack.c.0.s8 %v2676
    %v2678 = vlaneseq
    %v2679 = vshrl.u32 %v2678, 7
    %v2680 = vsub.s32 %v2677, %v2679
    %v2681 = vrot.slane %v2673, %v2680
    %v2683 = vunpack.c.l.s4 1983009808
    %v2684 = vunpack.c.0.s8 %v2683
    %v2685 = vlaneseq
    %v2686 = vshrl.u32 %v2685, 7
    %v2687 = vsub.s32 %v2684, %v2686
    %v2688 = vrot.slane %v2674, %v2687
    %v2689 = vcombine.low %v2633, %v2649
    %v2690 = vcombine.high %v2633, %v2649
    %v2692 = vunpack.c.l.s4 1934713408
    %v2693 = vunpack.c.0.s8 %v2692
    %v2694 = vlaneseq
    %v2695 = vshrl.u32 %v2694, 7
    %v2696 = vsub.s32 %v2693, %v2695
    %v2697 = vrot.slane %v2689, %v2696
    %v2699 = vunpack.c.l.s4 1934713408
    %v2700 = vunpack.c.0.s8 %v2699
    %v2701 = vlaneseq
    %v2702 = vshrl.u32 %v2701, 7
    %v2703 = vsub.s32 %v2700, %v2702
    %v2704 = vrot.slane %v2690, %v2703
    %v2705 = vcombine.low %v2640, %v2656
    %v2706 = vcombine.high %v2640, %v2656
    %v2708 = vunpack.c.l.s4 1934713408
    %v2709 = vunpack.c.0.s8 %v2708
    %v2710 = vlaneseq
    %v2711 = vshrl.u32 %v2710, 7
    %v2712 = vsub.s32 %v2709, %v2711
    %v2713 = vrot.slane %v2705, %v2712
    %v2715 = vunpack.c.l.s4 1934713408
    %v2716 = vunpack.c.0.s8 %v2715
    %v2717 = vlaneseq
    %v2718 = vshrl.u32 %v2717, 7
    %v2719 = vsub.s32 %v2716, %v2718
    %v2720 = vrot.slane %v2706, %v2719
    %v2721 = vcombine.low %v2665, %v2681
    %v2722 = vcombine.high %v2665, %v2681
    %v2724 = vunpack.c.l.s4 1934713408
    %v2725 = vunpack.c.0.s8 %v2724
    %v2726 = vlaneseq
    %v2727 = vshrl.u32 %v2726, 7
    %v2728 = vsub.s32 %v2725, %v2727
    %v2729 = vrot.slane %v2721, %v2728
    %v2731 = vunpack.c.l.s4 1934713408
    %v2732 = vunpack.c.0.s8 %v2731
    %v2733 = vlaneseq
    %v2734 = vshrl.u32 %v2733, 7
    %v2735 = vsub.s32 %v2732, %v2734
    %v2736 = vrot.slane %v2722, %v2735
    %v2737 = vcombine.low %v2672, %v2688
    %v2738 = vcombine.high %v2672, %v2688
    %v2740 = vunpack.c.l.s4 1934713408
    %v2741 = vunpack.c.0.s8 %v2740
    %v2742 = vlaneseq
    %v2743 = vshrl.u32 %v2742, 7
    %v2744 = vsub.s32 %v2741, %v2743
    %v2745 = vrot.slane %v2737, %v2744
    %v2747 = vunpack.c.l.s4 1934713408
    %v2748 = vunpack.c.0.s8 %v2747
    %v2749 = vlaneseq
    %v2750 = vshrl.u32 %v2749, 7
    %v2751 = vsub.s32 %v2748, %v2750
    %v2752 = vrot.slane %v2738, %v2751
    %v2753 = vcombine.low %v2697, %v2729
    %v2754 = vcombine.high %v2697, %v2729
    %v2755 = vcombine.low %v2704, %v2736
    %v2756 = vcombine.high %v2704, %v2736
    %v2757 = vcombine.low %v2713, %v2745
    %v2758 = vcombine.high %v2713, %v2745
    %v2759 = vcombine.low %v2720, %v2752
    %v2760 = vcombine.high %v2720, %v2752
    %v2761 = vcombine.low %v643, %v665
    %v2762 = vcombine.high %v643, %v665
    %v2764 = vunpack.c.l.s4 1983009808
    %v2765 = vunpack.c.0.s8 %v2764
    %v2766 = vlaneseq
    %v2767 = vshrl.u32 %v2766, 7
    %v2768 = vsub.s32 %v2765, %v2767
    %v2769 = vrot.slane %v2761, %v2768
    %v2771 = vunpack.c.l.s4 1983009808
    %v2772 = vunpack.c.0.s8 %v2771
    %v2773 = vlaneseq
    %v2774 = vshrl.u32 %v2773, 7
    %v2775 = vsub.s32 %v2772, %v2774
    %v2776 = vrot.slane %v2762, %v2775
    %v2777 = vcombine.low %v654, %v676
    %v2778 = vcombine.high %v654, %v676
    %v2780 = vunpack.c.l.s4 1983009808
    %v2781 = vunpack.c.0.s8 %v2780
    %v2782 = vlaneseq
    %v2783 = vshrl.u32 %v2782, 7
    %v2784 = vsub.s32 %v2781, %v2783
    %v2785 = vrot.slane %v2777, %v2784
    %v2787 = vunpack.c.l.s4 1983009808
    %v2788 = vunpack.c.0.s8 %v2787
    %v2789 = vlaneseq
    %v2790 = vshrl.u32 %v2789, 7
    %v2791 = vsub.s32 %v2788, %v2790
    %v2792 = vrot.slane %v2778, %v2791
    %v2793 = vcombine.low %v687, %v709
    %v2794 = vcombine.high %v687, %v709
    %v2796 = vunpack.c.l.s4 1983009808
    %v2797 = vunpack.c.0.s8 %v2796
    %v2798 = vlaneseq
    %v2799 = vshrl.u32 %v2798, 7
    %v2800 = vsub.s32 %v2797, %v2799
    %v2801 = vrot.slane %v2793, %v2800
    %v2803 = vunpack.c.l.s4 1983009808
    %v2804 = vunpack.c.0.s8 %v2803
    %v2805 = vlaneseq
    %v2806 = vshrl.u32 %v2805, 7
    %v2807 = vsub.s32 %v2804, %v2806
    %v2808 = vrot.slane %v2794, %v2807
    %v2809 = vcombine.low %v698, %v720
    %v2810 = vcombine.high %v698, %v720
    %v2812 = vunpack.c.l.s4 1983009808
    %v2813 = vunpack.c.0.s8 %v2812
    %v2814 = vlaneseq
    %v2815 = vshrl.u32 %v2814, 7
    %v2816 = vsub.s32 %v2813, %v2815
    %v2817 = vrot.slane %v2809, %v2816
    %v2819 = vunpack.c.l.s4 1983009808
    %v2820 = vunpack.c.0.s8 %v2819
    %v2821 = vlaneseq
    %v2822 = vshrl.u32 %v2821, 7
    %v2823 = vsub.s32 %v2820, %v2822
    %v2824 = vrot.slane %v2810, %v2823
    %v2825 = vcombine.low %v2769, %v2785
    %v2826 = vcombine.high %v2769, %v2785
    %v2828 = vunpack.c.l.s4 1934713408
    %v2829 = vunpack.c.0.s8 %v2828
    %v2830 = vlaneseq
    %v2831 = vshrl.u32 %v2830, 7
    %v2832 = vsub.s32 %v2829, %v2831
    %v2833 = vrot.slane %v2825, %v2832
    %v2835 = vunpack.c.l.s4 1934713408
    %v2836 = vunpack.c.0.s8 %v2835
    %v2837 = vlaneseq
    %v2838 = vshrl.u32 %v2837, 7
    %v2839 = vsub.s32 %v2836, %v2838
    %v2840 = vrot.slane %v2826, %v2839
    %v2841 = vcombine.low %v2776, %v2792
    %v2842 = vcombine.high %v2776, %v2792
    %v2844 = vunpack.c.l.s4 1934713408
    %v2845 = vunpack.c.0.s8 %v2844
    %v2846 = vlaneseq
    %v2847 = vshrl.u32 %v2846, 7
    %v2848 = vsub.s32 %v2845, %v2847
    %v2849 = vrot.slane %v2841, %v2848
    %v2851 = vunpack.c.l.s4 1934713408
    %v2852 = vunpack.c.0.s8 %v2851
    %v2853 = vlaneseq
    %v2854 = vshrl.u32 %v2853, 7
    %v2855 = vsub.s32 %v2852, %v2854
    %v2856 = vrot.slane %v2842, %v2855
    %v2857 = vcombine.low %v2801, %v2817
    %v2858 = vcombine.high %v2801, %v2817
    %v2860 = vunpack.c.l.s4 1934713408
    %v2861 = vunpack.c.0.s8 %v2860
    %v2862 = vlaneseq
    %v2863 = vshrl.u32 %v2862, 7
    %v2864 = vsub.s32 %v2861, %v2863
    %v2865 = vrot.slane %v2857, %v2864
    %v2867 = vunpack.c.l.s4 1934713408
    %v2868 = vunpack.c.0.s8 %v2867
    %v2869 = vlaneseq
    %v2870 = vshrl.u32 %v2869, 7
    %v2871 = vsub.s32 %v2868, %v2870
    %v2872 = vrot.slane %v2858, %v2871
    %v2873 = vcombine.low %v2808, %v2824
    %v2874 = vcombine.high %v2808, %v2824
    %v2876 = vunpack.c.l.s4 1934713408
    %v2877 = vunpack.c.0.s8 %v2876
    %v2878 = vlaneseq
    %v2879 = vshrl.u32 %v2878, 7
    %v2880 = vsub.s32 %v2877, %v2879
    %v2881 = vrot.slane %v2873, %v2880
    %v2883 = vunpack.c.l.s4 1934713408
    %v2884 = vunpack.c.0.s8 %v2883
    %v2885 = vlaneseq
    %v2886 = vshrl.u32 %v2885, 7
    %v2887 = vsub.s32 %v2884, %v2886
    %v2888 = vrot.slane %v2874, %v2887
    %v2889 = vcombine.low %v2833, %v2865
    %v2890 = vcombine.high %v2833, %v2865
    %v2891 = vcombine.low %v2840, %v2872
    %v2892 = vcombine.high %v2840, %v2872
    %v2893 = vcombine.low %v2849, %v2881
    %v2894 = vcombine.high %v2849, %v2881
    %v2895 = vcombine.low %v2856, %v2888
    %v2896 = vcombine.high %v2856, %v2888
    %2905 = vrot.lane.b32.xlu0 %v850, 2
    %v2906 = vpop.permute.xlu0 %2905
    %2907 = vrot.lane.b32.xlu0 %v986, 2
    %v2908 = vpop.permute.xlu0 %2907
    %2909 = vrot.lane.b32.xlu0 %v1122, 2
    %v2910 = vpop.permute.xlu0 %2909
    %2911 = vrot.lane.b32.xlu0 %v1258, 2
    %v2912 = vpop.permute.xlu0 %2911
    %2913 = vrot.lane.b32.xlu0 %v1394, 2
    %v2914 = vpop.permute.xlu0 %2913
    %2915 = vrot.lane.b32.xlu0 %v1530, 2
    %v2916 = vpop.permute.xlu0 %2915
    %2917 = vrot.lane.b32.xlu0 %v1666, 2
    %v2918 = vpop.permute.xlu0 %2917
    %2919 = vrot.lane.b32.xlu0 %v1802, 2
    %v2920 = vpop.permute.xlu0 %2919
    %2937 = vrot.lane.b32.xlu0 %v851, 4
    %v2938 = vpop.permute.xlu0 %2937
    %2939 = vrot.lane.b32.xlu0 %v987, 4
    %v2940 = vpop.permute.xlu0 %2939
    %2941 = vrot.lane.b32.xlu0 %v1123, 4
    %v2942 = vpop.permute.xlu0 %2941
    %2943 = vrot.lane.b32.xlu0 %v1259, 4
    %v2944 = vpop.permute.xlu0 %2943
    %2945 = vrot.lane.b32.xlu0 %v1395, 4
    %v2946 = vpop.permute.xlu0 %2945
    %2947 = vrot.lane.b32.xlu0 %v1531, 4
    %v2948 = vpop.permute.xlu0 %2947
    %2949 = vrot.lane.b32.xlu0 %v1667, 4
    %v2950 = vpop.permute.xlu0 %2949
    %2951 = vrot.lane.b32.xlu0 %v1803, 4
    %v2952 = vpop.permute.xlu0 %2951
    %2969 = vrot.lane.b32.xlu0 %v852, 6
    %v2970 = vpop.permute.xlu0 %2969
    %2971 = vrot.lane.b32.xlu0 %v988, 6
    %v2972 = vpop.permute.xlu0 %2971
    %2973 = vrot.lane.b32.xlu0 %v1124, 6
    %v2974 = vpop.permute.xlu0 %2973
    %2975 = vrot.lane.b32.xlu0 %v1260, 6
    %v2976 = vpop.permute.xlu0 %2975
    %2977 = vrot.lane.b32.xlu0 %v1396, 6
    %v2978 = vpop.permute.xlu0 %2977
    %2979 = vrot.lane.b32.xlu0 %v1532, 6
    %v2980 = vpop.permute.xlu0 %2979
    %2981 = vrot.lane.b32.xlu0 %v1668, 6
    %v2982 = vpop.permute.xlu0 %2981
    %2983 = vrot.lane.b32.xlu0 %v1804, 6
    %v2984 = vpop.permute.xlu0 %2983
    %3001 = vrot.lane.b32.xlu0 %v853, 8
    %v3002 = vpop.permute.xlu0 %3001
    %3003 = vrot.lane.b32.xlu0 %v989, 8
    %v3004 = vpop.permute.xlu0 %3003
    %3005 = vrot.lane.b32.xlu0 %v1125, 8
    %v3006 = vpop.permute.xlu0 %3005
    %3007 = vrot.lane.b32.xlu0 %v1261, 8
    %v3008 = vpop.permute.xlu0 %3007
    %3009 = vrot.lane.b32.xlu0 %v1397, 8
    %v3010 = vpop.permute.xlu0 %3009
    %3011 = vrot.lane.b32.xlu0 %v1533, 8
    %v3012 = vpop.permute.xlu0 %3011
    %3013 = vrot.lane.b32.xlu0 %v1669, 8
    %v3014 = vpop.permute.xlu0 %3013
    %3015 = vrot.lane.b32.xlu0 %v1805, 8
    %v3016 = vpop.permute.xlu0 %3015
    %3033 = vrot.lane.b32.xlu0 %v854, 10
    %v3034 = vpop.permute.xlu0 %3033
    %3035 = vrot.lane.b32.xlu0 %v990, 10
    %v3036 = vpop.permute.xlu0 %3035
    %3037 = vrot.lane.b32.xlu0 %v1126, 10
    %v3038 = vpop.permute.xlu0 %3037
    %3039 = vrot.lane.b32.xlu0 %v1262, 10
    %v3040 = vpop.permute.xlu0 %3039
    %3041 = vrot.lane.b32.xlu0 %v1398, 10
    %v3042 = vpop.permute.xlu0 %3041
    %3043 = vrot.lane.b32.xlu0 %v1534, 10
    %v3044 = vpop.permute.xlu0 %3043
    %3045 = vrot.lane.b32.xlu0 %v1670, 10
    %v3046 = vpop.permute.xlu0 %3045
    %3047 = vrot.lane.b32.xlu0 %v1806, 10
    %v3048 = vpop.permute.xlu0 %3047
    %3065 = vrot.lane.b32.xlu0 %v855, 12
    %v3066 = vpop.permute.xlu0 %3065
    %3067 = vrot.lane.b32.xlu0 %v991, 12
    %v3068 = vpop.permute.xlu0 %3067
    %3069 = vrot.lane.b32.xlu0 %v1127, 12
    %v3070 = vpop.permute.xlu0 %3069
    %3071 = vrot.lane.b32.xlu0 %v1263, 12
    %v3072 = vpop.permute.xlu0 %3071
    %3073 = vrot.lane.b32.xlu0 %v1399, 12
    %v3074 = vpop.permute.xlu0 %3073
    %3075 = vrot.lane.b32.xlu0 %v1535, 12
    %v3076 = vpop.permute.xlu0 %3075
    %3077 = vrot.lane.b32.xlu0 %v1671, 12
    %v3078 = vpop.permute.xlu0 %3077
    %3079 = vrot.lane.b32.xlu0 %v1807, 12
    %v3080 = vpop.permute.xlu0 %3079
    %3097 = vrot.lane.b32.xlu0 %v856, 14
    %v3098 = vpop.permute.xlu0 %3097
    %3099 = vrot.lane.b32.xlu0 %v992, 14
    %v3100 = vpop.permute.xlu0 %3099
    %3101 = vrot.lane.b32.xlu0 %v1128, 14
    %v3102 = vpop.permute.xlu0 %3101
    %3103 = vrot.lane.b32.xlu0 %v1264, 14
    %v3104 = vpop.permute.xlu0 %3103
    %3105 = vrot.lane.b32.xlu0 %v1400, 14
    %v3106 = vpop.permute.xlu0 %3105
    %3107 = vrot.lane.b32.xlu0 %v1536, 14
    %v3108 = vpop.permute.xlu0 %3107
    %3109 = vrot.lane.b32.xlu0 %v1672, 14
    %v3110 = vpop.permute.xlu0 %3109
    %3111 = vrot.lane.b32.xlu0 %v1808, 14
    %v3112 = vpop.permute.xlu0 %3111
    %3129 = vrot.lane.b32.xlu0 %v1937, 16
    %v3130 = vpop.permute.xlu0 %3129
    %3131 = vrot.lane.b32.xlu0 %v2073, 16
    %v3132 = vpop.permute.xlu0 %3131
    %3133 = vrot.lane.b32.xlu0 %v2209, 16
    %v3134 = vpop.permute.xlu0 %3133
    %3135 = vrot.lane.b32.xlu0 %v2345, 16
    %v3136 = vpop.permute.xlu0 %3135
    %3137 = vrot.lane.b32.xlu0 %v2481, 16
    %v3138 = vpop.permute.xlu0 %3137
    %3139 = vrot.lane.b32.xlu0 %v2617, 16
    %v3140 = vpop.permute.xlu0 %3139
    %3141 = vrot.lane.b32.xlu0 %v2753, 16
    %v3142 = vpop.permute.xlu0 %3141
    %3143 = vrot.lane.b32.xlu0 %v2889, 16
    %v3144 = vpop.permute.xlu0 %3143
    %3161 = vrot.lane.b32.xlu0 %v1938, 18
    %v3162 = vpop.permute.xlu0 %3161
    %3163 = vrot.lane.b32.xlu0 %v2074, 18
    %v3164 = vpop.permute.xlu0 %3163
    %3165 = vrot.lane.b32.xlu0 %v2210, 18
    %v3166 = vpop.permute.xlu0 %3165
    %3167 = vrot.lane.b32.xlu0 %v2346, 18
    %v3168 = vpop.permute.xlu0 %3167
    %3169 = vrot.lane.b32.xlu0 %v2482, 18
    %v3170 = vpop.permute.xlu0 %3169
    %3171 = vrot.lane.b32.xlu0 %v2618, 18
    %v3172 = vpop.permute.xlu0 %3171
    %3173 = vrot.lane.b32.xlu0 %v2754, 18
    %v3174 = vpop.permute.xlu0 %3173
    %3175 = vrot.lane.b32.xlu0 %v2890, 18
    %v3176 = vpop.permute.xlu0 %3175
    %3193 = vrot.lane.b32.xlu0 %v1939, 20
    %v3194 = vpop.permute.xlu0 %3193
    %3195 = vrot.lane.b32.xlu0 %v2075, 20
    %v3196 = vpop.permute.xlu0 %3195
    %3197 = vrot.lane.b32.xlu0 %v2211, 20
    %v3198 = vpop.permute.xlu0 %3197
    %3199 = vrot.lane.b32.xlu0 %v2347, 20
    %v3200 = vpop.permute.xlu0 %3199
    %3201 = vrot.lane.b32.xlu0 %v2483, 20
    %v3202 = vpop.permute.xlu0 %3201
    %3203 = vrot.lane.b32.xlu0 %v2619, 20
    %v3204 = vpop.permute.xlu0 %3203
    %3205 = vrot.lane.b32.xlu0 %v2755, 20
    %v3206 = vpop.permute.xlu0 %3205
    %3207 = vrot.lane.b32.xlu0 %v2891, 20
    %v3208 = vpop.permute.xlu0 %3207
    %3225 = vrot.lane.b32.xlu0 %v1940, 22
    %v3226 = vpop.permute.xlu0 %3225
    %3227 = vrot.lane.b32.xlu0 %v2076, 22
    %v3228 = vpop.permute.xlu0 %3227
    %3229 = vrot.lane.b32.xlu0 %v2212, 22
    %v3230 = vpop.permute.xlu0 %3229
    %3231 = vrot.lane.b32.xlu0 %v2348, 22
    %v3232 = vpop.permute.xlu0 %3231
    %3233 = vrot.lane.b32.xlu0 %v2484, 22
    %v3234 = vpop.permute.xlu0 %3233
    %3235 = vrot.lane.b32.xlu0 %v2620, 22
    %v3236 = vpop.permute.xlu0 %3235
    %3237 = vrot.lane.b32.xlu0 %v2756, 22
    %v3238 = vpop.permute.xlu0 %3237
    %3239 = vrot.lane.b32.xlu0 %v2892, 22
    %v3240 = vpop.permute.xlu0 %3239
    %3257 = vrot.lane.b32.xlu0 %v1941, 24
    %v3258 = vpop.permute.xlu0 %3257
    %3259 = vrot.lane.b32.xlu0 %v2077, 24
    %v3260 = vpop.permute.xlu0 %3259
    %3261 = vrot.lane.b32.xlu0 %v2213, 24
    %v3262 = vpop.permute.xlu0 %3261
    %3263 = vrot.lane.b32.xlu0 %v2349, 24
    %v3264 = vpop.permute.xlu0 %3263
    %3265 = vrot.lane.b32.xlu0 %v2485, 24
    %v3266 = vpop.permute.xlu0 %3265
    %3267 = vrot.lane.b32.xlu0 %v2621, 24
    %v3268 = vpop.permute.xlu0 %3267
    %3269 = vrot.lane.b32.xlu0 %v2757, 24
    %v3270 = vpop.permute.xlu0 %3269
    %3271 = vrot.lane.b32.xlu0 %v2893, 24
    %v3272 = vpop.permute.xlu0 %3271
    %3289 = vrot.lane.b32.xlu0 %v1942, 26
    %v3290 = vpop.permute.xlu0 %3289
    %3291 = vrot.lane.b32.xlu0 %v2078, 26
    %v3292 = vpop.permute.xlu0 %3291
    %3293 = vrot.lane.b32.xlu0 %v2214, 26
    %v3294 = vpop.permute.xlu0 %3293
    %3295 = vrot.lane.b32.xlu0 %v2350, 26
    %v3296 = vpop.permute.xlu0 %3295
    %3297 = vrot.lane.b32.xlu0 %v2486, 26
    %v3298 = vpop.permute.xlu0 %3297
    %3299 = vrot.lane.b32.xlu0 %v2622, 26
    %v3300 = vpop.permute.xlu0 %3299
    %3301 = vrot.lane.b32.xlu0 %v2758, 26
    %v3302 = vpop.permute.xlu0 %3301
    %3303 = vrot.lane.b32.xlu0 %v2894, 26
    %v3304 = vpop.permute.xlu0 %3303
    %3321 = vrot.lane.b32.xlu0 %v1943, 28
    %v3322 = vpop.permute.xlu0 %3321
    %3323 = vrot.lane.b32.xlu0 %v2079, 28
    %v3324 = vpop.permute.xlu0 %3323
    %3325 = vrot.lane.b32.xlu0 %v2215, 28
    %v3326 = vpop.permute.xlu0 %3325
    %3327 = vrot.lane.b32.xlu0 %v2351, 28
    %v3328 = vpop.permute.xlu0 %3327
    %3329 = vrot.lane.b32.xlu0 %v2487, 28
    %v3330 = vpop.permute.xlu0 %3329
    %3331 = vrot.lane.b32.xlu0 %v2623, 28
    %v3332 = vpop.permute.xlu0 %3331
    %3333 = vrot.lane.b32.xlu0 %v2759, 28
    %v3334 = vpop.permute.xlu0 %3333
    %3335 = vrot.lane.b32.xlu0 %v2895, 28
    %v3336 = vpop.permute.xlu0 %3335
    %3353 = vrot.lane.b32.xlu0 %v1944, 30
    %v3354 = vpop.permute.xlu0 %3353
    %3355 = vrot.lane.b32.xlu0 %v2080, 30
    %v3356 = vpop.permute.xlu0 %3355
    %3357 = vrot.lane.b32.xlu0 %v2216, 30
    %v3358 = vpop.permute.xlu0 %3357
    %3359 = vrot.lane.b32.xlu0 %v2352, 30
    %v3360 = vpop.permute.xlu0 %3359
    %3361 = vrot.lane.b32.xlu0 %v2488, 30
    %v3362 = vpop.permute.xlu0 %3361
    %3363 = vrot.lane.b32.xlu0 %v2624, 30
    %v3364 = vpop.permute.xlu0 %3363
    %3365 = vrot.lane.b32.xlu0 %v2760, 30
    %v3366 = vpop.permute.xlu0 %3365
    %3367 = vrot.lane.b32.xlu0 %v2896, 30
    %v3368 = vpop.permute.xlu0 %3367
    %vm3377 = vcmask 15360
    %v3378 = vsel %vm3377, %v849, %v2906
    %v3379 = vsel %vm3377, %v985, %v2908
    %v3380 = vsel %vm3377, %v1121, %v2910
    %v3381 = vsel %vm3377, %v1257, %v2912
    %v3382 = vsel %vm3377, %v1393, %v2914
    %v3383 = vsel %vm3377, %v1529, %v2916
    %v3384 = vsel %vm3377, %v1665, %v2918
    %v3385 = vsel %vm3377, %v1801, %v2920
    %vm3386 = vcmask 31744
    %v3387 = vsel %vm3386, %v3378, %v2938
    %v3388 = vsel %vm3386, %v3379, %v2940
    %v3389 = vsel %vm3386, %v3380, %v2942
    %v3390 = vsel %vm3386, %v3381, %v2944
    %v3391 = vsel %vm3386, %v3382, %v2946
    %v3392 = vsel %vm3386, %v3383, %v2948
    %v3393 = vsel %vm3386, %v3384, %v2950
    %v3394 = vsel %vm3386, %v3385, %v2952
    %vm3395 = vcmask 48128
    %v3396 = vsel %vm3395, %v3387, %v2970
    %v3397 = vsel %vm3395, %v3388, %v2972
    %v3398 = vsel %vm3395, %v3389, %v2974
    %v3399 = vsel %vm3395, %v3390, %v2976
    %v3400 = vsel %vm3395, %v3391, %v2978
    %v3401 = vsel %vm3395, %v3392, %v2980
    %v3402 = vsel %vm3395, %v3393, %v2982
    %v3403 = vsel %vm3395, %v3394, %v2984
    %vm3404 = vcmask 64512
    %v3405 = vsel %vm3404, %v3396, %v3002
    %v3406 = vsel %vm3404, %v3397, %v3004
    %v3407 = vsel %vm3404, %v3398, %v3006
    %v3408 = vsel %vm3404, %v3399, %v3008
    %v3409 = vsel %vm3404, %v3400, %v3010
    %v3410 = vsel %vm3404, %v3401, %v3012
    %v3411 = vsel %vm3404, %v3402, %v3014
    %v3412 = vsel %vm3404, %v3403, %v3016
    %vm3413 = vcmask 80896
    %v3414 = vsel %vm3413, %v3405, %v3034
    %v3415 = vsel %vm3413, %v3406, %v3036
    %v3416 = vsel %vm3413, %v3407, %v3038
    %v3417 = vsel %vm3413, %v3408, %v3040
    %v3418 = vsel %vm3413, %v3409, %v3042
    %v3419 = vsel %vm3413, %v3410, %v3044
    %v3420 = vsel %vm3413, %v3411, %v3046
    %v3421 = vsel %vm3413, %v3412, %v3048
    %vm3422 = vcmask 97280
    %v3423 = vsel %vm3422, %v3414, %v3066
    %v3424 = vsel %vm3422, %v3415, %v3068
    %v3425 = vsel %vm3422, %v3416, %v3070
    %v3426 = vsel %vm3422, %v3417, %v3072
    %v3427 = vsel %vm3422, %v3418, %v3074
    %v3428 = vsel %vm3422, %v3419, %v3076
    %v3429 = vsel %vm3422, %v3420, %v3078
    %v3430 = vsel %vm3422, %v3421, %v3080
    %vm3431 = vcmask 113664
    %v3432 = vsel %vm3431, %v3423, %v3098
    %v3433 = vsel %vm3431, %v3424, %v3100
    %v3434 = vsel %vm3431, %v3425, %v3102
    %v3435 = vsel %vm3431, %v3426, %v3104
    %v3436 = vsel %vm3431, %v3427, %v3106
    %v3437 = vsel %vm3431, %v3428, %v3108
    %v3438 = vsel %vm3431, %v3429, %v3110
    %v3439 = vsel %vm3431, %v3430, %v3112
    %vm3440 = vcmask 130048
    %v3441 = vsel %vm3440, %v3432, %v3130
    %v3442 = vsel %vm3440, %v3433, %v3132
    %v3443 = vsel %vm3440, %v3434, %v3134
    %v3444 = vsel %vm3440, %v3435, %v3136
    %v3445 = vsel %vm3440, %v3436, %v3138
    %v3446 = vsel %vm3440, %v3437, %v3140
    %v3447 = vsel %vm3440, %v3438, %v3142
    %v3448 = vsel %vm3440, %v3439, %v3144
    %vm3449 = vcmask 146432
    %v3450 = vsel %vm3449, %v3441, %v3162
    %v3451 = vsel %vm3449, %v3442, %v3164
    %v3452 = vsel %vm3449, %v3443, %v3166
    %v3453 = vsel %vm3449, %v3444, %v3168
    %v3454 = vsel %vm3449, %v3445, %v3170
    %v3455 = vsel %vm3449, %v3446, %v3172
    %v3456 = vsel %vm3449, %v3447, %v3174
    %v3457 = vsel %vm3449, %v3448, %v3176
    %vm3458 = vcmask 162816
    %v3459 = vsel %vm3458, %v3450, %v3194
    %v3460 = vsel %vm3458, %v3451, %v3196
    %v3461 = vsel %vm3458, %v3452, %v3198
    %v3462 = vsel %vm3458, %v3453, %v3200
    %v3463 = vsel %vm3458, %v3454, %v3202
    %v3464 = vsel %vm3458, %v3455, %v3204
    %v3465 = vsel %vm3458, %v3456, %v3206
    %v3466 = vsel %vm3458, %v3457, %v3208
    %vm3467 = vcmask 179200
    %v3468 = vsel %vm3467, %v3459, %v3226
    %v3469 = vsel %vm3467, %v3460, %v3228
    %v3470 = vsel %vm3467, %v3461, %v3230
    %v3471 = vsel %vm3467, %v3462, %v3232
    %v3472 = vsel %vm3467, %v3463, %v3234
    %v3473 = vsel %vm3467, %v3464, %v3236
    %v3474 = vsel %vm3467, %v3465, %v3238
    %v3475 = vsel %vm3467, %v3466, %v3240
    %vm3476 = vcmask 195584
    %v3477 = vsel %vm3476, %v3468, %v3258
    %v3478 = vsel %vm3476, %v3469, %v3260
    %v3479 = vsel %vm3476, %v3470, %v3262
    %v3480 = vsel %vm3476, %v3471, %v3264
    %v3481 = vsel %vm3476, %v3472, %v3266
    %v3482 = vsel %vm3476, %v3473, %v3268
    %v3483 = vsel %vm3476, %v3474, %v3270
    %v3484 = vsel %vm3476, %v3475, %v3272
    %vm3485 = vcmask 211968
    %v3486 = vsel %vm3485, %v3477, %v3290
    %v3487 = vsel %vm3485, %v3478, %v3292
    %v3488 = vsel %vm3485, %v3479, %v3294
    %v3489 = vsel %vm3485, %v3480, %v3296
    %v3490 = vsel %vm3485, %v3481, %v3298
    %v3491 = vsel %vm3485, %v3482, %v3300
    %v3492 = vsel %vm3485, %v3483, %v3302
    %v3493 = vsel %vm3485, %v3484, %v3304
    %vm3494 = vcmask 228352
    %v3495 = vsel %vm3494, %v3486, %v3322
    %v3496 = vsel %vm3494, %v3487, %v3324
    %v3497 = vsel %vm3494, %v3488, %v3326
    %v3498 = vsel %vm3494, %v3489, %v3328
    %v3499 = vsel %vm3494, %v3490, %v3330
    %v3500 = vsel %vm3494, %v3491, %v3332
    %v3501 = vsel %vm3494, %v3492, %v3334
    %v3502 = vsel %vm3494, %v3493, %v3336
    %vm3503 = vcmask 244736
    %v3504 = vsel %vm3503, %v3495, %v3354
    %v3505 = vsel %vm3503, %v3496, %v3356
    %v3506 = vsel %vm3503, %v3497, %v3358
    %v3507 = vsel %vm3503, %v3498, %v3360
    %v3508 = vsel %vm3503, %v3499, %v3362
    %v3509 = vsel %vm3503, %v3500, %v3364
    %v3510 = vsel %vm3503, %v3501, %v3366
    %v3511 = vsel %vm3503, %v3502, %v3368
    %s3513 = sor.u32 256, 16
    %3514 = vbcast.lane.b32.xlu0 %v20, %s3513
    %v3515 = vpop.permute.xlu0 %3514
    %s3517 = sor.u32 256, 24
    %3518 = vbcast.lane.b32.xlu0 %v20, %s3517
    %v3519 = vpop.permute.xlu0 %3518
    %s3521 = sor.u32 256, 16
    %3522 = vbcast.lane.b32.xlu0 %v31, %s3521
    %v3523 = vpop.permute.xlu0 %3522
    %s3525 = sor.u32 256, 24
    %3526 = vbcast.lane.b32.xlu0 %v31, %s3525
    %v3527 = vpop.permute.xlu0 %3526
    %s3529 = sor.u32 256, 16
    %3530 = vbcast.lane.b32.xlu0 %v42, %s3529
    %v3531 = vpop.permute.xlu0 %3530
    %s3533 = sor.u32 256, 24
    %3534 = vbcast.lane.b32.xlu0 %v42, %s3533
    %v3535 = vpop.permute.xlu0 %3534
    %s3537 = sor.u32 256, 16
    %3538 = vbcast.lane.b32.xlu0 %v53, %s3537
    %v3539 = vpop.permute.xlu0 %3538
    %s3541 = sor.u32 256, 24
    %3542 = vbcast.lane.b32.xlu0 %v53, %s3541
    %v3543 = vpop.permute.xlu0 %3542
    %s3545 = sor.u32 256, 16
    %3546 = vbcast.lane.b32.xlu0 %v64, %s3545
    %v3547 = vpop.permute.xlu0 %3546
    %s3549 = sor.u32 256, 24
    %3550 = vbcast.lane.b32.xlu0 %v64, %s3549
    %v3551 = vpop.permute.xlu0 %3550
    %s3553 = sor.u32 256, 16
    %3554 = vbcast.lane.b32.xlu0 %v75, %s3553
    %v3555 = vpop.permute.xlu0 %3554
    %s3557 = sor.u32 256, 24
    %3558 = vbcast.lane.b32.xlu0 %v75, %s3557
    %v3559 = vpop.permute.xlu0 %3558
    %s3561 = sor.u32 256, 16
    %3562 = vbcast.lane.b32.xlu0 %v86, %s3561
    %v3563 = vpop.permute.xlu0 %3562
    %s3565 = sor.u32 256, 24
    %3566 = vbcast.lane.b32.xlu0 %v86, %s3565
    %v3567 = vpop.permute.xlu0 %3566
    %s3569 = sor.u32 256, 16
    %3570 = vbcast.lane.b32.xlu0 %v97, %s3569
    %v3571 = vpop.permute.xlu0 %3570
    %s3573 = sor.u32 256, 24
    %3574 = vbcast.lane.b32.xlu0 %v97, %s3573
    %v3575 = vpop.permute.xlu0 %3574
    %s3577 = sor.u32 256, 16
    %3578 = vbcast.lane.b32.xlu0 %v108, %s3577
    %v3579 = vpop.permute.xlu0 %3578
    %s3581 = sor.u32 256, 24
    %3582 = vbcast.lane.b32.xlu0 %v108, %s3581
    %v3583 = vpop.permute.xlu0 %3582
    %s3585 = sor.u32 256, 16
    %3586 = vbcast.lane.b32.xlu0 %v119, %s3585
    %v3587 = vpop.permute.xlu0 %3586
    %s3589 = sor.u32 256, 24
    %3590 = vbcast.lane.b32.xlu0 %v119, %s3589
    %v3591 = vpop.permute.xlu0 %3590
    %s3593 = sor.u32 256, 16
    %3594 = vbcast.lane.b32.xlu0 %v130, %s3593
    %v3595 = vpop.permute.xlu0 %3594
    %s3597 = sor.u32 256, 24
    %3598 = vbcast.lane.b32.xlu0 %v130, %s3597
    %v3599 = vpop.permute.xlu0 %3598
    %s3601 = sor.u32 256, 16
    %3602 = vbcast.lane.b32.xlu0 %v141, %s3601
    %v3603 = vpop.permute.xlu0 %3602
    %s3605 = sor.u32 256, 24
    %3606 = vbcast.lane.b32.xlu0 %v141, %s3605
    %v3607 = vpop.permute.xlu0 %3606
    %s3609 = sor.u32 256, 16
    %3610 = vbcast.lane.b32.xlu0 %v152, %s3609
    %v3611 = vpop.permute.xlu0 %3610
    %s3613 = sor.u32 256, 24
    %3614 = vbcast.lane.b32.xlu0 %v152, %s3613
    %v3615 = vpop.permute.xlu0 %3614
    %s3617 = sor.u32 256, 16
    %3618 = vbcast.lane.b32.xlu0 %v163, %s3617
    %v3619 = vpop.permute.xlu0 %3618
    %s3621 = sor.u32 256, 24
    %3622 = vbcast.lane.b32.xlu0 %v163, %s3621
    %v3623 = vpop.permute.xlu0 %3622
    %s3625 = sor.u32 256, 16
    %3626 = vbcast.lane.b32.xlu0 %v174, %s3625
    %v3627 = vpop.permute.xlu0 %3626
    %s3629 = sor.u32 256, 24
    %3630 = vbcast.lane.b32.xlu0 %v174, %s3629
    %v3631 = vpop.permute.xlu0 %3630
    %s3633 = sor.u32 256, 16
    %3634 = vbcast.lane.b32.xlu0 %v185, %s3633
    %v3635 = vpop.permute.xlu0 %3634
    %s3637 = sor.u32 256, 24
    %3638 = vbcast.lane.b32.xlu0 %v185, %s3637
    %v3639 = vpop.permute.xlu0 %3638
    %s3641 = sor.u32 256, 16
    %3642 = vbcast.lane.b32.xlu0 %v196, %s3641
    %v3643 = vpop.permute.xlu0 %3642
    %s3645 = sor.u32 256, 24
    %3646 = vbcast.lane.b32.xlu0 %v196, %s3645
    %v3647 = vpop.permute.xlu0 %3646
    %s3649 = sor.u32 256, 16
    %3650 = vbcast.lane.b32.xlu0 %v207, %s3649
    %v3651 = vpop.permute.xlu0 %3650
    %s3653 = sor.u32 256, 24
    %3654 = vbcast.lane.b32.xlu0 %v207, %s3653
    %v3655 = vpop.permute.xlu0 %3654
    %s3657 = sor.u32 256, 16
    %3658 = vbcast.lane.b32.xlu0 %v218, %s3657
    %v3659 = vpop.permute.xlu0 %3658
    %s3661 = sor.u32 256, 24
    %3662 = vbcast.lane.b32.xlu0 %v218, %s3661
    %v3663 = vpop.permute.xlu0 %3662
    %s3665 = sor.u32 256, 16
    %3666 = vbcast.lane.b32.xlu0 %v229, %s3665
    %v3667 = vpop.permute.xlu0 %3666
    %s3669 = sor.u32 256, 24
    %3670 = vbcast.lane.b32.xlu0 %v229, %s3669
    %v3671 = vpop.permute.xlu0 %3670
    %s3673 = sor.u32 256, 16
    %3674 = vbcast.lane.b32.xlu0 %v240, %s3673
    %v3675 = vpop.permute.xlu0 %3674
    %s3677 = sor.u32 256, 24
    %3678 = vbcast.lane.b32.xlu0 %v240, %s3677
    %v3679 = vpop.permute.xlu0 %3678
    %s3681 = sor.u32 256, 16
    %3682 = vbcast.lane.b32.xlu0 %v251, %s3681
    %v3683 = vpop.permute.xlu0 %3682
    %s3685 = sor.u32 256, 24
    %3686 = vbcast.lane.b32.xlu0 %v251, %s3685
    %v3687 = vpop.permute.xlu0 %3686
    %s3689 = sor.u32 256, 16
    %3690 = vbcast.lane.b32.xlu0 %v262, %s3689
    %v3691 = vpop.permute.xlu0 %3690
    %s3693 = sor.u32 256, 24
    %3694 = vbcast.lane.b32.xlu0 %v262, %s3693
    %v3695 = vpop.permute.xlu0 %3694
    %s3697 = sor.u32 256, 16
    %3698 = vbcast.lane.b32.xlu0 %v273, %s3697
    %v3699 = vpop.permute.xlu0 %3698
    %s3701 = sor.u32 256, 24
    %3702 = vbcast.lane.b32.xlu0 %v273, %s3701
    %v3703 = vpop.permute.xlu0 %3702
    %s3705 = sor.u32 256, 16
    %3706 = vbcast.lane.b32.xlu0 %v284, %s3705
    %v3707 = vpop.permute.xlu0 %3706
    %s3709 = sor.u32 256, 24
    %3710 = vbcast.lane.b32.xlu0 %v284, %s3709
    %v3711 = vpop.permute.xlu0 %3710
    %s3713 = sor.u32 256, 16
    %3714 = vbcast.lane.b32.xlu0 %v295, %s3713
    %v3715 = vpop.permute.xlu0 %3714
    %s3717 = sor.u32 256, 24
    %3718 = vbcast.lane.b32.xlu0 %v295, %s3717
    %v3719 = vpop.permute.xlu0 %3718
    %s3721 = sor.u32 256, 16
    %3722 = vbcast.lane.b32.xlu0 %v306, %s3721
    %v3723 = vpop.permute.xlu0 %3722
    %s3725 = sor.u32 256, 24
    %3726 = vbcast.lane.b32.xlu0 %v306, %s3725
    %v3727 = vpop.permute.xlu0 %3726
    %s3729 = sor.u32 256, 16
    %3730 = vbcast.lane.b32.xlu0 %v317, %s3729
    %v3731 = vpop.permute.xlu0 %3730
    %s3733 = sor.u32 256, 24
    %3734 = vbcast.lane.b32.xlu0 %v317, %s3733
    %v3735 = vpop.permute.xlu0 %3734
    %s3737 = sor.u32 256, 16
    %3738 = vbcast.lane.b32.xlu0 %v328, %s3737
    %v3739 = vpop.permute.xlu0 %3738
    %s3741 = sor.u32 256, 24
    %3742 = vbcast.lane.b32.xlu0 %v328, %s3741
    %v3743 = vpop.permute.xlu0 %3742
    %s3745 = sor.u32 256, 16
    %3746 = vbcast.lane.b32.xlu0 %v339, %s3745
    %v3747 = vpop.permute.xlu0 %3746
    %s3749 = sor.u32 256, 24
    %3750 = vbcast.lane.b32.xlu0 %v339, %s3749
    %v3751 = vpop.permute.xlu0 %3750
    %s3753 = sor.u32 256, 16
    %3754 = vbcast.lane.b32.xlu0 %v350, %s3753
    %v3755 = vpop.permute.xlu0 %3754
    %s3757 = sor.u32 256, 24
    %3758 = vbcast.lane.b32.xlu0 %v350, %s3757
    %v3759 = vpop.permute.xlu0 %3758
    %s3761 = sor.u32 256, 16
    %3762 = vbcast.lane.b32.xlu0 %v361, %s3761
    %v3763 = vpop.permute.xlu0 %3762
    %s3765 = sor.u32 256, 24
    %3766 = vbcast.lane.b32.xlu0 %v361, %s3765
    %v3767 = vpop.permute.xlu0 %3766
    %s3769 = sor.u32 256, 16
    %3770 = vbcast.lane.b32.xlu0 %v372, %s3769
    %v3771 = vpop.permute.xlu0 %3770
    %s3773 = sor.u32 256, 24
    %3774 = vbcast.lane.b32.xlu0 %v372, %s3773
    %v3775 = vpop.permute.xlu0 %3774
    %s3777 = sor.u32 256, 16
    %3778 = vbcast.lane.b32.xlu0 %v383, %s3777
    %v3779 = vpop.permute.xlu0 %3778
    %s3781 = sor.u32 256, 24
    %3782 = vbcast.lane.b32.xlu0 %v383, %s3781
    %v3783 = vpop.permute.xlu0 %3782
    %s3785 = sor.u32 256, 16
    %3786 = vbcast.lane.b32.xlu0 %v394, %s3785
    %v3787 = vpop.permute.xlu0 %3786
    %s3789 = sor.u32 256, 24
    %3790 = vbcast.lane.b32.xlu0 %v394, %s3789
    %v3791 = vpop.permute.xlu0 %3790
    %s3793 = sor.u32 256, 16
    %3794 = vbcast.lane.b32.xlu0 %v405, %s3793
    %v3795 = vpop.permute.xlu0 %3794
    %s3797 = sor.u32 256, 24
    %3798 = vbcast.lane.b32.xlu0 %v405, %s3797
    %v3799 = vpop.permute.xlu0 %3798
    %s3801 = sor.u32 256, 16
    %3802 = vbcast.lane.b32.xlu0 %v416, %s3801
    %v3803 = vpop.permute.xlu0 %3802
    %s3805 = sor.u32 256, 24
    %3806 = vbcast.lane.b32.xlu0 %v416, %s3805
    %v3807 = vpop.permute.xlu0 %3806
    %s3809 = sor.u32 256, 16
    %3810 = vbcast.lane.b32.xlu0 %v427, %s3809
    %v3811 = vpop.permute.xlu0 %3810
    %s3813 = sor.u32 256, 24
    %3814 = vbcast.lane.b32.xlu0 %v427, %s3813
    %v3815 = vpop.permute.xlu0 %3814
    %s3817 = sor.u32 256, 16
    %3818 = vbcast.lane.b32.xlu0 %v438, %s3817
    %v3819 = vpop.permute.xlu0 %3818
    %s3821 = sor.u32 256, 24
    %3822 = vbcast.lane.b32.xlu0 %v438, %s3821
    %v3823 = vpop.permute.xlu0 %3822
    %s3825 = sor.u32 256, 16
    %3826 = vbcast.lane.b32.xlu0 %v449, %s3825
    %v3827 = vpop.permute.xlu0 %3826
    %s3829 = sor.u32 256, 24
    %3830 = vbcast.lane.b32.xlu0 %v449, %s3829
    %v3831 = vpop.permute.xlu0 %3830
    %s3833 = sor.u32 256, 16
    %3834 = vbcast.lane.b32.xlu0 %v460, %s3833
    %v3835 = vpop.permute.xlu0 %3834
    %s3837 = sor.u32 256, 24
    %3838 = vbcast.lane.b32.xlu0 %v460, %s3837
    %v3839 = vpop.permute.xlu0 %3838
    %s3841 = sor.u32 256, 16
    %3842 = vbcast.lane.b32.xlu0 %v471, %s3841
    %v3843 = vpop.permute.xlu0 %3842
    %s3845 = sor.u32 256, 24
    %3846 = vbcast.lane.b32.xlu0 %v471, %s3845
    %v3847 = vpop.permute.xlu0 %3846
    %s3849 = sor.u32 256, 16
    %3850 = vbcast.lane.b32.xlu0 %v482, %s3849
    %v3851 = vpop.permute.xlu0 %3850
    %s3853 = sor.u32 256, 24
    %3854 = vbcast.lane.b32.xlu0 %v482, %s3853
    %v3855 = vpop.permute.xlu0 %3854
    %s3857 = sor.u32 256, 16
    %3858 = vbcast.lane.b32.xlu0 %v493, %s3857
    %v3859 = vpop.permute.xlu0 %3858
    %s3861 = sor.u32 256, 24
    %3862 = vbcast.lane.b32.xlu0 %v493, %s3861
    %v3863 = vpop.permute.xlu0 %3862
    %s3865 = sor.u32 256, 16
    %3866 = vbcast.lane.b32.xlu0 %v504, %s3865
    %v3867 = vpop.permute.xlu0 %3866
    %s3869 = sor.u32 256, 24
    %3870 = vbcast.lane.b32.xlu0 %v504, %s3869
    %v3871 = vpop.permute.xlu0 %3870
    %s3873 = sor.u32 256, 16
    %3874 = vbcast.lane.b32.xlu0 %v515, %s3873
    %v3875 = vpop.permute.xlu0 %3874
    %s3877 = sor.u32 256, 24
    %3878 = vbcast.lane.b32.xlu0 %v515, %s3877
    %v3879 = vpop.permute.xlu0 %3878
    %s3881 = sor.u32 256, 16
    %3882 = vbcast.lane.b32.xlu0 %v526, %s3881
    %v3883 = vpop.permute.xlu0 %3882
    %s3885 = sor.u32 256, 24
    %3886 = vbcast.lane.b32.xlu0 %v526, %s3885
    %v3887 = vpop.permute.xlu0 %3886
    %s3889 = sor.u32 256, 16
    %3890 = vbcast.lane.b32.xlu0 %v537, %s3889
    %v3891 = vpop.permute.xlu0 %3890
    %s3893 = sor.u32 256, 24
    %3894 = vbcast.lane.b32.xlu0 %v537, %s3893
    %v3895 = vpop.permute.xlu0 %3894
    %s3897 = sor.u32 256, 16
    %3898 = vbcast.lane.b32.xlu0 %v548, %s3897
    %v3899 = vpop.permute.xlu0 %3898
    %s3901 = sor.u32 256, 24
    %3902 = vbcast.lane.b32.xlu0 %v548, %s3901
    %v3903 = vpop.permute.xlu0 %3902
    %s3905 = sor.u32 256, 16
    %3906 = vbcast.lane.b32.xlu0 %v559, %s3905
    %v3907 = vpop.permute.xlu0 %3906
    %s3909 = sor.u32 256, 24
    %3910 = vbcast.lane.b32.xlu0 %v559, %s3909
    %v3911 = vpop.permute.xlu0 %3910
    %s3913 = sor.u32 256, 16
    %3914 = vbcast.lane.b32.xlu0 %v570, %s3913
    %v3915 = vpop.permute.xlu0 %3914
    %s3917 = sor.u32 256, 24
    %3918 = vbcast.lane.b32.xlu0 %v570, %s3917
    %v3919 = vpop.permute.xlu0 %3918
    %s3921 = sor.u32 256, 16
    %3922 = vbcast.lane.b32.xlu0 %v581, %s3921
    %v3923 = vpop.permute.xlu0 %3922
    %s3925 = sor.u32 256, 24
    %3926 = vbcast.lane.b32.xlu0 %v581, %s3925
    %v3927 = vpop.permute.xlu0 %3926
    %s3929 = sor.u32 256, 16
    %3930 = vbcast.lane.b32.xlu0 %v592, %s3929
    %v3931 = vpop.permute.xlu0 %3930
    %s3933 = sor.u32 256, 24
    %3934 = vbcast.lane.b32.xlu0 %v592, %s3933
    %v3935 = vpop.permute.xlu0 %3934
    %s3937 = sor.u32 256, 16
    %3938 = vbcast.lane.b32.xlu0 %v603, %s3937
    %v3939 = vpop.permute.xlu0 %3938
    %s3941 = sor.u32 256, 24
    %3942 = vbcast.lane.b32.xlu0 %v603, %s3941
    %v3943 = vpop.permute.xlu0 %3942
    %s3945 = sor.u32 256, 16
    %3946 = vbcast.lane.b32.xlu0 %v614, %s3945
    %v3947 = vpop.permute.xlu0 %3946
    %s3949 = sor.u32 256, 24
    %3950 = vbcast.lane.b32.xlu0 %v614, %s3949
    %v3951 = vpop.permute.xlu0 %3950
    %s3953 = sor.u32 256, 16
    %3954 = vbcast.lane.b32.xlu0 %v625, %s3953
    %v3955 = vpop.permute.xlu0 %3954
    %s3957 = sor.u32 256, 24
    %3958 = vbcast.lane.b32.xlu0 %v625, %s3957
    %v3959 = vpop.permute.xlu0 %3958
    %s3961 = sor.u32 256, 16
    %3962 = vbcast.lane.b32.xlu0 %v636, %s3961
    %v3963 = vpop.permute.xlu0 %3962
    %s3965 = sor.u32 256, 24
    %3966 = vbcast.lane.b32.xlu0 %v636, %s3965
    %v3967 = vpop.permute.xlu0 %3966
    %s3969 = sor.u32 256, 16
    %3970 = vbcast.lane.b32.xlu0 %v647, %s3969
    %v3971 = vpop.permute.xlu0 %3970
    %s3973 = sor.u32 256, 24
    %3974 = vbcast.lane.b32.xlu0 %v647, %s3973
    %v3975 = vpop.permute.xlu0 %3974
    %s3977 = sor.u32 256, 16
    %3978 = vbcast.lane.b32.xlu0 %v658, %s3977
    %v3979 = vpop.permute.xlu0 %3978
    %s3981 = sor.u32 256, 24
    %3982 = vbcast.lane.b32.xlu0 %v658, %s3981
    %v3983 = vpop.permute.xlu0 %3982
    %s3985 = sor.u32 256, 16
    %3986 = vbcast.lane.b32.xlu0 %v669, %s3985
    %v3987 = vpop.permute.xlu0 %3986
    %s3989 = sor.u32 256, 24
    %3990 = vbcast.lane.b32.xlu0 %v669, %s3989
    %v3991 = vpop.permute.xlu0 %3990
    %s3993 = sor.u32 256, 16
    %3994 = vbcast.lane.b32.xlu0 %v680, %s3993
    %v3995 = vpop.permute.xlu0 %3994
    %s3997 = sor.u32 256, 24
    %3998 = vbcast.lane.b32.xlu0 %v680, %s3997
    %v3999 = vpop.permute.xlu0 %3998
    %s4001 = sor.u32 256, 16
    %4002 = vbcast.lane.b32.xlu0 %v691, %s4001
    %v4003 = vpop.permute.xlu0 %4002
    %s4005 = sor.u32 256, 24
    %4006 = vbcast.lane.b32.xlu0 %v691, %s4005
    %v4007 = vpop.permute.xlu0 %4006
    %s4009 = sor.u32 256, 16
    %4010 = vbcast.lane.b32.xlu0 %v702, %s4009
    %v4011 = vpop.permute.xlu0 %4010
    %s4013 = sor.u32 256, 24
    %4014 = vbcast.lane.b32.xlu0 %v702, %s4013
    %v4015 = vpop.permute.xlu0 %4014
    %s4017 = sor.u32 256, 16
    %4018 = vbcast.lane.b32.xlu0 %v713, %s4017
    %v4019 = vpop.permute.xlu0 %4018
    %s4021 = sor.u32 256, 24
    %4022 = vbcast.lane.b32.xlu0 %v713, %s4021
    %v4023 = vpop.permute.xlu0 %4022
    %v4024 = vcombine.low %v3515, %v3531
    %v4025 = vcombine.high %v3515, %v3531
    %v4027 = vunpack.c.l.s4 1983009808
    %v4028 = vunpack.c.0.s8 %v4027
    %v4029 = vlaneseq
    %v4030 = vshrl.u32 %v4029, 7
    %v4031 = vsub.s32 %v4028, %v4030
    %v4032 = vrot.slane %v4024, %v4031
    %v4034 = vunpack.c.l.s4 1983009808
    %v4035 = vunpack.c.0.s8 %v4034
    %v4036 = vlaneseq
    %v4037 = vshrl.u32 %v4036, 7
    %v4038 = vsub.s32 %v4035, %v4037
    %v4039 = vrot.slane %v4025, %v4038
    %v4040 = vcombine.low %v3523, %v3539
    %v4041 = vcombine.high %v3523, %v3539
    %v4043 = vunpack.c.l.s4 1983009808
    %v4044 = vunpack.c.0.s8 %v4043
    %v4045 = vlaneseq
    %v4046 = vshrl.u32 %v4045, 7
    %v4047 = vsub.s32 %v4044, %v4046
    %v4048 = vrot.slane %v4040, %v4047
    %v4050 = vunpack.c.l.s4 1983009808
    %v4051 = vunpack.c.0.s8 %v4050
    %v4052 = vlaneseq
    %v4053 = vshrl.u32 %v4052, 7
    %v4054 = vsub.s32 %v4051, %v4053
    %v4055 = vrot.slane %v4041, %v4054
    %v4056 = vcombine.low %v3547, %v3563
    %v4057 = vcombine.high %v3547, %v3563
    %v4059 = vunpack.c.l.s4 1983009808
    %v4060 = vunpack.c.0.s8 %v4059
    %v4061 = vlaneseq
    %v4062 = vshrl.u32 %v4061, 7
    %v4063 = vsub.s32 %v4060, %v4062
    %v4064 = vrot.slane %v4056, %v4063
    %v4066 = vunpack.c.l.s4 1983009808
    %v4067 = vunpack.c.0.s8 %v4066
    %v4068 = vlaneseq
    %v4069 = vshrl.u32 %v4068, 7
    %v4070 = vsub.s32 %v4067, %v4069
    %v4071 = vrot.slane %v4057, %v4070
    %v4072 = vcombine.low %v3555, %v3571
    %v4073 = vcombine.high %v3555, %v3571
    %v4075 = vunpack.c.l.s4 1983009808
    %v4076 = vunpack.c.0.s8 %v4075
    %v4077 = vlaneseq
    %v4078 = vshrl.u32 %v4077, 7
    %v4079 = vsub.s32 %v4076, %v4078
    %v4080 = vrot.slane %v4072, %v4079
    %v4082 = vunpack.c.l.s4 1983009808
    %v4083 = vunpack.c.0.s8 %v4082
    %v4084 = vlaneseq
    %v4085 = vshrl.u32 %v4084, 7
    %v4086 = vsub.s32 %v4083, %v4085
    %v4087 = vrot.slane %v4073, %v4086
    %v4088 = vcombine.low %v4032, %v4048
    %v4089 = vcombine.high %v4032, %v4048
    %v4091 = vunpack.c.l.s4 1934713408
    %v4092 = vunpack.c.0.s8 %v4091
    %v4093 = vlaneseq
    %v4094 = vshrl.u32 %v4093, 7
    %v4095 = vsub.s32 %v4092, %v4094
    %v4096 = vrot.slane %v4088, %v4095
    %v4098 = vunpack.c.l.s4 1934713408
    %v4099 = vunpack.c.0.s8 %v4098
    %v4100 = vlaneseq
    %v4101 = vshrl.u32 %v4100, 7
    %v4102 = vsub.s32 %v4099, %v4101
    %v4103 = vrot.slane %v4089, %v4102
    %v4104 = vcombine.low %v4039, %v4055
    %v4105 = vcombine.high %v4039, %v4055
    %v4107 = vunpack.c.l.s4 1934713408
    %v4108 = vunpack.c.0.s8 %v4107
    %v4109 = vlaneseq
    %v4110 = vshrl.u32 %v4109, 7
    %v4111 = vsub.s32 %v4108, %v4110
    %v4112 = vrot.slane %v4104, %v4111
    %v4114 = vunpack.c.l.s4 1934713408
    %v4115 = vunpack.c.0.s8 %v4114
    %v4116 = vlaneseq
    %v4117 = vshrl.u32 %v4116, 7
    %v4118 = vsub.s32 %v4115, %v4117
    %v4119 = vrot.slane %v4105, %v4118
    %v4120 = vcombine.low %v4064, %v4080
    %v4121 = vcombine.high %v4064, %v4080
    %v4123 = vunpack.c.l.s4 1934713408
    %v4124 = vunpack.c.0.s8 %v4123
    %v4125 = vlaneseq
    %v4126 = vshrl.u32 %v4125, 7
    %v4127 = vsub.s32 %v4124, %v4126
    %v4128 = vrot.slane %v4120, %v4127
    %v4130 = vunpack.c.l.s4 1934713408
    %v4131 = vunpack.c.0.s8 %v4130
    %v4132 = vlaneseq
    %v4133 = vshrl.u32 %v4132, 7
    %v4134 = vsub.s32 %v4131, %v4133
    %v4135 = vrot.slane %v4121, %v4134
    %v4136 = vcombine.low %v4071, %v4087
    %v4137 = vcombine.high %v4071, %v4087
    %v4139 = vunpack.c.l.s4 1934713408
    %v4140 = vunpack.c.0.s8 %v4139
    %v4141 = vlaneseq
    %v4142 = vshrl.u32 %v4141, 7
    %v4143 = vsub.s32 %v4140, %v4142
    %v4144 = vrot.slane %v4136, %v4143
    %v4146 = vunpack.c.l.s4 1934713408
    %v4147 = vunpack.c.0.s8 %v4146
    %v4148 = vlaneseq
    %v4149 = vshrl.u32 %v4148, 7
    %v4150 = vsub.s32 %v4147, %v4149
    %v4151 = vrot.slane %v4137, %v4150
    %v4152 = vcombine.low %v4096, %v4128
    %v4153 = vcombine.high %v4096, %v4128
    %v4154 = vcombine.low %v4103, %v4135
    %v4155 = vcombine.high %v4103, %v4135
    %v4156 = vcombine.low %v4112, %v4144
    %v4157 = vcombine.high %v4112, %v4144
    %v4158 = vcombine.low %v4119, %v4151
    %v4159 = vcombine.high %v4119, %v4151
    %v4160 = vcombine.low %v3579, %v3595
    %v4161 = vcombine.high %v3579, %v3595
    %v4163 = vunpack.c.l.s4 1983009808
    %v4164 = vunpack.c.0.s8 %v4163
    %v4165 = vlaneseq
    %v4166 = vshrl.u32 %v4165, 7
    %v4167 = vsub.s32 %v4164, %v4166
    %v4168 = vrot.slane %v4160, %v4167
    %v4170 = vunpack.c.l.s4 1983009808
    %v4171 = vunpack.c.0.s8 %v4170
    %v4172 = vlaneseq
    %v4173 = vshrl.u32 %v4172, 7
    %v4174 = vsub.s32 %v4171, %v4173
    %v4175 = vrot.slane %v4161, %v4174
    %v4176 = vcombine.low %v3587, %v3603
    %v4177 = vcombine.high %v3587, %v3603
    %v4179 = vunpack.c.l.s4 1983009808
    %v4180 = vunpack.c.0.s8 %v4179
    %v4181 = vlaneseq
    %v4182 = vshrl.u32 %v4181, 7
    %v4183 = vsub.s32 %v4180, %v4182
    %v4184 = vrot.slane %v4176, %v4183
    %v4186 = vunpack.c.l.s4 1983009808
    %v4187 = vunpack.c.0.s8 %v4186
    %v4188 = vlaneseq
    %v4189 = vshrl.u32 %v4188, 7
    %v4190 = vsub.s32 %v4187, %v4189
    %v4191 = vrot.slane %v4177, %v4190
    %v4192 = vcombine.low %v3611, %v3627
    %v4193 = vcombine.high %v3611, %v3627
    %v4195 = vunpack.c.l.s4 1983009808
    %v4196 = vunpack.c.0.s8 %v4195
    %v4197 = vlaneseq
    %v4198 = vshrl.u32 %v4197, 7
    %v4199 = vsub.s32 %v4196, %v4198
    %v4200 = vrot.slane %v4192, %v4199
    %v4202 = vunpack.c.l.s4 1983009808
    %v4203 = vunpack.c.0.s8 %v4202
    %v4204 = vlaneseq
    %v4205 = vshrl.u32 %v4204, 7
    %v4206 = vsub.s32 %v4203, %v4205
    %v4207 = vrot.slane %v4193, %v4206
    %v4208 = vcombine.low %v3619, %v3635
    %v4209 = vcombine.high %v3619, %v3635
    %v4211 = vunpack.c.l.s4 1983009808
    %v4212 = vunpack.c.0.s8 %v4211
    %v4213 = vlaneseq
    %v4214 = vshrl.u32 %v4213, 7
    %v4215 = vsub.s32 %v4212, %v4214
    %v4216 = vrot.slane %v4208, %v4215
    %v4218 = vunpack.c.l.s4 1983009808
    %v4219 = vunpack.c.0.s8 %v4218
    %v4220 = vlaneseq
    %v4221 = vshrl.u32 %v4220, 7
    %v4222 = vsub.s32 %v4219, %v4221
    %v4223 = vrot.slane %v4209, %v4222
    %v4224 = vcombine.low %v4168, %v4184
    %v4225 = vcombine.high %v4168, %v4184
    %v4227 = vunpack.c.l.s4 1934713408
    %v4228 = vunpack.c.0.s8 %v4227
    %v4229 = vlaneseq
    %v4230 = vshrl.u32 %v4229, 7
    %v4231 = vsub.s32 %v4228, %v4230
    %v4232 = vrot.slane %v4224, %v4231
    %v4234 = vunpack.c.l.s4 1934713408
    %v4235 = vunpack.c.0.s8 %v4234
    %v4236 = vlaneseq
    %v4237 = vshrl.u32 %v4236, 7
    %v4238 = vsub.s32 %v4235, %v4237
    %v4239 = vrot.slane %v4225, %v4238
    %v4240 = vcombine.low %v4175, %v4191
    %v4241 = vcombine.high %v4175, %v4191
    %v4243 = vunpack.c.l.s4 1934713408
    %v4244 = vunpack.c.0.s8 %v4243
    %v4245 = vlaneseq
    %v4246 = vshrl.u32 %v4245, 7
    %v4247 = vsub.s32 %v4244, %v4246
    %v4248 = vrot.slane %v4240, %v4247
    %v4250 = vunpack.c.l.s4 1934713408
    %v4251 = vunpack.c.0.s8 %v4250
    %v4252 = vlaneseq
    %v4253 = vshrl.u32 %v4252, 7
    %v4254 = vsub.s32 %v4251, %v4253
    %v4255 = vrot.slane %v4241, %v4254
    %v4256 = vcombine.low %v4200, %v4216
    %v4257 = vcombine.high %v4200, %v4216
    %v4259 = vunpack.c.l.s4 1934713408
    %v4260 = vunpack.c.0.s8 %v4259
    %v4261 = vlaneseq
    %v4262 = vshrl.u32 %v4261, 7
    %v4263 = vsub.s32 %v4260, %v4262
    %v4264 = vrot.slane %v4256, %v4263
    %v4266 = vunpack.c.l.s4 1934713408
    %v4267 = vunpack.c.0.s8 %v4266
    %v4268 = vlaneseq
    %v4269 = vshrl.u32 %v4268, 7
    %v4270 = vsub.s32 %v4267, %v4269
    %v4271 = vrot.slane %v4257, %v4270
    %v4272 = vcombine.low %v4207, %v4223
    %v4273 = vcombine.high %v4207, %v4223
    %v4275 = vunpack.c.l.s4 1934713408
    %v4276 = vunpack.c.0.s8 %v4275
    %v4277 = vlaneseq
    %v4278 = vshrl.u32 %v4277, 7
    %v4279 = vsub.s32 %v4276, %v4278
    %v4280 = vrot.slane %v4272, %v4279
    %v4282 = vunpack.c.l.s4 1934713408
    %v4283 = vunpack.c.0.s8 %v4282
    %v4284 = vlaneseq
    %v4285 = vshrl.u32 %v4284, 7
    %v4286 = vsub.s32 %v4283, %v4285
    %v4287 = vrot.slane %v4273, %v4286
    %v4288 = vcombine.low %v4232, %v4264
    %v4289 = vcombine.high %v4232, %v4264
    %v4290 = vcombine.low %v4239, %v4271
    %v4291 = vcombine.high %v4239, %v4271
    %v4292 = vcombine.low %v4248, %v4280
    %v4293 = vcombine.high %v4248, %v4280
    %v4294 = vcombine.low %v4255, %v4287
    %v4295 = vcombine.high %v4255, %v4287
    %v4296 = vcombine.low %v3643, %v3659
    %v4297 = vcombine.high %v3643, %v3659
    %v4299 = vunpack.c.l.s4 1983009808
    %v4300 = vunpack.c.0.s8 %v4299
    %v4301 = vlaneseq
    %v4302 = vshrl.u32 %v4301, 7
    %v4303 = vsub.s32 %v4300, %v4302
    %v4304 = vrot.slane %v4296, %v4303
    %v4306 = vunpack.c.l.s4 1983009808
    %v4307 = vunpack.c.0.s8 %v4306
    %v4308 = vlaneseq
    %v4309 = vshrl.u32 %v4308, 7
    %v4310 = vsub.s32 %v4307, %v4309
    %v4311 = vrot.slane %v4297, %v4310
    %v4312 = vcombine.low %v3651, %v3667
    %v4313 = vcombine.high %v3651, %v3667
    %v4315 = vunpack.c.l.s4 1983009808
    %v4316 = vunpack.c.0.s8 %v4315
    %v4317 = vlaneseq
    %v4318 = vshrl.u32 %v4317, 7
    %v4319 = vsub.s32 %v4316, %v4318
    %v4320 = vrot.slane %v4312, %v4319
    %v4322 = vunpack.c.l.s4 1983009808
    %v4323 = vunpack.c.0.s8 %v4322
    %v4324 = vlaneseq
    %v4325 = vshrl.u32 %v4324, 7
    %v4326 = vsub.s32 %v4323, %v4325
    %v4327 = vrot.slane %v4313, %v4326
    %v4328 = vcombine.low %v3675, %v3691
    %v4329 = vcombine.high %v3675, %v3691
    %v4331 = vunpack.c.l.s4 1983009808
    %v4332 = vunpack.c.0.s8 %v4331
    %v4333 = vlaneseq
    %v4334 = vshrl.u32 %v4333, 7
    %v4335 = vsub.s32 %v4332, %v4334
    %v4336 = vrot.slane %v4328, %v4335
    %v4338 = vunpack.c.l.s4 1983009808
    %v4339 = vunpack.c.0.s8 %v4338
    %v4340 = vlaneseq
    %v4341 = vshrl.u32 %v4340, 7
    %v4342 = vsub.s32 %v4339, %v4341
    %v4343 = vrot.slane %v4329, %v4342
    %v4344 = vcombine.low %v3683, %v3699
    %v4345 = vcombine.high %v3683, %v3699
    %v4347 = vunpack.c.l.s4 1983009808
    %v4348 = vunpack.c.0.s8 %v4347
    %v4349 = vlaneseq
    %v4350 = vshrl.u32 %v4349, 7
    %v4351 = vsub.s32 %v4348, %v4350
    %v4352 = vrot.slane %v4344, %v4351
    %v4354 = vunpack.c.l.s4 1983009808
    %v4355 = vunpack.c.0.s8 %v4354
    %v4356 = vlaneseq
    %v4357 = vshrl.u32 %v4356, 7
    %v4358 = vsub.s32 %v4355, %v4357
    %v4359 = vrot.slane %v4345, %v4358
    %v4360 = vcombine.low %v4304, %v4320
    %v4361 = vcombine.high %v4304, %v4320
    %v4363 = vunpack.c.l.s4 1934713408
    %v4364 = vunpack.c.0.s8 %v4363
    %v4365 = vlaneseq
    %v4366 = vshrl.u32 %v4365, 7
    %v4367 = vsub.s32 %v4364, %v4366
    %v4368 = vrot.slane %v4360, %v4367
    %v4370 = vunpack.c.l.s4 1934713408
    %v4371 = vunpack.c.0.s8 %v4370
    %v4372 = vlaneseq
    %v4373 = vshrl.u32 %v4372, 7
    %v4374 = vsub.s32 %v4371, %v4373
    %v4375 = vrot.slane %v4361, %v4374
    %v4376 = vcombine.low %v4311, %v4327
    %v4377 = vcombine.high %v4311, %v4327
    %v4379 = vunpack.c.l.s4 1934713408
    %v4380 = vunpack.c.0.s8 %v4379
    %v4381 = vlaneseq
    %v4382 = vshrl.u32 %v4381, 7
    %v4383 = vsub.s32 %v4380, %v4382
    %v4384 = vrot.slane %v4376, %v4383
    %v4386 = vunpack.c.l.s4 1934713408
    %v4387 = vunpack.c.0.s8 %v4386
    %v4388 = vlaneseq
    %v4389 = vshrl.u32 %v4388, 7
    %v4390 = vsub.s32 %v4387, %v4389
    %v4391 = vrot.slane %v4377, %v4390
    %v4392 = vcombine.low %v4336, %v4352
    %v4393 = vcombine.high %v4336, %v4352
    %v4395 = vunpack.c.l.s4 1934713408
    %v4396 = vunpack.c.0.s8 %v4395
    %v4397 = vlaneseq
    %v4398 = vshrl.u32 %v4397, 7
    %v4399 = vsub.s32 %v4396, %v4398
    %v4400 = vrot.slane %v4392, %v4399
    %v4402 = vunpack.c.l.s4 1934713408
    %v4403 = vunpack.c.0.s8 %v4402
    %v4404 = vlaneseq
    %v4405 = vshrl.u32 %v4404, 7
    %v4406 = vsub.s32 %v4403, %v4405
    %v4407 = vrot.slane %v4393, %v4406
    %v4408 = vcombine.low %v4343, %v4359
    %v4409 = vcombine.high %v4343, %v4359
    %v4411 = vunpack.c.l.s4 1934713408
    %v4412 = vunpack.c.0.s8 %v4411
    %v4413 = vlaneseq
    %v4414 = vshrl.u32 %v4413, 7
    %v4415 = vsub.s32 %v4412, %v4414
    %v4416 = vrot.slane %v4408, %v4415
    %v4418 = vunpack.c.l.s4 1934713408
    %v4419 = vunpack.c.0.s8 %v4418
    %v4420 = vlaneseq
    %v4421 = vshrl.u32 %v4420, 7
    %v4422 = vsub.s32 %v4419, %v4421
    %v4423 = vrot.slane %v4409, %v4422
    %v4424 = vcombine.low %v4368, %v4400
    %v4425 = vcombine.high %v4368, %v4400
    %v4426 = vcombine.low %v4375, %v4407
    %v4427 = vcombine.high %v4375, %v4407
    %v4428 = vcombine.low %v4384, %v4416
    %v4429 = vcombine.high %v4384, %v4416
    %v4430 = vcombine.low %v4391, %v4423
    %v4431 = vcombine.high %v4391, %v4423
    %v4432 = vcombine.low %v3707, %v3723
    %v4433 = vcombine.high %v3707, %v3723
    %v4435 = vunpack.c.l.s4 1983009808
    %v4436 = vunpack.c.0.s8 %v4435
    %v4437 = vlaneseq
    %v4438 = vshrl.u32 %v4437, 7
    %v4439 = vsub.s32 %v4436, %v4438
    %v4440 = vrot.slane %v4432, %v4439
    %v4442 = vunpack.c.l.s4 1983009808
    %v4443 = vunpack.c.0.s8 %v4442
    %v4444 = vlaneseq
    %v4445 = vshrl.u32 %v4444, 7
    %v4446 = vsub.s32 %v4443, %v4445
    %v4447 = vrot.slane %v4433, %v4446
    %v4448 = vcombine.low %v3715, %v3731
    %v4449 = vcombine.high %v3715, %v3731
    %v4451 = vunpack.c.l.s4 1983009808
    %v4452 = vunpack.c.0.s8 %v4451
    %v4453 = vlaneseq
    %v4454 = vshrl.u32 %v4453, 7
    %v4455 = vsub.s32 %v4452, %v4454
    %v4456 = vrot.slane %v4448, %v4455
    %v4458 = vunpack.c.l.s4 1983009808
    %v4459 = vunpack.c.0.s8 %v4458
    %v4460 = vlaneseq
    %v4461 = vshrl.u32 %v4460, 7
    %v4462 = vsub.s32 %v4459, %v4461
    %v4463 = vrot.slane %v4449, %v4462
    %v4464 = vcombine.low %v3739, %v3755
    %v4465 = vcombine.high %v3739, %v3755
    %v4467 = vunpack.c.l.s4 1983009808
    %v4468 = vunpack.c.0.s8 %v4467
    %v4469 = vlaneseq
    %v4470 = vshrl.u32 %v4469, 7
    %v4471 = vsub.s32 %v4468, %v4470
    %v4472 = vrot.slane %v4464, %v4471
    %v4474 = vunpack.c.l.s4 1983009808
    %v4475 = vunpack.c.0.s8 %v4474
    %v4476 = vlaneseq
    %v4477 = vshrl.u32 %v4476, 7
    %v4478 = vsub.s32 %v4475, %v4477
    %v4479 = vrot.slane %v4465, %v4478
    %v4480 = vcombine.low %v3747, %v3763
    %v4481 = vcombine.high %v3747, %v3763
    %v4483 = vunpack.c.l.s4 1983009808
    %v4484 = vunpack.c.0.s8 %v4483
    %v4485 = vlaneseq
    %v4486 = vshrl.u32 %v4485, 7
    %v4487 = vsub.s32 %v4484, %v4486
    %v4488 = vrot.slane %v4480, %v4487
    %v4490 = vunpack.c.l.s4 1983009808
    %v4491 = vunpack.c.0.s8 %v4490
    %v4492 = vlaneseq
    %v4493 = vshrl.u32 %v4492, 7
    %v4494 = vsub.s32 %v4491, %v4493
    %v4495 = vrot.slane %v4481, %v4494
    %v4496 = vcombine.low %v4440, %v4456
    %v4497 = vcombine.high %v4440, %v4456
    %v4499 = vunpack.c.l.s4 1934713408
    %v4500 = vunpack.c.0.s8 %v4499
    %v4501 = vlaneseq
    %v4502 = vshrl.u32 %v4501, 7
    %v4503 = vsub.s32 %v4500, %v4502
    %v4504 = vrot.slane %v4496, %v4503
    %v4506 = vunpack.c.l.s4 1934713408
    %v4507 = vunpack.c.0.s8 %v4506
    %v4508 = vlaneseq
    %v4509 = vshrl.u32 %v4508, 7
    %v4510 = vsub.s32 %v4507, %v4509
    %v4511 = vrot.slane %v4497, %v4510
    %v4512 = vcombine.low %v4447, %v4463
    %v4513 = vcombine.high %v4447, %v4463
    %v4515 = vunpack.c.l.s4 1934713408
    %v4516 = vunpack.c.0.s8 %v4515
    %v4517 = vlaneseq
    %v4518 = vshrl.u32 %v4517, 7
    %v4519 = vsub.s32 %v4516, %v4518
    %v4520 = vrot.slane %v4512, %v4519
    %v4522 = vunpack.c.l.s4 1934713408
    %v4523 = vunpack.c.0.s8 %v4522
    %v4524 = vlaneseq
    %v4525 = vshrl.u32 %v4524, 7
    %v4526 = vsub.s32 %v4523, %v4525
    %v4527 = vrot.slane %v4513, %v4526
    %v4528 = vcombine.low %v4472, %v4488
    %v4529 = vcombine.high %v4472, %v4488
    %v4531 = vunpack.c.l.s4 1934713408
    %v4532 = vunpack.c.0.s8 %v4531
    %v4533 = vlaneseq
    %v4534 = vshrl.u32 %v4533, 7
    %v4535 = vsub.s32 %v4532, %v4534
    %v4536 = vrot.slane %v4528, %v4535
    %v4538 = vunpack.c.l.s4 1934713408
    %v4539 = vunpack.c.0.s8 %v4538
    %v4540 = vlaneseq
    %v4541 = vshrl.u32 %v4540, 7
    %v4542 = vsub.s32 %v4539, %v4541
    %v4543 = vrot.slane %v4529, %v4542
    %v4544 = vcombine.low %v4479, %v4495
    %v4545 = vcombine.high %v4479, %v4495
    %v4547 = vunpack.c.l.s4 1934713408
    %v4548 = vunpack.c.0.s8 %v4547
    %v4549 = vlaneseq
    %v4550 = vshrl.u32 %v4549, 7
    %v4551 = vsub.s32 %v4548, %v4550
    %v4552 = vrot.slane %v4544, %v4551
    %v4554 = vunpack.c.l.s4 1934713408
    %v4555 = vunpack.c.0.s8 %v4554
    %v4556 = vlaneseq
    %v4557 = vshrl.u32 %v4556, 7
    %v4558 = vsub.s32 %v4555, %v4557
    %v4559 = vrot.slane %v4545, %v4558
    %v4560 = vcombine.low %v4504, %v4536
    %v4561 = vcombine.high %v4504, %v4536
    %v4562 = vcombine.low %v4511, %v4543
    %v4563 = vcombine.high %v4511, %v4543
    %v4564 = vcombine.low %v4520, %v4552
    %v4565 = vcombine.high %v4520, %v4552
    %v4566 = vcombine.low %v4527, %v4559
    %v4567 = vcombine.high %v4527, %v4559
    %v4568 = vcombine.low %v3771, %v3787
    %v4569 = vcombine.high %v3771, %v3787
    %v4571 = vunpack.c.l.s4 1983009808
    %v4572 = vunpack.c.0.s8 %v4571
    %v4573 = vlaneseq
    %v4574 = vshrl.u32 %v4573, 7
    %v4575 = vsub.s32 %v4572, %v4574
    %v4576 = vrot.slane %v4568, %v4575
    %v4578 = vunpack.c.l.s4 1983009808
    %v4579 = vunpack.c.0.s8 %v4578
    %v4580 = vlaneseq
    %v4581 = vshrl.u32 %v4580, 7
    %v4582 = vsub.s32 %v4579, %v4581
    %v4583 = vrot.slane %v4569, %v4582
    %v4584 = vcombine.low %v3779, %v3795
    %v4585 = vcombine.high %v3779, %v3795
    %v4587 = vunpack.c.l.s4 1983009808
    %v4588 = vunpack.c.0.s8 %v4587
    %v4589 = vlaneseq
    %v4590 = vshrl.u32 %v4589, 7
    %v4591 = vsub.s32 %v4588, %v4590
    %v4592 = vrot.slane %v4584, %v4591
    %v4594 = vunpack.c.l.s4 1983009808
    %v4595 = vunpack.c.0.s8 %v4594
    %v4596 = vlaneseq
    %v4597 = vshrl.u32 %v4596, 7
    %v4598 = vsub.s32 %v4595, %v4597
    %v4599 = vrot.slane %v4585, %v4598
    %v4600 = vcombine.low %v3803, %v3819
    %v4601 = vcombine.high %v3803, %v3819
    %v4603 = vunpack.c.l.s4 1983009808
    %v4604 = vunpack.c.0.s8 %v4603
    %v4605 = vlaneseq
    %v4606 = vshrl.u32 %v4605, 7
    %v4607 = vsub.s32 %v4604, %v4606
    %v4608 = vrot.slane %v4600, %v4607
    %v4610 = vunpack.c.l.s4 1983009808
    %v4611 = vunpack.c.0.s8 %v4610
    %v4612 = vlaneseq
    %v4613 = vshrl.u32 %v4612, 7
    %v4614 = vsub.s32 %v4611, %v4613
    %v4615 = vrot.slane %v4601, %v4614
    %v4616 = vcombine.low %v3811, %v3827
    %v4617 = vcombine.high %v3811, %v3827
    %v4619 = vunpack.c.l.s4 1983009808
    %v4620 = vunpack.c.0.s8 %v4619
    %v4621 = vlaneseq
    %v4622 = vshrl.u32 %v4621, 7
    %v4623 = vsub.s32 %v4620, %v4622
    %v4624 = vrot.slane %v4616, %v4623
    %v4626 = vunpack.c.l.s4 1983009808
    %v4627 = vunpack.c.0.s8 %v4626
    %v4628 = vlaneseq
    %v4629 = vshrl.u32 %v4628, 7
    %v4630 = vsub.s32 %v4627, %v4629
    %v4631 = vrot.slane %v4617, %v4630
    %v4632 = vcombine.low %v4576, %v4592
    %v4633 = vcombine.high %v4576, %v4592
    %v4635 = vunpack.c.l.s4 1934713408
    %v4636 = vunpack.c.0.s8 %v4635
    %v4637 = vlaneseq
    %v4638 = vshrl.u32 %v4637, 7
    %v4639 = vsub.s32 %v4636, %v4638
    %v4640 = vrot.slane %v4632, %v4639
    %v4642 = vunpack.c.l.s4 1934713408
    %v4643 = vunpack.c.0.s8 %v4642
    %v4644 = vlaneseq
    %v4645 = vshrl.u32 %v4644, 7
    %v4646 = vsub.s32 %v4643, %v4645
    %v4647 = vrot.slane %v4633, %v4646
    %v4648 = vcombine.low %v4583, %v4599
    %v4649 = vcombine.high %v4583, %v4599
    %v4651 = vunpack.c.l.s4 1934713408
    %v4652 = vunpack.c.0.s8 %v4651
    %v4653 = vlaneseq
    %v4654 = vshrl.u32 %v4653, 7
    %v4655 = vsub.s32 %v4652, %v4654
    %v4656 = vrot.slane %v4648, %v4655
    %v4658 = vunpack.c.l.s4 1934713408
    %v4659 = vunpack.c.0.s8 %v4658
    %v4660 = vlaneseq
    %v4661 = vshrl.u32 %v4660, 7
    %v4662 = vsub.s32 %v4659, %v4661
    %v4663 = vrot.slane %v4649, %v4662
    %v4664 = vcombine.low %v4608, %v4624
    %v4665 = vcombine.high %v4608, %v4624
    %v4667 = vunpack.c.l.s4 1934713408
    %v4668 = vunpack.c.0.s8 %v4667
    %v4669 = vlaneseq
    %v4670 = vshrl.u32 %v4669, 7
    %v4671 = vsub.s32 %v4668, %v4670
    %v4672 = vrot.slane %v4664, %v4671
    %v4674 = vunpack.c.l.s4 1934713408
    %v4675 = vunpack.c.0.s8 %v4674
    %v4676 = vlaneseq
    %v4677 = vshrl.u32 %v4676, 7
    %v4678 = vsub.s32 %v4675, %v4677
    %v4679 = vrot.slane %v4665, %v4678
    %v4680 = vcombine.low %v4615, %v4631
    %v4681 = vcombine.high %v4615, %v4631
    %v4683 = vunpack.c.l.s4 1934713408
    %v4684 = vunpack.c.0.s8 %v4683
    %v4685 = vlaneseq
    %v4686 = vshrl.u32 %v4685, 7
    %v4687 = vsub.s32 %v4684, %v4686
    %v4688 = vrot.slane %v4680, %v4687
    %v4690 = vunpack.c.l.s4 1934713408
    %v4691 = vunpack.c.0.s8 %v4690
    %v4692 = vlaneseq
    %v4693 = vshrl.u32 %v4692, 7
    %v4694 = vsub.s32 %v4691, %v4693
    %v4695 = vrot.slane %v4681, %v4694
    %v4696 = vcombine.low %v4640, %v4672
    %v4697 = vcombine.high %v4640, %v4672
    %v4698 = vcombine.low %v4647, %v4679
    %v4699 = vcombine.high %v4647, %v4679
    %v4700 = vcombine.low %v4656, %v4688
    %v4701 = vcombine.high %v4656, %v4688
    %v4702 = vcombine.low %v4663, %v4695
    %v4703 = vcombine.high %v4663, %v4695
    %v4704 = vcombine.low %v3835, %v3851
    %v4705 = vcombine.high %v3835, %v3851
    %v4707 = vunpack.c.l.s4 1983009808
    %v4708 = vunpack.c.0.s8 %v4707
    %v4709 = vlaneseq
    %v4710 = vshrl.u32 %v4709, 7
    %v4711 = vsub.s32 %v4708, %v4710
    %v4712 = vrot.slane %v4704, %v4711
    %v4714 = vunpack.c.l.s4 1983009808
    %v4715 = vunpack.c.0.s8 %v4714
    %v4716 = vlaneseq
    %v4717 = vshrl.u32 %v4716, 7
    %v4718 = vsub.s32 %v4715, %v4717
    %v4719 = vrot.slane %v4705, %v4718
    %v4720 = vcombine.low %v3843, %v3859
    %v4721 = vcombine.high %v3843, %v3859
    %v4723 = vunpack.c.l.s4 1983009808
    %v4724 = vunpack.c.0.s8 %v4723
    %v4725 = vlaneseq
    %v4726 = vshrl.u32 %v4725, 7
    %v4727 = vsub.s32 %v4724, %v4726
    %v4728 = vrot.slane %v4720, %v4727
    %v4730 = vunpack.c.l.s4 1983009808
    %v4731 = vunpack.c.0.s8 %v4730
    %v4732 = vlaneseq
    %v4733 = vshrl.u32 %v4732, 7
    %v4734 = vsub.s32 %v4731, %v4733
    %v4735 = vrot.slane %v4721, %v4734
    %v4736 = vcombine.low %v3867, %v3883
    %v4737 = vcombine.high %v3867, %v3883
    %v4739 = vunpack.c.l.s4 1983009808
    %v4740 = vunpack.c.0.s8 %v4739
    %v4741 = vlaneseq
    %v4742 = vshrl.u32 %v4741, 7
    %v4743 = vsub.s32 %v4740, %v4742
    %v4744 = vrot.slane %v4736, %v4743
    %v4746 = vunpack.c.l.s4 1983009808
    %v4747 = vunpack.c.0.s8 %v4746
    %v4748 = vlaneseq
    %v4749 = vshrl.u32 %v4748, 7
    %v4750 = vsub.s32 %v4747, %v4749
    %v4751 = vrot.slane %v4737, %v4750
    %v4752 = vcombine.low %v3875, %v3891
    %v4753 = vcombine.high %v3875, %v3891
    %v4755 = vunpack.c.l.s4 1983009808
    %v4756 = vunpack.c.0.s8 %v4755
    %v4757 = vlaneseq
    %v4758 = vshrl.u32 %v4757, 7
    %v4759 = vsub.s32 %v4756, %v4758
    %v4760 = vrot.slane %v4752, %v4759
    %v4762 = vunpack.c.l.s4 1983009808
    %v4763 = vunpack.c.0.s8 %v4762
    %v4764 = vlaneseq
    %v4765 = vshrl.u32 %v4764, 7
    %v4766 = vsub.s32 %v4763, %v4765
    %v4767 = vrot.slane %v4753, %v4766
    %v4768 = vcombine.low %v4712, %v4728
    %v4769 = vcombine.high %v4712, %v4728
    %v4771 = vunpack.c.l.s4 1934713408
    %v4772 = vunpack.c.0.s8 %v4771
    %v4773 = vlaneseq
    %v4774 = vshrl.u32 %v4773, 7
    %v4775 = vsub.s32 %v4772, %v4774
    %v4776 = vrot.slane %v4768, %v4775
    %v4778 = vunpack.c.l.s4 1934713408
    %v4779 = vunpack.c.0.s8 %v4778
    %v4780 = vlaneseq
    %v4781 = vshrl.u32 %v4780, 7
    %v4782 = vsub.s32 %v4779, %v4781
    %v4783 = vrot.slane %v4769, %v4782
    %v4784 = vcombine.low %v4719, %v4735
    %v4785 = vcombine.high %v4719, %v4735
    %v4787 = vunpack.c.l.s4 1934713408
    %v4788 = vunpack.c.0.s8 %v4787
    %v4789 = vlaneseq
    %v4790 = vshrl.u32 %v4789, 7
    %v4791 = vsub.s32 %v4788, %v4790
    %v4792 = vrot.slane %v4784, %v4791
    %v4794 = vunpack.c.l.s4 1934713408
    %v4795 = vunpack.c.0.s8 %v4794
    %v4796 = vlaneseq
    %v4797 = vshrl.u32 %v4796, 7
    %v4798 = vsub.s32 %v4795, %v4797
    %v4799 = vrot.slane %v4785, %v4798
    %v4800 = vcombine.low %v4744, %v4760
    %v4801 = vcombine.high %v4744, %v4760
    %v4803 = vunpack.c.l.s4 1934713408
    %v4804 = vunpack.c.0.s8 %v4803
    %v4805 = vlaneseq
    %v4806 = vshrl.u32 %v4805, 7
    %v4807 = vsub.s32 %v4804, %v4806
    %v4808 = vrot.slane %v4800, %v4807
    %v4810 = vunpack.c.l.s4 1934713408
    %v4811 = vunpack.c.0.s8 %v4810
    %v4812 = vlaneseq
    %v4813 = vshrl.u32 %v4812, 7
    %v4814 = vsub.s32 %v4811, %v4813
    %v4815 = vrot.slane %v4801, %v4814
    %v4816 = vcombine.low %v4751, %v4767
    %v4817 = vcombine.high %v4751, %v4767
    %v4819 = vunpack.c.l.s4 1934713408
    %v4820 = vunpack.c.0.s8 %v4819
    %v4821 = vlaneseq
    %v4822 = vshrl.u32 %v4821, 7
    %v4823 = vsub.s32 %v4820, %v4822
    %v4824 = vrot.slane %v4816, %v4823
    %v4826 = vunpack.c.l.s4 1934713408
    %v4827 = vunpack.c.0.s8 %v4826
    %v4828 = vlaneseq
    %v4829 = vshrl.u32 %v4828, 7
    %v4830 = vsub.s32 %v4827, %v4829
    %v4831 = vrot.slane %v4817, %v4830
    %v4832 = vcombine.low %v4776, %v4808
    %v4833 = vcombine.high %v4776, %v4808
    %v4834 = vcombine.low %v4783, %v4815
    %v4835 = vcombine.high %v4783, %v4815
    %v4836 = vcombine.low %v4792, %v4824
    %v4837 = vcombine.high %v4792, %v4824
    %v4838 = vcombine.low %v4799, %v4831
    %v4839 = vcombine.high %v4799, %v4831
    %v4840 = vcombine.low %v3899, %v3915
    %v4841 = vcombine.high %v3899, %v3915
    %v4843 = vunpack.c.l.s4 1983009808
    %v4844 = vunpack.c.0.s8 %v4843
    %v4845 = vlaneseq
    %v4846 = vshrl.u32 %v4845, 7
    %v4847 = vsub.s32 %v4844, %v4846
    %v4848 = vrot.slane %v4840, %v4847
    %v4850 = vunpack.c.l.s4 1983009808
    %v4851 = vunpack.c.0.s8 %v4850
    %v4852 = vlaneseq
    %v4853 = vshrl.u32 %v4852, 7
    %v4854 = vsub.s32 %v4851, %v4853
    %v4855 = vrot.slane %v4841, %v4854
    %v4856 = vcombine.low %v3907, %v3923
    %v4857 = vcombine.high %v3907, %v3923
    %v4859 = vunpack.c.l.s4 1983009808
    %v4860 = vunpack.c.0.s8 %v4859
    %v4861 = vlaneseq
    %v4862 = vshrl.u32 %v4861, 7
    %v4863 = vsub.s32 %v4860, %v4862
    %v4864 = vrot.slane %v4856, %v4863
    %v4866 = vunpack.c.l.s4 1983009808
    %v4867 = vunpack.c.0.s8 %v4866
    %v4868 = vlaneseq
    %v4869 = vshrl.u32 %v4868, 7
    %v4870 = vsub.s32 %v4867, %v4869
    %v4871 = vrot.slane %v4857, %v4870
    %v4872 = vcombine.low %v3931, %v3947
    %v4873 = vcombine.high %v3931, %v3947
    %v4875 = vunpack.c.l.s4 1983009808
    %v4876 = vunpack.c.0.s8 %v4875
    %v4877 = vlaneseq
    %v4878 = vshrl.u32 %v4877, 7
    %v4879 = vsub.s32 %v4876, %v4878
    %v4880 = vrot.slane %v4872, %v4879
    %v4882 = vunpack.c.l.s4 1983009808
    %v4883 = vunpack.c.0.s8 %v4882
    %v4884 = vlaneseq
    %v4885 = vshrl.u32 %v4884, 7
    %v4886 = vsub.s32 %v4883, %v4885
    %v4887 = vrot.slane %v4873, %v4886
    %v4888 = vcombine.low %v3939, %v3955
    %v4889 = vcombine.high %v3939, %v3955
    %v4891 = vunpack.c.l.s4 1983009808
    %v4892 = vunpack.c.0.s8 %v4891
    %v4893 = vlaneseq
    %v4894 = vshrl.u32 %v4893, 7
    %v4895 = vsub.s32 %v4892, %v4894
    %v4896 = vrot.slane %v4888, %v4895
    %v4898 = vunpack.c.l.s4 1983009808
    %v4899 = vunpack.c.0.s8 %v4898
    %v4900 = vlaneseq
    %v4901 = vshrl.u32 %v4900, 7
    %v4902 = vsub.s32 %v4899, %v4901
    %v4903 = vrot.slane %v4889, %v4902
    %v4904 = vcombine.low %v4848, %v4864
    %v4905 = vcombine.high %v4848, %v4864
    %v4907 = vunpack.c.l.s4 1934713408
    %v4908 = vunpack.c.0.s8 %v4907
    %v4909 = vlaneseq
    %v4910 = vshrl.u32 %v4909, 7
    %v4911 = vsub.s32 %v4908, %v4910
    %v4912 = vrot.slane %v4904, %v4911
    %v4914 = vunpack.c.l.s4 1934713408
    %v4915 = vunpack.c.0.s8 %v4914
    %v4916 = vlaneseq
    %v4917 = vshrl.u32 %v4916, 7
    %v4918 = vsub.s32 %v4915, %v4917
    %v4919 = vrot.slane %v4905, %v4918
    %v4920 = vcombine.low %v4855, %v4871
    %v4921 = vcombine.high %v4855, %v4871
    %v4923 = vunpack.c.l.s4 1934713408
    %v4924 = vunpack.c.0.s8 %v4923
    %v4925 = vlaneseq
    %v4926 = vshrl.u32 %v4925, 7
    %v4927 = vsub.s32 %v4924, %v4926
    %v4928 = vrot.slane %v4920, %v4927
    %v4930 = vunpack.c.l.s4 1934713408
    %v4931 = vunpack.c.0.s8 %v4930
    %v4932 = vlaneseq
    %v4933 = vshrl.u32 %v4932, 7
    %v4934 = vsub.s32 %v4931, %v4933
    %v4935 = vrot.slane %v4921, %v4934
    %v4936 = vcombine.low %v4880, %v4896
    %v4937 = vcombine.high %v4880, %v4896
    %v4939 = vunpack.c.l.s4 1934713408
    %v4940 = vunpack.c.0.s8 %v4939
    %v4941 = vlaneseq
    %v4942 = vshrl.u32 %v4941, 7
    %v4943 = vsub.s32 %v4940, %v4942
    %v4944 = vrot.slane %v4936, %v4943
    %v4946 = vunpack.c.l.s4 1934713408
    %v4947 = vunpack.c.0.s8 %v4946
    %v4948 = vlaneseq
    %v4949 = vshrl.u32 %v4948, 7
    %v4950 = vsub.s32 %v4947, %v4949
    %v4951 = vrot.slane %v4937, %v4950
    %v4952 = vcombine.low %v4887, %v4903
    %v4953 = vcombine.high %v4887, %v4903
    %v4955 = vunpack.c.l.s4 1934713408
    %v4956 = vunpack.c.0.s8 %v4955
    %v4957 = vlaneseq
    %v4958 = vshrl.u32 %v4957, 7
    %v4959 = vsub.s32 %v4956, %v4958
    %v4960 = vrot.slane %v4952, %v4959
    %v4962 = vunpack.c.l.s4 1934713408
    %v4963 = vunpack.c.0.s8 %v4962
    %v4964 = vlaneseq
    %v4965 = vshrl.u32 %v4964, 7
    %v4966 = vsub.s32 %v4963, %v4965
    %v4967 = vrot.slane %v4953, %v4966
    %v4968 = vcombine.low %v4912, %v4944
    %v4969 = vcombine.high %v4912, %v4944
    %v4970 = vcombine.low %v4919, %v4951
    %v4971 = vcombine.high %v4919, %v4951
    %v4972 = vcombine.low %v4928, %v4960
    %v4973 = vcombine.high %v4928, %v4960
    %v4974 = vcombine.low %v4935, %v4967
    %v4975 = vcombine.high %v4935, %v4967
    %v4976 = vcombine.low %v3963, %v3979
    %v4977 = vcombine.high %v3963, %v3979
    %v4979 = vunpack.c.l.s4 1983009808
    %v4980 = vunpack.c.0.s8 %v4979
    %v4981 = vlaneseq
    %v4982 = vshrl.u32 %v4981, 7
    %v4983 = vsub.s32 %v4980, %v4982
    %v4984 = vrot.slane %v4976, %v4983
    %v4986 = vunpack.c.l.s4 1983009808
    %v4987 = vunpack.c.0.s8 %v4986
    %v4988 = vlaneseq
    %v4989 = vshrl.u32 %v4988, 7
    %v4990 = vsub.s32 %v4987, %v4989
    %v4991 = vrot.slane %v4977, %v4990
    %v4992 = vcombine.low %v3971, %v3987
    %v4993 = vcombine.high %v3971, %v3987
    %v4995 = vunpack.c.l.s4 1983009808
    %v4996 = vunpack.c.0.s8 %v4995
    %v4997 = vlaneseq
    %v4998 = vshrl.u32 %v4997, 7
    %v4999 = vsub.s32 %v4996, %v4998
    %v5000 = vrot.slane %v4992, %v4999
    %v5002 = vunpack.c.l.s4 1983009808
    %v5003 = vunpack.c.0.s8 %v5002
    %v5004 = vlaneseq
    %v5005 = vshrl.u32 %v5004, 7
    %v5006 = vsub.s32 %v5003, %v5005
    %v5007 = vrot.slane %v4993, %v5006
    %v5008 = vcombine.low %v3995, %v4011
    %v5009 = vcombine.high %v3995, %v4011
    %v5011 = vunpack.c.l.s4 1983009808
    %v5012 = vunpack.c.0.s8 %v5011
    %v5013 = vlaneseq
    %v5014 = vshrl.u32 %v5013, 7
    %v5015 = vsub.s32 %v5012, %v5014
    %v5016 = vrot.slane %v5008, %v5015
    %v5018 = vunpack.c.l.s4 1983009808
    %v5019 = vunpack.c.0.s8 %v5018
    %v5020 = vlaneseq
    %v5021 = vshrl.u32 %v5020, 7
    %v5022 = vsub.s32 %v5019, %v5021
    %v5023 = vrot.slane %v5009, %v5022
    %v5024 = vcombine.low %v4003, %v4019
    %v5025 = vcombine.high %v4003, %v4019
    %v5027 = vunpack.c.l.s4 1983009808
    %v5028 = vunpack.c.0.s8 %v5027
    %v5029 = vlaneseq
    %v5030 = vshrl.u32 %v5029, 7
    %v5031 = vsub.s32 %v5028, %v5030
    %v5032 = vrot.slane %v5024, %v5031
    %v5034 = vunpack.c.l.s4 1983009808
    %v5035 = vunpack.c.0.s8 %v5034
    %v5036 = vlaneseq
    %v5037 = vshrl.u32 %v5036, 7
    %v5038 = vsub.s32 %v5035, %v5037
    %v5039 = vrot.slane %v5025, %v5038
    %v5040 = vcombine.low %v4984, %v5000
    %v5041 = vcombine.high %v4984, %v5000
    %v5043 = vunpack.c.l.s4 1934713408
    %v5044 = vunpack.c.0.s8 %v5043
    %v5045 = vlaneseq
    %v5046 = vshrl.u32 %v5045, 7
    %v5047 = vsub.s32 %v5044, %v5046
    %v5048 = vrot.slane %v5040, %v5047
    %v5050 = vunpack.c.l.s4 1934713408
    %v5051 = vunpack.c.0.s8 %v5050
    %v5052 = vlaneseq
    %v5053 = vshrl.u32 %v5052, 7
    %v5054 = vsub.s32 %v5051, %v5053
    %v5055 = vrot.slane %v5041, %v5054
    %v5056 = vcombine.low %v4991, %v5007
    %v5057 = vcombine.high %v4991, %v5007
    %v5059 = vunpack.c.l.s4 1934713408
    %v5060 = vunpack.c.0.s8 %v5059
    %v5061 = vlaneseq
    %v5062 = vshrl.u32 %v5061, 7
    %v5063 = vsub.s32 %v5060, %v5062
    %v5064 = vrot.slane %v5056, %v5063
    %v5066 = vunpack.c.l.s4 1934713408
    %v5067 = vunpack.c.0.s8 %v5066
    %v5068 = vlaneseq
    %v5069 = vshrl.u32 %v5068, 7
    %v5070 = vsub.s32 %v5067, %v5069
    %v5071 = vrot.slane %v5057, %v5070
    %v5072 = vcombine.low %v5016, %v5032
    %v5073 = vcombine.high %v5016, %v5032
    %v5075 = vunpack.c.l.s4 1934713408
    %v5076 = vunpack.c.0.s8 %v5075
    %v5077 = vlaneseq
    %v5078 = vshrl.u32 %v5077, 7
    %v5079 = vsub.s32 %v5076, %v5078
    %v5080 = vrot.slane %v5072, %v5079
    %v5082 = vunpack.c.l.s4 1934713408
    %v5083 = vunpack.c.0.s8 %v5082
    %v5084 = vlaneseq
    %v5085 = vshrl.u32 %v5084, 7
    %v5086 = vsub.s32 %v5083, %v5085
    %v5087 = vrot.slane %v5073, %v5086
    %v5088 = vcombine.low %v5023, %v5039
    %v5089 = vcombine.high %v5023, %v5039
    %v5091 = vunpack.c.l.s4 1934713408
    %v5092 = vunpack.c.0.s8 %v5091
    %v5093 = vlaneseq
    %v5094 = vshrl.u32 %v5093, 7
    %v5095 = vsub.s32 %v5092, %v5094
    %v5096 = vrot.slane %v5088, %v5095
    %v5098 = vunpack.c.l.s4 1934713408
    %v5099 = vunpack.c.0.s8 %v5098
    %v5100 = vlaneseq
    %v5101 = vshrl.u32 %v5100, 7
    %v5102 = vsub.s32 %v5099, %v5101
    %v5103 = vrot.slane %v5089, %v5102
    %v5104 = vcombine.low %v5048, %v5080
    %v5105 = vcombine.high %v5048, %v5080
    %v5106 = vcombine.low %v5055, %v5087
    %v5107 = vcombine.high %v5055, %v5087
    %v5108 = vcombine.low %v5064, %v5096
    %v5109 = vcombine.high %v5064, %v5096
    %v5110 = vcombine.low %v5071, %v5103
    %v5111 = vcombine.high %v5071, %v5103
    %v5112 = vcombine.low %v3519, %v3535
    %v5113 = vcombine.high %v3519, %v3535
    %v5115 = vunpack.c.l.s4 1983009808
    %v5116 = vunpack.c.0.s8 %v5115
    %v5117 = vlaneseq
    %v5118 = vshrl.u32 %v5117, 7
    %v5119 = vsub.s32 %v5116, %v5118
    %v5120 = vrot.slane %v5112, %v5119
    %v5122 = vunpack.c.l.s4 1983009808
    %v5123 = vunpack.c.0.s8 %v5122
    %v5124 = vlaneseq
    %v5125 = vshrl.u32 %v5124, 7
    %v5126 = vsub.s32 %v5123, %v5125
    %v5127 = vrot.slane %v5113, %v5126
    %v5128 = vcombine.low %v3527, %v3543
    %v5129 = vcombine.high %v3527, %v3543
    %v5131 = vunpack.c.l.s4 1983009808
    %v5132 = vunpack.c.0.s8 %v5131
    %v5133 = vlaneseq
    %v5134 = vshrl.u32 %v5133, 7
    %v5135 = vsub.s32 %v5132, %v5134
    %v5136 = vrot.slane %v5128, %v5135
    %v5138 = vunpack.c.l.s4 1983009808
    %v5139 = vunpack.c.0.s8 %v5138
    %v5140 = vlaneseq
    %v5141 = vshrl.u32 %v5140, 7
    %v5142 = vsub.s32 %v5139, %v5141
    %v5143 = vrot.slane %v5129, %v5142
    %v5144 = vcombine.low %v3551, %v3567
    %v5145 = vcombine.high %v3551, %v3567
    %v5147 = vunpack.c.l.s4 1983009808
    %v5148 = vunpack.c.0.s8 %v5147
    %v5149 = vlaneseq
    %v5150 = vshrl.u32 %v5149, 7
    %v5151 = vsub.s32 %v5148, %v5150
    %v5152 = vrot.slane %v5144, %v5151
    %v5154 = vunpack.c.l.s4 1983009808
    %v5155 = vunpack.c.0.s8 %v5154
    %v5156 = vlaneseq
    %v5157 = vshrl.u32 %v5156, 7
    %v5158 = vsub.s32 %v5155, %v5157
    %v5159 = vrot.slane %v5145, %v5158
    %v5160 = vcombine.low %v3559, %v3575
    %v5161 = vcombine.high %v3559, %v3575
    %v5163 = vunpack.c.l.s4 1983009808
    %v5164 = vunpack.c.0.s8 %v5163
    %v5165 = vlaneseq
    %v5166 = vshrl.u32 %v5165, 7
    %v5167 = vsub.s32 %v5164, %v5166
    %v5168 = vrot.slane %v5160, %v5167
    %v5170 = vunpack.c.l.s4 1983009808
    %v5171 = vunpack.c.0.s8 %v5170
    %v5172 = vlaneseq
    %v5173 = vshrl.u32 %v5172, 7
    %v5174 = vsub.s32 %v5171, %v5173
    %v5175 = vrot.slane %v5161, %v5174
    %v5176 = vcombine.low %v5120, %v5136
    %v5177 = vcombine.high %v5120, %v5136
    %v5179 = vunpack.c.l.s4 1934713408
    %v5180 = vunpack.c.0.s8 %v5179
    %v5181 = vlaneseq
    %v5182 = vshrl.u32 %v5181, 7
    %v5183 = vsub.s32 %v5180, %v5182
    %v5184 = vrot.slane %v5176, %v5183
    %v5186 = vunpack.c.l.s4 1934713408
    %v5187 = vunpack.c.0.s8 %v5186
    %v5188 = vlaneseq
    %v5189 = vshrl.u32 %v5188, 7
    %v5190 = vsub.s32 %v5187, %v5189
    %v5191 = vrot.slane %v5177, %v5190
    %v5192 = vcombine.low %v5127, %v5143
    %v5193 = vcombine.high %v5127, %v5143
    %v5195 = vunpack.c.l.s4 1934713408
    %v5196 = vunpack.c.0.s8 %v5195
    %v5197 = vlaneseq
    %v5198 = vshrl.u32 %v5197, 7
    %v5199 = vsub.s32 %v5196, %v5198
    %v5200 = vrot.slane %v5192, %v5199
    %v5202 = vunpack.c.l.s4 1934713408
    %v5203 = vunpack.c.0.s8 %v5202
    %v5204 = vlaneseq
    %v5205 = vshrl.u32 %v5204, 7
    %v5206 = vsub.s32 %v5203, %v5205
    %v5207 = vrot.slane %v5193, %v5206
    %v5208 = vcombine.low %v5152, %v5168
    %v5209 = vcombine.high %v5152, %v5168
    %v5211 = vunpack.c.l.s4 1934713408
    %v5212 = vunpack.c.0.s8 %v5211
    %v5213 = vlaneseq
    %v5214 = vshrl.u32 %v5213, 7
    %v5215 = vsub.s32 %v5212, %v5214
    %v5216 = vrot.slane %v5208, %v5215
    %v5218 = vunpack.c.l.s4 1934713408
    %v5219 = vunpack.c.0.s8 %v5218
    %v5220 = vlaneseq
    %v5221 = vshrl.u32 %v5220, 7
    %v5222 = vsub.s32 %v5219, %v5221
    %v5223 = vrot.slane %v5209, %v5222
    %v5224 = vcombine.low %v5159, %v5175
    %v5225 = vcombine.high %v5159, %v5175
    %v5227 = vunpack.c.l.s4 1934713408
    %v5228 = vunpack.c.0.s8 %v5227
    %v5229 = vlaneseq
    %v5230 = vshrl.u32 %v5229, 7
    %v5231 = vsub.s32 %v5228, %v5230
    %v5232 = vrot.slane %v5224, %v5231
    %v5234 = vunpack.c.l.s4 1934713408
    %v5235 = vunpack.c.0.s8 %v5234
    %v5236 = vlaneseq
    %v5237 = vshrl.u32 %v5236, 7
    %v5238 = vsub.s32 %v5235, %v5237
    %v5239 = vrot.slane %v5225, %v5238
    %v5240 = vcombine.low %v5184, %v5216
    %v5241 = vcombine.high %v5184, %v5216
    %v5242 = vcombine.low %v5191, %v5223
    %v5243 = vcombine.high %v5191, %v5223
    %v5244 = vcombine.low %v5200, %v5232
    %v5245 = vcombine.high %v5200, %v5232
    %v5246 = vcombine.low %v5207, %v5239
    %v5247 = vcombine.high %v5207, %v5239
    %v5248 = vcombine.low %v3583, %v3599
    %v5249 = vcombine.high %v3583, %v3599
    %v5251 = vunpack.c.l.s4 1983009808
    %v5252 = vunpack.c.0.s8 %v5251
    %v5253 = vlaneseq
    %v5254 = vshrl.u32 %v5253, 7
    %v5255 = vsub.s32 %v5252, %v5254
    %v5256 = vrot.slane %v5248, %v5255
    %v5258 = vunpack.c.l.s4 1983009808
    %v5259 = vunpack.c.0.s8 %v5258
    %v5260 = vlaneseq
    %v5261 = vshrl.u32 %v5260, 7
    %v5262 = vsub.s32 %v5259, %v5261
    %v5263 = vrot.slane %v5249, %v5262
    %v5264 = vcombine.low %v3591, %v3607
    %v5265 = vcombine.high %v3591, %v3607
    %v5267 = vunpack.c.l.s4 1983009808
    %v5268 = vunpack.c.0.s8 %v5267
    %v5269 = vlaneseq
    %v5270 = vshrl.u32 %v5269, 7
    %v5271 = vsub.s32 %v5268, %v5270
    %v5272 = vrot.slane %v5264, %v5271
    %v5274 = vunpack.c.l.s4 1983009808
    %v5275 = vunpack.c.0.s8 %v5274
    %v5276 = vlaneseq
    %v5277 = vshrl.u32 %v5276, 7
    %v5278 = vsub.s32 %v5275, %v5277
    %v5279 = vrot.slane %v5265, %v5278
    %v5280 = vcombine.low %v3615, %v3631
    %v5281 = vcombine.high %v3615, %v3631
    %v5283 = vunpack.c.l.s4 1983009808
    %v5284 = vunpack.c.0.s8 %v5283
    %v5285 = vlaneseq
    %v5286 = vshrl.u32 %v5285, 7
    %v5287 = vsub.s32 %v5284, %v5286
    %v5288 = vrot.slane %v5280, %v5287
    %v5290 = vunpack.c.l.s4 1983009808
    %v5291 = vunpack.c.0.s8 %v5290
    %v5292 = vlaneseq
    %v5293 = vshrl.u32 %v5292, 7
    %v5294 = vsub.s32 %v5291, %v5293
    %v5295 = vrot.slane %v5281, %v5294
    %v5296 = vcombine.low %v3623, %v3639
    %v5297 = vcombine.high %v3623, %v3639
    %v5299 = vunpack.c.l.s4 1983009808
    %v5300 = vunpack.c.0.s8 %v5299
    %v5301 = vlaneseq
    %v5302 = vshrl.u32 %v5301, 7
    %v5303 = vsub.s32 %v5300, %v5302
    %v5304 = vrot.slane %v5296, %v5303
    %v5306 = vunpack.c.l.s4 1983009808
    %v5307 = vunpack.c.0.s8 %v5306
    %v5308 = vlaneseq
    %v5309 = vshrl.u32 %v5308, 7
    %v5310 = vsub.s32 %v5307, %v5309
    %v5311 = vrot.slane %v5297, %v5310
    %v5312 = vcombine.low %v5256, %v5272
    %v5313 = vcombine.high %v5256, %v5272
    %v5315 = vunpack.c.l.s4 1934713408
    %v5316 = vunpack.c.0.s8 %v5315
    %v5317 = vlaneseq
    %v5318 = vshrl.u32 %v5317, 7
    %v5319 = vsub.s32 %v5316, %v5318
    %v5320 = vrot.slane %v5312, %v5319
    %v5322 = vunpack.c.l.s4 1934713408
    %v5323 = vunpack.c.0.s8 %v5322
    %v5324 = vlaneseq
    %v5325 = vshrl.u32 %v5324, 7
    %v5326 = vsub.s32 %v5323, %v5325
    %v5327 = vrot.slane %v5313, %v5326
    %v5328 = vcombine.low %v5263, %v5279
    %v5329 = vcombine.high %v5263, %v5279
    %v5331 = vunpack.c.l.s4 1934713408
    %v5332 = vunpack.c.0.s8 %v5331
    %v5333 = vlaneseq
    %v5334 = vshrl.u32 %v5333, 7
    %v5335 = vsub.s32 %v5332, %v5334
    %v5336 = vrot.slane %v5328, %v5335
    %v5338 = vunpack.c.l.s4 1934713408
    %v5339 = vunpack.c.0.s8 %v5338
    %v5340 = vlaneseq
    %v5341 = vshrl.u32 %v5340, 7
    %v5342 = vsub.s32 %v5339, %v5341
    %v5343 = vrot.slane %v5329, %v5342
    %v5344 = vcombine.low %v5288, %v5304
    %v5345 = vcombine.high %v5288, %v5304
    %v5347 = vunpack.c.l.s4 1934713408
    %v5348 = vunpack.c.0.s8 %v5347
    %v5349 = vlaneseq
    %v5350 = vshrl.u32 %v5349, 7
    %v5351 = vsub.s32 %v5348, %v5350
    %v5352 = vrot.slane %v5344, %v5351
    %v5354 = vunpack.c.l.s4 1934713408
    %v5355 = vunpack.c.0.s8 %v5354
    %v5356 = vlaneseq
    %v5357 = vshrl.u32 %v5356, 7
    %v5358 = vsub.s32 %v5355, %v5357
    %v5359 = vrot.slane %v5345, %v5358
    %v5360 = vcombine.low %v5295, %v5311
    %v5361 = vcombine.high %v5295, %v5311
    %v5363 = vunpack.c.l.s4 1934713408
    %v5364 = vunpack.c.0.s8 %v5363
    %v5365 = vlaneseq
    %v5366 = vshrl.u32 %v5365, 7
    %v5367 = vsub.s32 %v5364, %v5366
    %v5368 = vrot.slane %v5360, %v5367
    %v5370 = vunpack.c.l.s4 1934713408
    %v5371 = vunpack.c.0.s8 %v5370
    %v5372 = vlaneseq
    %v5373 = vshrl.u32 %v5372, 7
    %v5374 = vsub.s32 %v5371, %v5373
    %v5375 = vrot.slane %v5361, %v5374
    %v5376 = vcombine.low %v5320, %v5352
    %v5377 = vcombine.high %v5320, %v5352
    %v5378 = vcombine.low %v5327, %v5359
    %v5379 = vcombine.high %v5327, %v5359
    %v5380 = vcombine.low %v5336, %v5368
    %v5381 = vcombine.high %v5336, %v5368
    %v5382 = vcombine.low %v5343, %v5375
    %v5383 = vcombine.high %v5343, %v5375
    %v5384 = vcombine.low %v3647, %v3663
    %v5385 = vcombine.high %v3647, %v3663
    %v5387 = vunpack.c.l.s4 1983009808
    %v5388 = vunpack.c.0.s8 %v5387
    %v5389 = vlaneseq
    %v5390 = vshrl.u32 %v5389, 7
    %v5391 = vsub.s32 %v5388, %v5390
    %v5392 = vrot.slane %v5384, %v5391
    %v5394 = vunpack.c.l.s4 1983009808
    %v5395 = vunpack.c.0.s8 %v5394
    %v5396 = vlaneseq
    %v5397 = vshrl.u32 %v5396, 7
    %v5398 = vsub.s32 %v5395, %v5397
    %v5399 = vrot.slane %v5385, %v5398
    %v5400 = vcombine.low %v3655, %v3671
    %v5401 = vcombine.high %v3655, %v3671
    %v5403 = vunpack.c.l.s4 1983009808
    %v5404 = vunpack.c.0.s8 %v5403
    %v5405 = vlaneseq
    %v5406 = vshrl.u32 %v5405, 7
    %v5407 = vsub.s32 %v5404, %v5406
    %v5408 = vrot.slane %v5400, %v5407
    %v5410 = vunpack.c.l.s4 1983009808
    %v5411 = vunpack.c.0.s8 %v5410
    %v5412 = vlaneseq
    %v5413 = vshrl.u32 %v5412, 7
    %v5414 = vsub.s32 %v5411, %v5413
    %v5415 = vrot.slane %v5401, %v5414
    %v5416 = vcombine.low %v3679, %v3695
    %v5417 = vcombine.high %v3679, %v3695
    %v5419 = vunpack.c.l.s4 1983009808
    %v5420 = vunpack.c.0.s8 %v5419
    %v5421 = vlaneseq
    %v5422 = vshrl.u32 %v5421, 7
    %v5423 = vsub.s32 %v5420, %v5422
    %v5424 = vrot.slane %v5416, %v5423
    %v5426 = vunpack.c.l.s4 1983009808
    %v5427 = vunpack.c.0.s8 %v5426
    %v5428 = vlaneseq
    %v5429 = vshrl.u32 %v5428, 7
    %v5430 = vsub.s32 %v5427, %v5429
    %v5431 = vrot.slane %v5417, %v5430
    %v5432 = vcombine.low %v3687, %v3703
    %v5433 = vcombine.high %v3687, %v3703
    %v5435 = vunpack.c.l.s4 1983009808
    %v5436 = vunpack.c.0.s8 %v5435
    %v5437 = vlaneseq
    %v5438 = vshrl.u32 %v5437, 7
    %v5439 = vsub.s32 %v5436, %v5438
    %v5440 = vrot.slane %v5432, %v5439
    %v5442 = vunpack.c.l.s4 1983009808
    %v5443 = vunpack.c.0.s8 %v5442
    %v5444 = vlaneseq
    %v5445 = vshrl.u32 %v5444, 7
    %v5446 = vsub.s32 %v5443, %v5445
    %v5447 = vrot.slane %v5433, %v5446
    %v5448 = vcombine.low %v5392, %v5408
    %v5449 = vcombine.high %v5392, %v5408
    %v5451 = vunpack.c.l.s4 1934713408
    %v5452 = vunpack.c.0.s8 %v5451
    %v5453 = vlaneseq
    %v5454 = vshrl.u32 %v5453, 7
    %v5455 = vsub.s32 %v5452, %v5454
    %v5456 = vrot.slane %v5448, %v5455
    %v5458 = vunpack.c.l.s4 1934713408
    %v5459 = vunpack.c.0.s8 %v5458
    %v5460 = vlaneseq
    %v5461 = vshrl.u32 %v5460, 7
    %v5462 = vsub.s32 %v5459, %v5461
    %v5463 = vrot.slane %v5449, %v5462
    %v5464 = vcombine.low %v5399, %v5415
    %v5465 = vcombine.high %v5399, %v5415
    %v5467 = vunpack.c.l.s4 1934713408
    %v5468 = vunpack.c.0.s8 %v5467
    %v5469 = vlaneseq
    %v5470 = vshrl.u32 %v5469, 7
    %v5471 = vsub.s32 %v5468, %v5470
    %v5472 = vrot.slane %v5464, %v5471
    %v5474 = vunpack.c.l.s4 1934713408
    %v5475 = vunpack.c.0.s8 %v5474
    %v5476 = vlaneseq
    %v5477 = vshrl.u32 %v5476, 7
    %v5478 = vsub.s32 %v5475, %v5477
    %v5479 = vrot.slane %v5465, %v5478
    %v5480 = vcombine.low %v5424, %v5440
    %v5481 = vcombine.high %v5424, %v5440
    %v5483 = vunpack.c.l.s4 1934713408
    %v5484 = vunpack.c.0.s8 %v5483
    %v5485 = vlaneseq
    %v5486 = vshrl.u32 %v5485, 7
    %v5487 = vsub.s32 %v5484, %v5486
    %v5488 = vrot.slane %v5480, %v5487
    %v5490 = vunpack.c.l.s4 1934713408
    %v5491 = vunpack.c.0.s8 %v5490
    %v5492 = vlaneseq
    %v5493 = vshrl.u32 %v5492, 7
    %v5494 = vsub.s32 %v5491, %v5493
    %v5495 = vrot.slane %v5481, %v5494
    %v5496 = vcombine.low %v5431, %v5447
    %v5497 = vcombine.high %v5431, %v5447
    %v5499 = vunpack.c.l.s4 1934713408
    %v5500 = vunpack.c.0.s8 %v5499
    %v5501 = vlaneseq
    %v5502 = vshrl.u32 %v5501, 7
    %v5503 = vsub.s32 %v5500, %v5502
    %v5504 = vrot.slane %v5496, %v5503
    %v5506 = vunpack.c.l.s4 1934713408
    %v5507 = vunpack.c.0.s8 %v5506
    %v5508 = vlaneseq
    %v5509 = vshrl.u32 %v5508, 7
    %v5510 = vsub.s32 %v5507, %v5509
    %v5511 = vrot.slane %v5497, %v5510
    %v5512 = vcombine.low %v5456, %v5488
    %v5513 = vcombine.high %v5456, %v5488
    %v5514 = vcombine.low %v5463, %v5495
    %v5515 = vcombine.high %v5463, %v5495
    %v5516 = vcombine.low %v5472, %v5504
    %v5517 = vcombine.high %v5472, %v5504
    %v5518 = vcombine.low %v5479, %v5511
    %v5519 = vcombine.high %v5479, %v5511
    %v5520 = vcombine.low %v3711, %v3727
    %v5521 = vcombine.high %v3711, %v3727
    %v5523 = vunpack.c.l.s4 1983009808
    %v5524 = vunpack.c.0.s8 %v5523
    %v5525 = vlaneseq
    %v5526 = vshrl.u32 %v5525, 7
    %v5527 = vsub.s32 %v5524, %v5526
    %v5528 = vrot.slane %v5520, %v5527
    %v5530 = vunpack.c.l.s4 1983009808
    %v5531 = vunpack.c.0.s8 %v5530
    %v5532 = vlaneseq
    %v5533 = vshrl.u32 %v5532, 7
    %v5534 = vsub.s32 %v5531, %v5533
    %v5535 = vrot.slane %v5521, %v5534
    %v5536 = vcombine.low %v3719, %v3735
    %v5537 = vcombine.high %v3719, %v3735
    %v5539 = vunpack.c.l.s4 1983009808
    %v5540 = vunpack.c.0.s8 %v5539
    %v5541 = vlaneseq
    %v5542 = vshrl.u32 %v5541, 7
    %v5543 = vsub.s32 %v5540, %v5542
    %v5544 = vrot.slane %v5536, %v5543
    %v5546 = vunpack.c.l.s4 1983009808
    %v5547 = vunpack.c.0.s8 %v5546
    %v5548 = vlaneseq
    %v5549 = vshrl.u32 %v5548, 7
    %v5550 = vsub.s32 %v5547, %v5549
    %v5551 = vrot.slane %v5537, %v5550
    %v5552 = vcombine.low %v3743, %v3759
    %v5553 = vcombine.high %v3743, %v3759
    %v5555 = vunpack.c.l.s4 1983009808
    %v5556 = vunpack.c.0.s8 %v5555
    %v5557 = vlaneseq
    %v5558 = vshrl.u32 %v5557, 7
    %v5559 = vsub.s32 %v5556, %v5558
    %v5560 = vrot.slane %v5552, %v5559
    %v5562 = vunpack.c.l.s4 1983009808
    %v5563 = vunpack.c.0.s8 %v5562
    %v5564 = vlaneseq
    %v5565 = vshrl.u32 %v5564, 7
    %v5566 = vsub.s32 %v5563, %v5565
    %v5567 = vrot.slane %v5553, %v5566
    %v5568 = vcombine.low %v3751, %v3767
    %v5569 = vcombine.high %v3751, %v3767
    %v5571 = vunpack.c.l.s4 1983009808
    %v5572 = vunpack.c.0.s8 %v5571
    %v5573 = vlaneseq
    %v5574 = vshrl.u32 %v5573, 7
    %v5575 = vsub.s32 %v5572, %v5574
    %v5576 = vrot.slane %v5568, %v5575
    %v5578 = vunpack.c.l.s4 1983009808
    %v5579 = vunpack.c.0.s8 %v5578
    %v5580 = vlaneseq
    %v5581 = vshrl.u32 %v5580, 7
    %v5582 = vsub.s32 %v5579, %v5581
    %v5583 = vrot.slane %v5569, %v5582
    %v5584 = vcombine.low %v5528, %v5544
    %v5585 = vcombine.high %v5528, %v5544
    %v5587 = vunpack.c.l.s4 1934713408
    %v5588 = vunpack.c.0.s8 %v5587
    %v5589 = vlaneseq
    %v5590 = vshrl.u32 %v5589, 7
    %v5591 = vsub.s32 %v5588, %v5590
    %v5592 = vrot.slane %v5584, %v5591
    %v5594 = vunpack.c.l.s4 1934713408
    %v5595 = vunpack.c.0.s8 %v5594
    %v5596 = vlaneseq
    %v5597 = vshrl.u32 %v5596, 7
    %v5598 = vsub.s32 %v5595, %v5597
    %v5599 = vrot.slane %v5585, %v5598
    %v5600 = vcombine.low %v5535, %v5551
    %v5601 = vcombine.high %v5535, %v5551
    %v5603 = vunpack.c.l.s4 1934713408
    %v5604 = vunpack.c.0.s8 %v5603
    %v5605 = vlaneseq
    %v5606 = vshrl.u32 %v5605, 7
    %v5607 = vsub.s32 %v5604, %v5606
    %v5608 = vrot.slane %v5600, %v5607
    %v5610 = vunpack.c.l.s4 1934713408
    %v5611 = vunpack.c.0.s8 %v5610
    %v5612 = vlaneseq
    %v5613 = vshrl.u32 %v5612, 7
    %v5614 = vsub.s32 %v5611, %v5613
    %v5615 = vrot.slane %v5601, %v5614
    %v5616 = vcombine.low %v5560, %v5576
    %v5617 = vcombine.high %v5560, %v5576
    %v5619 = vunpack.c.l.s4 1934713408
    %v5620 = vunpack.c.0.s8 %v5619
    %v5621 = vlaneseq
    %v5622 = vshrl.u32 %v5621, 7
    %v5623 = vsub.s32 %v5620, %v5622
    %v5624 = vrot.slane %v5616, %v5623
    %v5626 = vunpack.c.l.s4 1934713408
    %v5627 = vunpack.c.0.s8 %v5626
    %v5628 = vlaneseq
    %v5629 = vshrl.u32 %v5628, 7
    %v5630 = vsub.s32 %v5627, %v5629
    %v5631 = vrot.slane %v5617, %v5630
    %v5632 = vcombine.low %v5567, %v5583
    %v5633 = vcombine.high %v5567, %v5583
    %v5635 = vunpack.c.l.s4 1934713408
    %v5636 = vunpack.c.0.s8 %v5635
    %v5637 = vlaneseq
    %v5638 = vshrl.u32 %v5637, 7
    %v5639 = vsub.s32 %v5636, %v5638
    %v5640 = vrot.slane %v5632, %v5639
    %v5642 = vunpack.c.l.s4 1934713408
    %v5643 = vunpack.c.0.s8 %v5642
    %v5644 = vlaneseq
    %v5645 = vshrl.u32 %v5644, 7
    %v5646 = vsub.s32 %v5643, %v5645
    %v5647 = vrot.slane %v5633, %v5646
    %v5648 = vcombine.low %v5592, %v5624
    %v5649 = vcombine.high %v5592, %v5624
    %v5650 = vcombine.low %v5599, %v5631
    %v5651 = vcombine.high %v5599, %v5631
    %v5652 = vcombine.low %v5608, %v5640
    %v5653 = vcombine.high %v5608, %v5640
    %v5654 = vcombine.low %v5615, %v5647
    %v5655 = vcombine.high %v5615, %v5647
    %v5656 = vcombine.low %v3775, %v3791
    %v5657 = vcombine.high %v3775, %v3791
    %v5659 = vunpack.c.l.s4 1983009808
    %v5660 = vunpack.c.0.s8 %v5659
    %v5661 = vlaneseq
    %v5662 = vshrl.u32 %v5661, 7
    %v5663 = vsub.s32 %v5660, %v5662
    %v5664 = vrot.slane %v5656, %v5663
    %v5666 = vunpack.c.l.s4 1983009808
    %v5667 = vunpack.c.0.s8 %v5666
    %v5668 = vlaneseq
    %v5669 = vshrl.u32 %v5668, 7
    %v5670 = vsub.s32 %v5667, %v5669
    %v5671 = vrot.slane %v5657, %v5670
    %v5672 = vcombine.low %v3783, %v3799
    %v5673 = vcombine.high %v3783, %v3799
    %v5675 = vunpack.c.l.s4 1983009808
    %v5676 = vunpack.c.0.s8 %v5675
    %v5677 = vlaneseq
    %v5678 = vshrl.u32 %v5677, 7
    %v5679 = vsub.s32 %v5676, %v5678
    %v5680 = vrot.slane %v5672, %v5679
    %v5682 = vunpack.c.l.s4 1983009808
    %v5683 = vunpack.c.0.s8 %v5682
    %v5684 = vlaneseq
    %v5685 = vshrl.u32 %v5684, 7
    %v5686 = vsub.s32 %v5683, %v5685
    %v5687 = vrot.slane %v5673, %v5686
    %v5688 = vcombine.low %v3807, %v3823
    %v5689 = vcombine.high %v3807, %v3823
    %v5691 = vunpack.c.l.s4 1983009808
    %v5692 = vunpack.c.0.s8 %v5691
    %v5693 = vlaneseq
    %v5694 = vshrl.u32 %v5693, 7
    %v5695 = vsub.s32 %v5692, %v5694
    %v5696 = vrot.slane %v5688, %v5695
    %v5698 = vunpack.c.l.s4 1983009808
    %v5699 = vunpack.c.0.s8 %v5698
    %v5700 = vlaneseq
    %v5701 = vshrl.u32 %v5700, 7
    %v5702 = vsub.s32 %v5699, %v5701
    %v5703 = vrot.slane %v5689, %v5702
    %v5704 = vcombine.low %v3815, %v3831
    %v5705 = vcombine.high %v3815, %v3831
    %v5707 = vunpack.c.l.s4 1983009808
    %v5708 = vunpack.c.0.s8 %v5707
    %v5709 = vlaneseq
    %v5710 = vshrl.u32 %v5709, 7
    %v5711 = vsub.s32 %v5708, %v5710
    %v5712 = vrot.slane %v5704, %v5711
    %v5714 = vunpack.c.l.s4 1983009808
    %v5715 = vunpack.c.0.s8 %v5714
    %v5716 = vlaneseq
    %v5717 = vshrl.u32 %v5716, 7
    %v5718 = vsub.s32 %v5715, %v5717
    %v5719 = vrot.slane %v5705, %v5718
    %v5720 = vcombine.low %v5664, %v5680
    %v5721 = vcombine.high %v5664, %v5680
    %v5723 = vunpack.c.l.s4 1934713408
    %v5724 = vunpack.c.0.s8 %v5723
    %v5725 = vlaneseq
    %v5726 = vshrl.u32 %v5725, 7
    %v5727 = vsub.s32 %v5724, %v5726
    %v5728 = vrot.slane %v5720, %v5727
    %v5730 = vunpack.c.l.s4 1934713408
    %v5731 = vunpack.c.0.s8 %v5730
    %v5732 = vlaneseq
    %v5733 = vshrl.u32 %v5732, 7
    %v5734 = vsub.s32 %v5731, %v5733
    %v5735 = vrot.slane %v5721, %v5734
    %v5736 = vcombine.low %v5671, %v5687
    %v5737 = vcombine.high %v5671, %v5687
    %v5739 = vunpack.c.l.s4 1934713408
    %v5740 = vunpack.c.0.s8 %v5739
    %v5741 = vlaneseq
    %v5742 = vshrl.u32 %v5741, 7
    %v5743 = vsub.s32 %v5740, %v5742
    %v5744 = vrot.slane %v5736, %v5743
    %v5746 = vunpack.c.l.s4 1934713408
    %v5747 = vunpack.c.0.s8 %v5746
    %v5748 = vlaneseq
    %v5749 = vshrl.u32 %v5748, 7
    %v5750 = vsub.s32 %v5747, %v5749
    %v5751 = vrot.slane %v5737, %v5750
    %v5752 = vcombine.low %v5696, %v5712
    %v5753 = vcombine.high %v5696, %v5712
    %v5755 = vunpack.c.l.s4 1934713408
    %v5756 = vunpack.c.0.s8 %v5755
    %v5757 = vlaneseq
    %v5758 = vshrl.u32 %v5757, 7
    %v5759 = vsub.s32 %v5756, %v5758
    %v5760 = vrot.slane %v5752, %v5759
    %v5762 = vunpack.c.l.s4 1934713408
    %v5763 = vunpack.c.0.s8 %v5762
    %v5764 = vlaneseq
    %v5765 = vshrl.u32 %v5764, 7
    %v5766 = vsub.s32 %v5763, %v5765
    %v5767 = vrot.slane %v5753, %v5766
    %v5768 = vcombine.low %v5703, %v5719
    %v5769 = vcombine.high %v5703, %v5719
    %v5771 = vunpack.c.l.s4 1934713408
    %v5772 = vunpack.c.0.s8 %v5771
    %v5773 = vlaneseq
    %v5774 = vshrl.u32 %v5773, 7
    %v5775 = vsub.s32 %v5772, %v5774
    %v5776 = vrot.slane %v5768, %v5775
    %v5778 = vunpack.c.l.s4 1934713408
    %v5779 = vunpack.c.0.s8 %v5778
    %v5780 = vlaneseq
    %v5781 = vshrl.u32 %v5780, 7
    %v5782 = vsub.s32 %v5779, %v5781
    %v5783 = vrot.slane %v5769, %v5782
    %v5784 = vcombine.low %v5728, %v5760
    %v5785 = vcombine.high %v5728, %v5760
    %v5786 = vcombine.low %v5735, %v5767
    %v5787 = vcombine.high %v5735, %v5767
    %v5788 = vcombine.low %v5744, %v5776
    %v5789 = vcombine.high %v5744, %v5776
    %v5790 = vcombine.low %v5751, %v5783
    %v5791 = vcombine.high %v5751, %v5783
    %v5792 = vcombine.low %v3839, %v3855
    %v5793 = vcombine.high %v3839, %v3855
    %v5795 = vunpack.c.l.s4 1983009808
    %v5796 = vunpack.c.0.s8 %v5795
    %v5797 = vlaneseq
    %v5798 = vshrl.u32 %v5797, 7
    %v5799 = vsub.s32 %v5796, %v5798
    %v5800 = vrot.slane %v5792, %v5799
    %v5802 = vunpack.c.l.s4 1983009808
    %v5803 = vunpack.c.0.s8 %v5802
    %v5804 = vlaneseq
    %v5805 = vshrl.u32 %v5804, 7
    %v5806 = vsub.s32 %v5803, %v5805
    %v5807 = vrot.slane %v5793, %v5806
    %v5808 = vcombine.low %v3847, %v3863
    %v5809 = vcombine.high %v3847, %v3863
    %v5811 = vunpack.c.l.s4 1983009808
    %v5812 = vunpack.c.0.s8 %v5811
    %v5813 = vlaneseq
    %v5814 = vshrl.u32 %v5813, 7
    %v5815 = vsub.s32 %v5812, %v5814
    %v5816 = vrot.slane %v5808, %v5815
    %v5818 = vunpack.c.l.s4 1983009808
    %v5819 = vunpack.c.0.s8 %v5818
    %v5820 = vlaneseq
    %v5821 = vshrl.u32 %v5820, 7
    %v5822 = vsub.s32 %v5819, %v5821
    %v5823 = vrot.slane %v5809, %v5822
    %v5824 = vcombine.low %v3871, %v3887
    %v5825 = vcombine.high %v3871, %v3887
    %v5827 = vunpack.c.l.s4 1983009808
    %v5828 = vunpack.c.0.s8 %v5827
    %v5829 = vlaneseq
    %v5830 = vshrl.u32 %v5829, 7
    %v5831 = vsub.s32 %v5828, %v5830
    %v5832 = vrot.slane %v5824, %v5831
    %v5834 = vunpack.c.l.s4 1983009808
    %v5835 = vunpack.c.0.s8 %v5834
    %v5836 = vlaneseq
    %v5837 = vshrl.u32 %v5836, 7
    %v5838 = vsub.s32 %v5835, %v5837
    %v5839 = vrot.slane %v5825, %v5838
    %v5840 = vcombine.low %v3879, %v3895
    %v5841 = vcombine.high %v3879, %v3895
    %v5843 = vunpack.c.l.s4 1983009808
    %v5844 = vunpack.c.0.s8 %v5843
    %v5845 = vlaneseq
    %v5846 = vshrl.u32 %v5845, 7
    %v5847 = vsub.s32 %v5844, %v5846
    %v5848 = vrot.slane %v5840, %v5847
    %v5850 = vunpack.c.l.s4 1983009808
    %v5851 = vunpack.c.0.s8 %v5850
    %v5852 = vlaneseq
    %v5853 = vshrl.u32 %v5852, 7
    %v5854 = vsub.s32 %v5851, %v5853
    %v5855 = vrot.slane %v5841, %v5854
    %v5856 = vcombine.low %v5800, %v5816
    %v5857 = vcombine.high %v5800, %v5816
    %v5859 = vunpack.c.l.s4 1934713408
    %v5860 = vunpack.c.0.s8 %v5859
    %v5861 = vlaneseq
    %v5862 = vshrl.u32 %v5861, 7
    %v5863 = vsub.s32 %v5860, %v5862
    %v5864 = vrot.slane %v5856, %v5863
    %v5866 = vunpack.c.l.s4 1934713408
    %v5867 = vunpack.c.0.s8 %v5866
    %v5868 = vlaneseq
    %v5869 = vshrl.u32 %v5868, 7
    %v5870 = vsub.s32 %v5867, %v5869
    %v5871 = vrot.slane %v5857, %v5870
    %v5872 = vcombine.low %v5807, %v5823
    %v5873 = vcombine.high %v5807, %v5823
    %v5875 = vunpack.c.l.s4 1934713408
    %v5876 = vunpack.c.0.s8 %v5875
    %v5877 = vlaneseq
    %v5878 = vshrl.u32 %v5877, 7
    %v5879 = vsub.s32 %v5876, %v5878
    %v5880 = vrot.slane %v5872, %v5879
    %v5882 = vunpack.c.l.s4 1934713408
    %v5883 = vunpack.c.0.s8 %v5882
    %v5884 = vlaneseq
    %v5885 = vshrl.u32 %v5884, 7
    %v5886 = vsub.s32 %v5883, %v5885
    %v5887 = vrot.slane %v5873, %v5886
    %v5888 = vcombine.low %v5832, %v5848
    %v5889 = vcombine.high %v5832, %v5848
    %v5891 = vunpack.c.l.s4 1934713408
    %v5892 = vunpack.c.0.s8 %v5891
    %v5893 = vlaneseq
    %v5894 = vshrl.u32 %v5893, 7
    %v5895 = vsub.s32 %v5892, %v5894
    %v5896 = vrot.slane %v5888, %v5895
    %v5898 = vunpack.c.l.s4 1934713408
    %v5899 = vunpack.c.0.s8 %v5898
    %v5900 = vlaneseq
    %v5901 = vshrl.u32 %v5900, 7
    %v5902 = vsub.s32 %v5899, %v5901
    %v5903 = vrot.slane %v5889, %v5902
    %v5904 = vcombine.low %v5839, %v5855
    %v5905 = vcombine.high %v5839, %v5855
    %v5907 = vunpack.c.l.s4 1934713408
    %v5908 = vunpack.c.0.s8 %v5907
    %v5909 = vlaneseq
    %v5910 = vshrl.u32 %v5909, 7
    %v5911 = vsub.s32 %v5908, %v5910
    %v5912 = vrot.slane %v5904, %v5911
    %v5914 = vunpack.c.l.s4 1934713408
    %v5915 = vunpack.c.0.s8 %v5914
    %v5916 = vlaneseq
    %v5917 = vshrl.u32 %v5916, 7
    %v5918 = vsub.s32 %v5915, %v5917
    %v5919 = vrot.slane %v5905, %v5918
    %v5920 = vcombine.low %v5864, %v5896
    %v5921 = vcombine.high %v5864, %v5896
    %v5922 = vcombine.low %v5871, %v5903
    %v5923 = vcombine.high %v5871, %v5903
    %v5924 = vcombine.low %v5880, %v5912
    %v5925 = vcombine.high %v5880, %v5912
    %v5926 = vcombine.low %v5887, %v5919
    %v5927 = vcombine.high %v5887, %v5919
    %v5928 = vcombine.low %v3903, %v3919
    %v5929 = vcombine.high %v3903, %v3919
    %v5931 = vunpack.c.l.s4 1983009808
    %v5932 = vunpack.c.0.s8 %v5931
    %v5933 = vlaneseq
    %v5934 = vshrl.u32 %v5933, 7
    %v5935 = vsub.s32 %v5932, %v5934
    %v5936 = vrot.slane %v5928, %v5935
    %v5938 = vunpack.c.l.s4 1983009808
    %v5939 = vunpack.c.0.s8 %v5938
    %v5940 = vlaneseq
    %v5941 = vshrl.u32 %v5940, 7
    %v5942 = vsub.s32 %v5939, %v5941
    %v5943 = vrot.slane %v5929, %v5942
    %v5944 = vcombine.low %v3911, %v3927
    %v5945 = vcombine.high %v3911, %v3927
    %v5947 = vunpack.c.l.s4 1983009808
    %v5948 = vunpack.c.0.s8 %v5947
    %v5949 = vlaneseq
    %v5950 = vshrl.u32 %v5949, 7
    %v5951 = vsub.s32 %v5948, %v5950
    %v5952 = vrot.slane %v5944, %v5951
    %v5954 = vunpack.c.l.s4 1983009808
    %v5955 = vunpack.c.0.s8 %v5954
    %v5956 = vlaneseq
    %v5957 = vshrl.u32 %v5956, 7
    %v5958 = vsub.s32 %v5955, %v5957
    %v5959 = vrot.slane %v5945, %v5958
    %v5960 = vcombine.low %v3935, %v3951
    %v5961 = vcombine.high %v3935, %v3951
    %v5963 = vunpack.c.l.s4 1983009808
    %v5964 = vunpack.c.0.s8 %v5963
    %v5965 = vlaneseq
    %v5966 = vshrl.u32 %v5965, 7
    %v5967 = vsub.s32 %v5964, %v5966
    %v5968 = vrot.slane %v5960, %v5967
    %v5970 = vunpack.c.l.s4 1983009808
    %v5971 = vunpack.c.0.s8 %v5970
    %v5972 = vlaneseq
    %v5973 = vshrl.u32 %v5972, 7
    %v5974 = vsub.s32 %v5971, %v5973
    %v5975 = vrot.slane %v5961, %v5974
    %v5976 = vcombine.low %v3943, %v3959
    %v5977 = vcombine.high %v3943, %v3959
    %v5979 = vunpack.c.l.s4 1983009808
    %v5980 = vunpack.c.0.s8 %v5979
    %v5981 = vlaneseq
    %v5982 = vshrl.u32 %v5981, 7
    %v5983 = vsub.s32 %v5980, %v5982
    %v5984 = vrot.slane %v5976, %v5983
    %v5986 = vunpack.c.l.s4 1983009808
    %v5987 = vunpack.c.0.s8 %v5986
    %v5988 = vlaneseq
    %v5989 = vshrl.u32 %v5988, 7
    %v5990 = vsub.s32 %v5987, %v5989
    %v5991 = vrot.slane %v5977, %v5990
    %v5992 = vcombine.low %v5936, %v5952
    %v5993 = vcombine.high %v5936, %v5952
    %v5995 = vunpack.c.l.s4 1934713408
    %v5996 = vunpack.c.0.s8 %v5995
    %v5997 = vlaneseq
    %v5998 = vshrl.u32 %v5997, 7
    %v5999 = vsub.s32 %v5996, %v5998
    %v6000 = vrot.slane %v5992, %v5999
    %v6002 = vunpack.c.l.s4 1934713408
    %v6003 = vunpack.c.0.s8 %v6002
    %v6004 = vlaneseq
    %v6005 = vshrl.u32 %v6004, 7
    %v6006 = vsub.s32 %v6003, %v6005
    %v6007 = vrot.slane %v5993, %v6006
    %v6008 = vcombine.low %v5943, %v5959
    %v6009 = vcombine.high %v5943, %v5959
    %v6011 = vunpack.c.l.s4 1934713408
    %v6012 = vunpack.c.0.s8 %v6011
    %v6013 = vlaneseq
    %v6014 = vshrl.u32 %v6013, 7
    %v6015 = vsub.s32 %v6012, %v6014
    %v6016 = vrot.slane %v6008, %v6015
    %v6018 = vunpack.c.l.s4 1934713408
    %v6019 = vunpack.c.0.s8 %v6018
    %v6020 = vlaneseq
    %v6021 = vshrl.u32 %v6020, 7
    %v6022 = vsub.s32 %v6019, %v6021
    %v6023 = vrot.slane %v6009, %v6022
    %v6024 = vcombine.low %v5968, %v5984
    %v6025 = vcombine.high %v5968, %v5984
    %v6027 = vunpack.c.l.s4 1934713408
    %v6028 = vunpack.c.0.s8 %v6027
    %v6029 = vlaneseq
    %v6030 = vshrl.u32 %v6029, 7
    %v6031 = vsub.s32 %v6028, %v6030
    %v6032 = vrot.slane %v6024, %v6031
    %v6034 = vunpack.c.l.s4 1934713408
    %v6035 = vunpack.c.0.s8 %v6034
    %v6036 = vlaneseq
    %v6037 = vshrl.u32 %v6036, 7
    %v6038 = vsub.s32 %v6035, %v6037
    %v6039 = vrot.slane %v6025, %v6038
    %v6040 = vcombine.low %v5975, %v5991
    %v6041 = vcombine.high %v5975, %v5991
    %v6043 = vunpack.c.l.s4 1934713408
    %v6044 = vunpack.c.0.s8 %v6043
    %v6045 = vlaneseq
    %v6046 = vshrl.u32 %v6045, 7
    %v6047 = vsub.s32 %v6044, %v6046
    %v6048 = vrot.slane %v6040, %v6047
    %v6050 = vunpack.c.l.s4 1934713408
    %v6051 = vunpack.c.0.s8 %v6050
    %v6052 = vlaneseq
    %v6053 = vshrl.u32 %v6052, 7
    %v6054 = vsub.s32 %v6051, %v6053
    %v6055 = vrot.slane %v6041, %v6054
    %v6056 = vcombine.low %v6000, %v6032
    %v6057 = vcombine.high %v6000, %v6032
    %v6058 = vcombine.low %v6007, %v6039
    %v6059 = vcombine.high %v6007, %v6039
    %v6060 = vcombine.low %v6016, %v6048
    %v6061 = vcombine.high %v6016, %v6048
    %v6062 = vcombine.low %v6023, %v6055
    %v6063 = vcombine.high %v6023, %v6055
    %v6064 = vcombine.low %v3967, %v3983
    %v6065 = vcombine.high %v3967, %v3983
    %v6067 = vunpack.c.l.s4 1983009808
    %v6068 = vunpack.c.0.s8 %v6067
    %v6069 = vlaneseq
    %v6070 = vshrl.u32 %v6069, 7
    %v6071 = vsub.s32 %v6068, %v6070
    %v6072 = vrot.slane %v6064, %v6071
    %v6074 = vunpack.c.l.s4 1983009808
    %v6075 = vunpack.c.0.s8 %v6074
    %v6076 = vlaneseq
    %v6077 = vshrl.u32 %v6076, 7
    %v6078 = vsub.s32 %v6075, %v6077
    %v6079 = vrot.slane %v6065, %v6078
    %v6080 = vcombine.low %v3975, %v3991
    %v6081 = vcombine.high %v3975, %v3991
    %v6083 = vunpack.c.l.s4 1983009808
    %v6084 = vunpack.c.0.s8 %v6083
    %v6085 = vlaneseq
    %v6086 = vshrl.u32 %v6085, 7
    %v6087 = vsub.s32 %v6084, %v6086
    %v6088 = vrot.slane %v6080, %v6087
    %v6090 = vunpack.c.l.s4 1983009808
    %v6091 = vunpack.c.0.s8 %v6090
    %v6092 = vlaneseq
    %v6093 = vshrl.u32 %v6092, 7
    %v6094 = vsub.s32 %v6091, %v6093
    %v6095 = vrot.slane %v6081, %v6094
    %v6096 = vcombine.low %v3999, %v4015
    %v6097 = vcombine.high %v3999, %v4015
    %v6099 = vunpack.c.l.s4 1983009808
    %v6100 = vunpack.c.0.s8 %v6099
    %v6101 = vlaneseq
    %v6102 = vshrl.u32 %v6101, 7
    %v6103 = vsub.s32 %v6100, %v6102
    %v6104 = vrot.slane %v6096, %v6103
    %v6106 = vunpack.c.l.s4 1983009808
    %v6107 = vunpack.c.0.s8 %v6106
    %v6108 = vlaneseq
    %v6109 = vshrl.u32 %v6108, 7
    %v6110 = vsub.s32 %v6107, %v6109
    %v6111 = vrot.slane %v6097, %v6110
    %v6112 = vcombine.low %v4007, %v4023
    %v6113 = vcombine.high %v4007, %v4023
    %v6115 = vunpack.c.l.s4 1983009808
    %v6116 = vunpack.c.0.s8 %v6115
    %v6117 = vlaneseq
    %v6118 = vshrl.u32 %v6117, 7
    %v6119 = vsub.s32 %v6116, %v6118
    %v6120 = vrot.slane %v6112, %v6119
    %v6122 = vunpack.c.l.s4 1983009808
    %v6123 = vunpack.c.0.s8 %v6122
    %v6124 = vlaneseq
    %v6125 = vshrl.u32 %v6124, 7
    %v6126 = vsub.s32 %v6123, %v6125
    %v6127 = vrot.slane %v6113, %v6126
    %v6128 = vcombine.low %v6072, %v6088
    %v6129 = vcombine.high %v6072, %v6088
    %v6131 = vunpack.c.l.s4 1934713408
    %v6132 = vunpack.c.0.s8 %v6131
    %v6133 = vlaneseq
    %v6134 = vshrl.u32 %v6133, 7
    %v6135 = vsub.s32 %v6132, %v6134
    %v6136 = vrot.slane %v6128, %v6135
    %v6138 = vunpack.c.l.s4 1934713408
    %v6139 = vunpack.c.0.s8 %v6138
    %v6140 = vlaneseq
    %v6141 = vshrl.u32 %v6140, 7
    %v6142 = vsub.s32 %v6139, %v6141
    %v6143 = vrot.slane %v6129, %v6142
    %v6144 = vcombine.low %v6079, %v6095
    %v6145 = vcombine.high %v6079, %v6095
    %v6147 = vunpack.c.l.s4 1934713408
    %v6148 = vunpack.c.0.s8 %v6147
    %v6149 = vlaneseq
    %v6150 = vshrl.u32 %v6149, 7
    %v6151 = vsub.s32 %v6148, %v6150
    %v6152 = vrot.slane %v6144, %v6151
    %v6154 = vunpack.c.l.s4 1934713408
    %v6155 = vunpack.c.0.s8 %v6154
    %v6156 = vlaneseq
    %v6157 = vshrl.u32 %v6156, 7
    %v6158 = vsub.s32 %v6155, %v6157
    %v6159 = vrot.slane %v6145, %v6158
    %v6160 = vcombine.low %v6104, %v6120
    %v6161 = vcombine.high %v6104, %v6120
    %v6163 = vunpack.c.l.s4 1934713408
    %v6164 = vunpack.c.0.s8 %v6163
    %v6165 = vlaneseq
    %v6166 = vshrl.u32 %v6165, 7
    %v6167 = vsub.s32 %v6164, %v6166
    %v6168 = vrot.slane %v6160, %v6167
    %v6170 = vunpack.c.l.s4 1934713408
    %v6171 = vunpack.c.0.s8 %v6170
    %v6172 = vlaneseq
    %v6173 = vshrl.u32 %v6172, 7
    %v6174 = vsub.s32 %v6171, %v6173
    %v6175 = vrot.slane %v6161, %v6174
    %v6176 = vcombine.low %v6111, %v6127
    %v6177 = vcombine.high %v6111, %v6127
    %v6179 = vunpack.c.l.s4 1934713408
    %v6180 = vunpack.c.0.s8 %v6179
    %v6181 = vlaneseq
    %v6182 = vshrl.u32 %v6181, 7
    %v6183 = vsub.s32 %v6180, %v6182
    %v6184 = vrot.slane %v6176, %v6183
    %v6186 = vunpack.c.l.s4 1934713408
    %v6187 = vunpack.c.0.s8 %v6186
    %v6188 = vlaneseq
    %v6189 = vshrl.u32 %v6188, 7
    %v6190 = vsub.s32 %v6187, %v6189
    %v6191 = vrot.slane %v6177, %v6190
    %v6192 = vcombine.low %v6136, %v6168
    %v6193 = vcombine.high %v6136, %v6168
    %v6194 = vcombine.low %v6143, %v6175
    %v6195 = vcombine.high %v6143, %v6175
    %v6196 = vcombine.low %v6152, %v6184
    %v6197 = vcombine.high %v6152, %v6184
    %v6198 = vcombine.low %v6159, %v6191
    %v6199 = vcombine.high %v6159, %v6191
    %6208 = vrot.lane.b32.xlu0 %v4153, 2
    %v6209 = vpop.permute.xlu0 %6208
    %6210 = vrot.lane.b32.xlu0 %v4289, 2
    %v6211 = vpop.permute.xlu0 %6210
    %6212 = vrot.lane.b32.xlu0 %v4425, 2
    %v6213 = vpop.permute.xlu0 %6212
    %6214 = vrot.lane.b32.xlu0 %v4561, 2
    %v6215 = vpop.permute.xlu0 %6214
    %6216 = vrot.lane.b32.xlu0 %v4697, 2
    %v6217 = vpop.permute.xlu0 %6216
    %6218 = vrot.lane.b32.xlu0 %v4833, 2
    %v6219 = vpop.permute.xlu0 %6218
    %6220 = vrot.lane.b32.xlu0 %v4969, 2
    %v6221 = vpop.permute.xlu0 %6220
    %6222 = vrot.lane.b32.xlu0 %v5105, 2
    %v6223 = vpop.permute.xlu0 %6222
    %6240 = vrot.lane.b32.xlu0 %v4154, 4
    %v6241 = vpop.permute.xlu0 %6240
    %6242 = vrot.lane.b32.xlu0 %v4290, 4
    %v6243 = vpop.permute.xlu0 %6242
    %6244 = vrot.lane.b32.xlu0 %v4426, 4
    %v6245 = vpop.permute.xlu0 %6244
    %6246 = vrot.lane.b32.xlu0 %v4562, 4
    %v6247 = vpop.permute.xlu0 %6246
    %6248 = vrot.lane.b32.xlu0 %v4698, 4
    %v6249 = vpop.permute.xlu0 %6248
    %6250 = vrot.lane.b32.xlu0 %v4834, 4
    %v6251 = vpop.permute.xlu0 %6250
    %6252 = vrot.lane.b32.xlu0 %v4970, 4
    %v6253 = vpop.permute.xlu0 %6252
    %6254 = vrot.lane.b32.xlu0 %v5106, 4
    %v6255 = vpop.permute.xlu0 %6254
    %6272 = vrot.lane.b32.xlu0 %v4155, 6
    %v6273 = vpop.permute.xlu0 %6272
    %6274 = vrot.lane.b32.xlu0 %v4291, 6
    %v6275 = vpop.permute.xlu0 %6274
    %6276 = vrot.lane.b32.xlu0 %v4427, 6
    %v6277 = vpop.permute.xlu0 %6276
    %6278 = vrot.lane.b32.xlu0 %v4563, 6
    %v6279 = vpop.permute.xlu0 %6278
    %6280 = vrot.lane.b32.xlu0 %v4699, 6
    %v6281 = vpop.permute.xlu0 %6280
    %6282 = vrot.lane.b32.xlu0 %v4835, 6
    %v6283 = vpop.permute.xlu0 %6282
    %6284 = vrot.lane.b32.xlu0 %v4971, 6
    %v6285 = vpop.permute.xlu0 %6284
    %6286 = vrot.lane.b32.xlu0 %v5107, 6
    %v6287 = vpop.permute.xlu0 %6286
    %6304 = vrot.lane.b32.xlu0 %v4156, 8
    %v6305 = vpop.permute.xlu0 %6304
    %6306 = vrot.lane.b32.xlu0 %v4292, 8
    %v6307 = vpop.permute.xlu0 %6306
    %6308 = vrot.lane.b32.xlu0 %v4428, 8
    %v6309 = vpop.permute.xlu0 %6308
    %6310 = vrot.lane.b32.xlu0 %v4564, 8
    %v6311 = vpop.permute.xlu0 %6310
    %6312 = vrot.lane.b32.xlu0 %v4700, 8
    %v6313 = vpop.permute.xlu0 %6312
    %6314 = vrot.lane.b32.xlu0 %v4836, 8
    %v6315 = vpop.permute.xlu0 %6314
    %6316 = vrot.lane.b32.xlu0 %v4972, 8
    %v6317 = vpop.permute.xlu0 %6316
    %6318 = vrot.lane.b32.xlu0 %v5108, 8
    %v6319 = vpop.permute.xlu0 %6318
    %6336 = vrot.lane.b32.xlu0 %v4157, 10
    %v6337 = vpop.permute.xlu0 %6336
    %6338 = vrot.lane.b32.xlu0 %v4293, 10
    %v6339 = vpop.permute.xlu0 %6338
    %6340 = vrot.lane.b32.xlu0 %v4429, 10
    %v6341 = vpop.permute.xlu0 %6340
    %6342 = vrot.lane.b32.xlu0 %v4565, 10
    %v6343 = vpop.permute.xlu0 %6342
    %6344 = vrot.lane.b32.xlu0 %v4701, 10
    %v6345 = vpop.permute.xlu0 %6344
    %6346 = vrot.lane.b32.xlu0 %v4837, 10
    %v6347 = vpop.permute.xlu0 %6346
    %6348 = vrot.lane.b32.xlu0 %v4973, 10
    %v6349 = vpop.permute.xlu0 %6348
    %6350 = vrot.lane.b32.xlu0 %v5109, 10
    %v6351 = vpop.permute.xlu0 %6350
    %6368 = vrot.lane.b32.xlu0 %v4158, 12
    %v6369 = vpop.permute.xlu0 %6368
    %6370 = vrot.lane.b32.xlu0 %v4294, 12
    %v6371 = vpop.permute.xlu0 %6370
    %6372 = vrot.lane.b32.xlu0 %v4430, 12
    %v6373 = vpop.permute.xlu0 %6372
    %6374 = vrot.lane.b32.xlu0 %v4566, 12
    %v6375 = vpop.permute.xlu0 %6374
    %6376 = vrot.lane.b32.xlu0 %v4702, 12
    %v6377 = vpop.permute.xlu0 %6376
    %6378 = vrot.lane.b32.xlu0 %v4838, 12
    %v6379 = vpop.permute.xlu0 %6378
    %6380 = vrot.lane.b32.xlu0 %v4974, 12
    %v6381 = vpop.permute.xlu0 %6380
    %6382 = vrot.lane.b32.xlu0 %v5110, 12
    %v6383 = vpop.permute.xlu0 %6382
    %6400 = vrot.lane.b32.xlu0 %v4159, 14
    %v6401 = vpop.permute.xlu0 %6400
    %6402 = vrot.lane.b32.xlu0 %v4295, 14
    %v6403 = vpop.permute.xlu0 %6402
    %6404 = vrot.lane.b32.xlu0 %v4431, 14
    %v6405 = vpop.permute.xlu0 %6404
    %6406 = vrot.lane.b32.xlu0 %v4567, 14
    %v6407 = vpop.permute.xlu0 %6406
    %6408 = vrot.lane.b32.xlu0 %v4703, 14
    %v6409 = vpop.permute.xlu0 %6408
    %6410 = vrot.lane.b32.xlu0 %v4839, 14
    %v6411 = vpop.permute.xlu0 %6410
    %6412 = vrot.lane.b32.xlu0 %v4975, 14
    %v6413 = vpop.permute.xlu0 %6412
    %6414 = vrot.lane.b32.xlu0 %v5111, 14
    %v6415 = vpop.permute.xlu0 %6414
    %6432 = vrot.lane.b32.xlu0 %v5240, 16
    %v6433 = vpop.permute.xlu0 %6432
    %6434 = vrot.lane.b32.xlu0 %v5376, 16
    %v6435 = vpop.permute.xlu0 %6434
    %6436 = vrot.lane.b32.xlu0 %v5512, 16
    %v6437 = vpop.permute.xlu0 %6436
    %6438 = vrot.lane.b32.xlu0 %v5648, 16
    %v6439 = vpop.permute.xlu0 %6438
    %6440 = vrot.lane.b32.xlu0 %v5784, 16
    %v6441 = vpop.permute.xlu0 %6440
    %6442 = vrot.lane.b32.xlu0 %v5920, 16
    %v6443 = vpop.permute.xlu0 %6442
    %6444 = vrot.lane.b32.xlu0 %v6056, 16
    %v6445 = vpop.permute.xlu0 %6444
    %6446 = vrot.lane.b32.xlu0 %v6192, 16
    %v6447 = vpop.permute.xlu0 %6446
    %6464 = vrot.lane.b32.xlu0 %v5241, 18
    %v6465 = vpop.permute.xlu0 %6464
    %6466 = vrot.lane.b32.xlu0 %v5377, 18
    %v6467 = vpop.permute.xlu0 %6466
    %6468 = vrot.lane.b32.xlu0 %v5513, 18
    %v6469 = vpop.permute.xlu0 %6468
    %6470 = vrot.lane.b32.xlu0 %v5649, 18
    %v6471 = vpop.permute.xlu0 %6470
    %6472 = vrot.lane.b32.xlu0 %v5785, 18
    %v6473 = vpop.permute.xlu0 %6472
    %6474 = vrot.lane.b32.xlu0 %v5921, 18
    %v6475 = vpop.permute.xlu0 %6474
    %6476 = vrot.lane.b32.xlu0 %v6057, 18
    %v6477 = vpop.permute.xlu0 %6476
    %6478 = vrot.lane.b32.xlu0 %v6193, 18
    %v6479 = vpop.permute.xlu0 %6478
    %6496 = vrot.lane.b32.xlu0 %v5242, 20
    %v6497 = vpop.permute.xlu0 %6496
    %6498 = vrot.lane.b32.xlu0 %v5378, 20
    %v6499 = vpop.permute.xlu0 %6498
    %6500 = vrot.lane.b32.xlu0 %v5514, 20
    %v6501 = vpop.permute.xlu0 %6500
    %6502 = vrot.lane.b32.xlu0 %v5650, 20
    %v6503 = vpop.permute.xlu0 %6502
    %6504 = vrot.lane.b32.xlu0 %v5786, 20
    %v6505 = vpop.permute.xlu0 %6504
    %6506 = vrot.lane.b32.xlu0 %v5922, 20
    %v6507 = vpop.permute.xlu0 %6506
    %6508 = vrot.lane.b32.xlu0 %v6058, 20
    %v6509 = vpop.permute.xlu0 %6508
    %6510 = vrot.lane.b32.xlu0 %v6194, 20
    %v6511 = vpop.permute.xlu0 %6510
    %6528 = vrot.lane.b32.xlu0 %v5243, 22
    %v6529 = vpop.permute.xlu0 %6528
    %6530 = vrot.lane.b32.xlu0 %v5379, 22
    %v6531 = vpop.permute.xlu0 %6530
    %6532 = vrot.lane.b32.xlu0 %v5515, 22
    %v6533 = vpop.permute.xlu0 %6532
    %6534 = vrot.lane.b32.xlu0 %v5651, 22
    %v6535 = vpop.permute.xlu0 %6534
    %6536 = vrot.lane.b32.xlu0 %v5787, 22
    %v6537 = vpop.permute.xlu0 %6536
    %6538 = vrot.lane.b32.xlu0 %v5923, 22
    %v6539 = vpop.permute.xlu0 %6538
    %6540 = vrot.lane.b32.xlu0 %v6059, 22
    %v6541 = vpop.permute.xlu0 %6540
    %6542 = vrot.lane.b32.xlu0 %v6195, 22
    %v6543 = vpop.permute.xlu0 %6542
    %6560 = vrot.lane.b32.xlu0 %v5244, 24
    %v6561 = vpop.permute.xlu0 %6560
    %6562 = vrot.lane.b32.xlu0 %v5380, 24
    %v6563 = vpop.permute.xlu0 %6562
    %6564 = vrot.lane.b32.xlu0 %v5516, 24
    %v6565 = vpop.permute.xlu0 %6564
    %6566 = vrot.lane.b32.xlu0 %v5652, 24
    %v6567 = vpop.permute.xlu0 %6566
    %6568 = vrot.lane.b32.xlu0 %v5788, 24
    %v6569 = vpop.permute.xlu0 %6568
    %6570 = vrot.lane.b32.xlu0 %v5924, 24
    %v6571 = vpop.permute.xlu0 %6570
    %6572 = vrot.lane.b32.xlu0 %v6060, 24
    %v6573 = vpop.permute.xlu0 %6572
    %6574 = vrot.lane.b32.xlu0 %v6196, 24
    %v6575 = vpop.permute.xlu0 %6574
    %6592 = vrot.lane.b32.xlu0 %v5245, 26
    %v6593 = vpop.permute.xlu0 %6592
    %6594 = vrot.lane.b32.xlu0 %v5381, 26
    %v6595 = vpop.permute.xlu0 %6594
    %6596 = vrot.lane.b32.xlu0 %v5517, 26
    %v6597 = vpop.permute.xlu0 %6596
    %6598 = vrot.lane.b32.xlu0 %v5653, 26
    %v6599 = vpop.permute.xlu0 %6598
    %6600 = vrot.lane.b32.xlu0 %v5789, 26
    %v6601 = vpop.permute.xlu0 %6600
    %6602 = vrot.lane.b32.xlu0 %v5925, 26
    %v6603 = vpop.permute.xlu0 %6602
    %6604 = vrot.lane.b32.xlu0 %v6061, 26
    %v6605 = vpop.permute.xlu0 %6604
    %6606 = vrot.lane.b32.xlu0 %v6197, 26
    %v6607 = vpop.permute.xlu0 %6606
    %6624 = vrot.lane.b32.xlu0 %v5246, 28
    %v6625 = vpop.permute.xlu0 %6624
    %6626 = vrot.lane.b32.xlu0 %v5382, 28
    %v6627 = vpop.permute.xlu0 %6626
    %6628 = vrot.lane.b32.xlu0 %v5518, 28
    %v6629 = vpop.permute.xlu0 %6628
    %6630 = vrot.lane.b32.xlu0 %v5654, 28
    %v6631 = vpop.permute.xlu0 %6630
    %6632 = vrot.lane.b32.xlu0 %v5790, 28
    %v6633 = vpop.permute.xlu0 %6632
    %6634 = vrot.lane.b32.xlu0 %v5926, 28
    %v6635 = vpop.permute.xlu0 %6634
    %6636 = vrot.lane.b32.xlu0 %v6062, 28
    %v6637 = vpop.permute.xlu0 %6636
    %6638 = vrot.lane.b32.xlu0 %v6198, 28
    %v6639 = vpop.permute.xlu0 %6638
    %6656 = vrot.lane.b32.xlu0 %v5247, 30
    %v6657 = vpop.permute.xlu0 %6656
    %6658 = vrot.lane.b32.xlu0 %v5383, 30
    %v6659 = vpop.permute.xlu0 %6658
    %6660 = vrot.lane.b32.xlu0 %v5519, 30
    %v6661 = vpop.permute.xlu0 %6660
    %6662 = vrot.lane.b32.xlu0 %v5655, 30
    %v6663 = vpop.permute.xlu0 %6662
    %6664 = vrot.lane.b32.xlu0 %v5791, 30
    %v6665 = vpop.permute.xlu0 %6664
    %6666 = vrot.lane.b32.xlu0 %v5927, 30
    %v6667 = vpop.permute.xlu0 %6666
    %6668 = vrot.lane.b32.xlu0 %v6063, 30
    %v6669 = vpop.permute.xlu0 %6668
    %6670 = vrot.lane.b32.xlu0 %v6199, 30
    %v6671 = vpop.permute.xlu0 %6670
    %v6680 = vsel %vm3377, %v4152, %v6209
    %v6681 = vsel %vm3377, %v4288, %v6211
    %v6682 = vsel %vm3377, %v4424, %v6213
    %v6683 = vsel %vm3377, %v4560, %v6215
    %v6684 = vsel %vm3377, %v4696, %v6217
    %v6685 = vsel %vm3377, %v4832, %v6219
    %v6686 = vsel %vm3377, %v4968, %v6221
    %v6687 = vsel %vm3377, %v5104, %v6223
    %v6688 = vsel %vm3386, %v6680, %v6241
    %v6689 = vsel %vm3386, %v6681, %v6243
    %v6690 = vsel %vm3386, %v6682, %v6245
    %v6691 = vsel %vm3386, %v6683, %v6247
    %v6692 = vsel %vm3386, %v6684, %v6249
    %v6693 = vsel %vm3386, %v6685, %v6251
    %v6694 = vsel %vm3386, %v6686, %v6253
    %v6695 = vsel %vm3386, %v6687, %v6255
    %v6696 = vsel %vm3395, %v6688, %v6273
    %v6697 = vsel %vm3395, %v6689, %v6275
    %v6698 = vsel %vm3395, %v6690, %v6277
    %v6699 = vsel %vm3395, %v6691, %v6279
    %v6700 = vsel %vm3395, %v6692, %v6281
    %v6701 = vsel %vm3395, %v6693, %v6283
    %v6702 = vsel %vm3395, %v6694, %v6285
    %v6703 = vsel %vm3395, %v6695, %v6287
    %v6704 = vsel %vm3404, %v6696, %v6305
    %v6705 = vsel %vm3404, %v6697, %v6307
    %v6706 = vsel %vm3404, %v6698, %v6309
    %v6707 = vsel %vm3404, %v6699, %v6311
    %v6708 = vsel %vm3404, %v6700, %v6313
    %v6709 = vsel %vm3404, %v6701, %v6315
    %v6710 = vsel %vm3404, %v6702, %v6317
    %v6711 = vsel %vm3404, %v6703, %v6319
    %v6712 = vsel %vm3413, %v6704, %v6337
    %v6713 = vsel %vm3413, %v6705, %v6339
    %v6714 = vsel %vm3413, %v6706, %v6341
    %v6715 = vsel %vm3413, %v6707, %v6343
    %v6716 = vsel %vm3413, %v6708, %v6345
    %v6717 = vsel %vm3413, %v6709, %v6347
    %v6718 = vsel %vm3413, %v6710, %v6349
    %v6719 = vsel %vm3413, %v6711, %v6351
    %v6720 = vsel %vm3422, %v6712, %v6369
    %v6721 = vsel %vm3422, %v6713, %v6371
    %v6722 = vsel %vm3422, %v6714, %v6373
    %v6723 = vsel %vm3422, %v6715, %v6375
    %v6724 = vsel %vm3422, %v6716, %v6377
    %v6725 = vsel %vm3422, %v6717, %v6379
    %v6726 = vsel %vm3422, %v6718, %v6381
    %v6727 = vsel %vm3422, %v6719, %v6383
    %v6728 = vsel %vm3431, %v6720, %v6401
    %v6729 = vsel %vm3431, %v6721, %v6403
    %v6730 = vsel %vm3431, %v6722, %v6405
    %v6731 = vsel %vm3431, %v6723, %v6407
    %v6732 = vsel %vm3431, %v6724, %v6409
    %v6733 = vsel %vm3431, %v6725, %v6411
    %v6734 = vsel %vm3431, %v6726, %v6413
    %v6735 = vsel %vm3431, %v6727, %v6415
    %v6736 = vsel %vm3440, %v6728, %v6433
    %v6737 = vsel %vm3440, %v6729, %v6435
    %v6738 = vsel %vm3440, %v6730, %v6437
    %v6739 = vsel %vm3440, %v6731, %v6439
    %v6740 = vsel %vm3440, %v6732, %v6441
    %v6741 = vsel %vm3440, %v6733, %v6443
    %v6742 = vsel %vm3440, %v6734, %v6445
    %v6743 = vsel %vm3440, %v6735, %v6447
    %v6744 = vsel %vm3449, %v6736, %v6465
    %v6745 = vsel %vm3449, %v6737, %v6467
    %v6746 = vsel %vm3449, %v6738, %v6469
    %v6747 = vsel %vm3449, %v6739, %v6471
    %v6748 = vsel %vm3449, %v6740, %v6473
    %v6749 = vsel %vm3449, %v6741, %v6475
    %v6750 = vsel %vm3449, %v6742, %v6477
    %v6751 = vsel %vm3449, %v6743, %v6479
    %v6752 = vsel %vm3458, %v6744, %v6497
    %v6753 = vsel %vm3458, %v6745, %v6499
    %v6754 = vsel %vm3458, %v6746, %v6501
    %v6755 = vsel %vm3458, %v6747, %v6503
    %v6756 = vsel %vm3458, %v6748, %v6505
    %v6757 = vsel %vm3458, %v6749, %v6507
    %v6758 = vsel %vm3458, %v6750, %v6509
    %v6759 = vsel %vm3458, %v6751, %v6511
    %v6760 = vsel %vm3467, %v6752, %v6529
    %v6761 = vsel %vm3467, %v6753, %v6531
    %v6762 = vsel %vm3467, %v6754, %v6533
    %v6763 = vsel %vm3467, %v6755, %v6535
    %v6764 = vsel %vm3467, %v6756, %v6537
    %v6765 = vsel %vm3467, %v6757, %v6539
    %v6766 = vsel %vm3467, %v6758, %v6541
    %v6767 = vsel %vm3467, %v6759, %v6543
    %v6768 = vsel %vm3476, %v6760, %v6561
    %v6769 = vsel %vm3476, %v6761, %v6563
    %v6770 = vsel %vm3476, %v6762, %v6565
    %v6771 = vsel %vm3476, %v6763, %v6567
    %v6772 = vsel %vm3476, %v6764, %v6569
    %v6773 = vsel %vm3476, %v6765, %v6571
    %v6774 = vsel %vm3476, %v6766, %v6573
    %v6775 = vsel %vm3476, %v6767, %v6575
    %v6776 = vsel %vm3485, %v6768, %v6593
    %v6777 = vsel %vm3485, %v6769, %v6595
    %v6778 = vsel %vm3485, %v6770, %v6597
    %v6779 = vsel %vm3485, %v6771, %v6599
    %v6780 = vsel %vm3485, %v6772, %v6601
    %v6781 = vsel %vm3485, %v6773, %v6603
    %v6782 = vsel %vm3485, %v6774, %v6605
    %v6783 = vsel %vm3485, %v6775, %v6607
    %v6784 = vsel %vm3494, %v6776, %v6625
    %v6785 = vsel %vm3494, %v6777, %v6627
    %v6786 = vsel %vm3494, %v6778, %v6629
    %v6787 = vsel %vm3494, %v6779, %v6631
    %v6788 = vsel %vm3494, %v6780, %v6633
    %v6789 = vsel %vm3494, %v6781, %v6635
    %v6790 = vsel %vm3494, %v6782, %v6637
    %v6791 = vsel %vm3494, %v6783, %v6639
    %v6792 = vsel %vm3503, %v6784, %v6657
    %v6793 = vsel %vm3503, %v6785, %v6659
    %v6794 = vsel %vm3503, %v6786, %v6661
    %v6795 = vsel %vm3503, %v6787, %v6663
    %v6796 = vsel %vm3503, %v6788, %v6665
    %v6797 = vsel %vm3503, %v6789, %v6667
    %v6798 = vsel %vm3503, %v6790, %v6669
    %v6799 = vsel %vm3503, %v6791, %v6671
    %6808 = vrot.lane.b32.xlu0 %v3504, 32
    %v6809 = vpop.permute.xlu0 %6808
    %6810 = vrot.lane.b32.xlu0 %v3505, 32
    %v6811 = vpop.permute.xlu0 %6810
    %6812 = vrot.lane.b32.xlu0 %v3506, 32
    %v6813 = vpop.permute.xlu0 %6812
    %6814 = vrot.lane.b32.xlu0 %v3507, 32
    %v6815 = vpop.permute.xlu0 %6814
    %6816 = vrot.lane.b32.xlu0 %v3508, 32
    %v6817 = vpop.permute.xlu0 %6816
    %6818 = vrot.lane.b32.xlu0 %v3509, 32
    %v6819 = vpop.permute.xlu0 %6818
    %6820 = vrot.lane.b32.xlu0 %v3510, 32
    %v6821 = vpop.permute.xlu0 %6820
    %6822 = vrot.lane.b32.xlu0 %v3511, 32
    %v6823 = vpop.permute.xlu0 %6822
    %6840 = vrot.lane.b32.xlu0 %v6792, 64
    %v6841 = vpop.permute.xlu0 %6840
    %6842 = vrot.lane.b32.xlu0 %v6793, 64
    %v6843 = vpop.permute.xlu0 %6842
    %6844 = vrot.lane.b32.xlu0 %v6794, 64
    %v6845 = vpop.permute.xlu0 %6844
    %6846 = vrot.lane.b32.xlu0 %v6795, 64
    %v6847 = vpop.permute.xlu0 %6846
    %6848 = vrot.lane.b32.xlu0 %v6796, 64
    %v6849 = vpop.permute.xlu0 %6848
    %6850 = vrot.lane.b32.xlu0 %v6797, 64
    %v6851 = vpop.permute.xlu0 %6850
    %6852 = vrot.lane.b32.xlu0 %v6798, 64
    %v6853 = vpop.permute.xlu0 %6852
    %6854 = vrot.lane.b32.xlu0 %v6799, 64
    %v6855 = vpop.permute.xlu0 %6854
    %6864 = vrot.lane.b32.xlu0 %v6792, 96
    %v6865 = vpop.permute.xlu0 %6864
    %6866 = vrot.lane.b32.xlu0 %v6793, 96
    %v6867 = vpop.permute.xlu0 %6866
    %6868 = vrot.lane.b32.xlu0 %v6794, 96
    %v6869 = vpop.permute.xlu0 %6868
    %6870 = vrot.lane.b32.xlu0 %v6795, 96
    %v6871 = vpop.permute.xlu0 %6870
    %6872 = vrot.lane.b32.xlu0 %v6796, 96
    %v6873 = vpop.permute.xlu0 %6872
    %6874 = vrot.lane.b32.xlu0 %v6797, 96
    %v6875 = vpop.permute.xlu0 %6874
    %6876 = vrot.lane.b32.xlu0 %v6798, 96
    %v6877 = vpop.permute.xlu0 %6876
    %6878 = vrot.lane.b32.xlu0 %v6799, 96
    %v6879 = vpop.permute.xlu0 %6878
    %vm6888 = vcmask 261120
    %v6889 = vsel %vm6888, %v3504, %v6809
    %v6890 = vsel %vm6888, %v3505, %v6811
    %v6891 = vsel %vm6888, %v3506, %v6813
    %v6892 = vsel %vm6888, %v3507, %v6815
    %v6893 = vsel %vm6888, %v3508, %v6817
    %v6894 = vsel %vm6888, %v3509, %v6819
    %v6895 = vsel %vm6888, %v3510, %v6821
    %v6896 = vsel %vm6888, %v3511, %v6823
    %vm6897 = vcmask 523264
    %v6898 = vsel %vm6897, %v6889, %v6841
    %v6899 = vsel %vm6897, %v6890, %v6843
    %v6900 = vsel %vm6897, %v6891, %v6845
    %v6901 = vsel %vm6897, %v6892, %v6847
    %v6902 = vsel %vm6897, %v6893, %v6849
    %v6903 = vsel %vm6897, %v6894, %v6851
    %v6904 = vsel %vm6897, %v6895, %v6853
    %v6905 = vsel %vm6897, %v6896, %v6855
    %vm6906 = vcmask 785408
    %v6907 = vsel %vm6906, %v6898, %v6865
    %v6908 = vsel %vm6906, %v6899, %v6867
    %v6909 = vsel %vm6906, %v6900, %v6869
    %v6910 = vsel %vm6906, %v6901, %v6871
    %v6911 = vsel %vm6906, %v6902, %v6873
    %v6912 = vsel %vm6906, %v6903, %v6875
    %v6913 = vsel %vm6906, %v6904, %v6877
    %v6914 = vsel %vm6906, %v6905, %v6879
    %6915 = vst [vmem:[#allocation2] sm:$0xff] %v6907
    %6916 = vst [vmem:[#allocation2 + $0x8] sm:$0xff] %v6908
    %6917 = vst [vmem:[#allocation2 + $0x10] sm:$0xff] %v6909
    %6918 = vst [vmem:[#allocation2 + $0x18] sm:$0xff] %v6910
    %6919 = vst [vmem:[#allocation2 + $0x20] sm:$0xff] %v6911
    %6920 = vst [vmem:[#allocation2 + $0x28] sm:$0xff] %v6912
    %6921 = vst [vmem:[#allocation2 + $0x30] sm:$0xff] %v6913
    %6922 = vst [vmem:[#allocation2 + $0x38] sm:$0xff] %v6914
    // Predicated region
    $region6: #{tpu_custom_call.1} parent=1 // pred_check
      _
    $region7: #{tpu_custom_call.1} parent=1 // pred_check_branch
      %6924 = sbr.rel (0) target = $region9
    $region8: #{tpu_custom_call.1} parent=1 // pred_region
      %s6926 = ssub.s32 1024, 1024
      %6927 = vsyncadd [#allocation3], %s6926
      %s6928 = sshll.u32 [#allocation2], 4
      %s6929 = int_to_ptr.vmem [resolvable:$true] %s6928
      %6934 = dma.vmem_to_hbm [thread:$0]  %s6929, 1024, %s1, [#allocation3], 128, 128, 8
    $region9: #{tpu_custom_call.1} parent=1 // pred_fallthru
      _
    // Predicated region
    $region10: #{tpu_custom_call.1} parent=1 // pred_check
      _
    $region11: #{tpu_custom_call.1} parent=1 // pred_check_branch
      %6936 = sbr.rel (0) target = $region13
    $region12: #{tpu_custom_call.1} parent=1 // pred_region
      %6937 = dma.done [#allocation3], 1024
    $region13: #{tpu_custom_call.1} parent=1 // pred_fallthru
      _
    %6938 = vsyncpa [#allocation3], 1

</llo_original>
